<compile_context>
chip_gen: v5e
topology: v5e:2x2
jax: 0.10.0
libtpu: 0.0.40
codegen_flags: <defaults>
</compile_context>

<pallas_src>
import jax
import jax.numpy as jnp
from jax.experimental import pallas as pl
from jax.experimental.pallas import tpu as pltpu


FEAT_CFG = [16, "M", 32, 32, "M"]   # mini VGG-style feature config
HIDDEN = 128                        # scaled stand-in for 4096


# ----------------------------------------------------------------------------
# Single fused kernel: conv1 -> pool1 -> conv2 -> conv3 -> pool2 -> fc1 -> fc2
# One grid step per image; everything stays in VMEM.
# ----------------------------------------------------------------------------
def _vgg_fused_kernel(x_ref, w1_ref, b1_ref, w2_ref, b2_ref, w3_ref, b3_ref,
                      wf1_ref, bf1_ref, wf2_ref, bf2_ref, o_ref,
                      p0_ref, c1_ref, wm1_ref, p1_ref, p2_ref, c3_ref):
    H1, W1 = x_ref.shape[1], x_ref.shape[2]      # 16, 16
    H2, W2 = H1 // 2, W1 // 2                    # 8, 8
    H3, W3 = H2 // 2, W2 // 2                    # 4, 4

    def conv3x3_relu(pad_ref, w_ref, b_ref, H, W):
        # One bulk load of the padded map; the 9 shifted im2col taps are sliced
        # from the value and concatenated along the contraction dim so the conv
        # is a single MXU matmul with K = 9*Cin.
        p = pad_ref[...]
        taps = [p[ky:ky + H, kx:kx + W, :]
                for ky in range(3) for kx in range(3)]
        patches = jnp.concatenate(taps, axis=-1)               # (H, W, 9*Cin)
        patches = patches.reshape(H * W, patches.shape[-1])    # (H*W, 9*Cin)
        acc = jnp.dot(patches, w_ref[...],
                      preferred_element_type=jnp.float32)
        return jnp.maximum(acc + b_ref[...], 0.0)              # (H*W, Cout)

    # ---- conv1: zero halo built with one zero store + one interior store ----
    p0_ref[...] = jnp.zeros(p0_ref.shape, p0_ref.dtype)
    p0_ref[1:H1 + 1, 1:W1 + 1, :] = x_ref[0]
    c1_ref[...] = conv3x3_relu(p0_ref, w1_ref, b1_ref, H1, W1)     # (256, 16)

    # ---- maxpool1: whole-map stride-2 reads along W, then even/odd H ----
    ew = c1_ref[pl.ds(0, (H1 * W1) // 2, stride=2), :]   # even w; rows = W2*h + j
    ow = c1_ref[pl.ds(1, (H1 * W1) // 2, stride=2), :]   # odd  w
    wmax = jnp.maximum(ew, ow)                            # (128, 16)
    wm1_ref[...] = wmax.reshape(H2, 2, W2, wmax.shape[-1])   # [i, h-parity, j, c]
    pooled1 = jnp.maximum(wm1_ref[:, 0, :, :], wm1_ref[:, 1, :, :])  # (8, 8, 16)

    # ---- conv2 ----
    p1_ref[...] = jnp.zeros(p1_ref.shape, p1_ref.dtype)
    p1_ref[1:H2 + 1, 1:W2 + 1, :] = pooled1
    y2 = conv3x3_relu(p1_ref, w2_ref, b2_ref, H2, W2)              # (64, 32)

    # ---- conv3 ----
    p2_ref[...] = jnp.zeros(p2_ref.shape, p2_ref.dtype)
    p2_ref[1:H2 + 1, 1:W2 + 1, :] = y2.reshape(H2, W2, y2.shape[-1])
    c3_ref[...] = conv3x3_relu(p2_ref, w3_ref, b3_ref, H2, W2)     # (64, 32)

    # ---- maxpool2 fused with the NHWC flatten -> one (1, 512) lane row ----
    ew2 = c3_ref[pl.ds(0, (H2 * W2) // 2, stride=2), :]   # (32, 32); rows = W3*h + j
    ow2 = c3_ref[pl.ds(1, (H2 * W2) // 2, stride=2), :]
    wmax2 = jnp.maximum(ew2, ow2)                          # (32, 32)
    pieces = []
    for i in range(H3):
        top = wmax2[W2 * i:W2 * i + W3, :]                 # rows for h = 2i
        bot = wmax2[W2 * i + W3:W2 * i + 2 * W3, :]        # rows for h = 2i + 1
        row = jnp.maximum(top, bot)                        # (W3, C3)
        for j in range(W3):
            pieces.append(row[j:j + 1, :])                 # (1, C3)
    flat = jnp.concatenate(pieces, axis=-1)                # (1, H3*W3*C3) = (1, 512)

    # ---- classifier: Linear -> ReLU -> Dropout(id) -> Linear -> ReLU -> Dropout(id)
    h = jnp.dot(flat, wf1_ref[...], preferred_element_type=jnp.float32)
    h = jnp.maximum(h + bf1_ref[...], 0.0)
    h = jnp.dot(h, wf2_ref[...], preferred_element_type=jnp.float32)
    o_ref[0] = jnp.maximum(h + bf2_ref[...], 0.0)          # lane-dense (1, 128) store


def vgg_fused_forward(x_nhwc, kp):
    N, H, W, Cin = x_nhwc.shape
    C1 = kp["b1"].shape[1]
    C2 = kp["b2"].shape[1]
    C3 = kp["b3"].shape[1]
    H2, W2 = H // 2, W // 2
    out = pl.pallas_call(
        _vgg_fused_kernel,
        out_shape=jax.ShapeDtypeStruct((N, 1, HIDDEN), jnp.float32),
        grid=(N,),
        in_specs=[
            pl.BlockSpec((1, H, W, Cin), lambda n: (n, 0, 0, 0)),
            pl.BlockSpec(kp["w1"].shape, lambda n: (0, 0)),
            pl.BlockSpec(kp["b1"].shape, lambda n: (0, 0)),
            pl.BlockSpec(kp["w2"].shape, lambda n: (0, 0)),
            pl.BlockSpec(kp["b2"].shape, lambda n: (0, 0)),
            pl.BlockSpec(kp["w3"].shape, lambda n: (0, 0)),
            pl.BlockSpec(kp["b3"].shape, lambda n: (0, 0)),
            pl.BlockSpec(kp["wf1"].shape, lambda n: (0, 0)),
            pl.BlockSpec(kp["bf1"].shape, lambda n: (0, 0)),
            pl.BlockSpec(kp["wf2"].shape, lambda n: (0, 0)),
            pl.BlockSpec(kp["bf2"].shape, lambda n: (0, 0)),
        ],
        out_specs=pl.BlockSpec((1, 1, HIDDEN), lambda n: (n, 0, 0)),
        scratch_shapes=[
            pltpu.VMEM((H + 2, W + 2, Cin), jnp.float32),      # padded conv1 input
            pltpu.VMEM((H * W, C1), jnp.float32),              # conv1 output
            pltpu.VMEM((H2, 2, W2, C1), jnp.float32),          # pool1 w-max staging
            pltpu.VMEM((H2 + 2, W2 + 2, C1), jnp.float32),     # padded conv2 input
            pltpu.VMEM((H2 + 2, W2 + 2, C2), jnp.float32),     # padded conv3 input
            pltpu.VMEM((H2 * W2, C3), jnp.float32),            # conv3 output
        ],
        compiler_params=pltpu.CompilerParams(
            dimension_semantics=("parallel",)),
    )(x_nhwc, kp["w1"], kp["b1"], kp["w2"], kp["b2"], kp["w3"], kp["b3"],
      kp["wf1"], kp["bf1"], kp["wf2"], kp["bf2"])
    return out.reshape(N, HIDDEN)


def vgg_base_forward(kp, x_nchw):
    """x_nchw: (N, C, H, W) float32, like the PyTorch module input."""
    x = jnp.transpose(x_nchw, (0, 2, 3, 1))       # -> NHWC
    return vgg_fused_forward(x, kp)


# ----------------------------------------------------------------------------
# Parameters (deterministic, scaled-down) and one-time kernel-layout repacking.
# ----------------------------------------------------------------------------
def init_params(key, in_ch=3, spatial=16):
    params = {"convs": [], "fcs": []}
    c = in_ch
    s = spatial
    for v in FEAT_CFG:
        if v == "M":
            s //= 2
            continue
        key, kw, kb = jax.random.split(key, 3)
        w = 0.1 * jax.random.normal(kw, (3, 3, c, v), jnp.float32)
        b = 0.01 * jax.random.normal(kb, (v,), jnp.float32)
        params["convs"].append((w, b))
        c = v
    flat = c * s * s
    for din, dout in [(flat, HIDDEN), (HIDDEN, HIDDEN)]:
        key, kw, kb = jax.random.split(key, 3)
        w = 0.05 * jax.random.normal(kw, (din, dout), jnp.float32)
        b = 0.01 * jax.random.normal(kb, (dout,), jnp.float32)
        params["fcs"].append((w, b))
    return params


def prepare_params(params, spatial):
    """One-time repack into kernel-friendly layouts (hoisted out of the jitted fwd)."""
    c = None
    s = spatial
    for v in FEAT_CFG:
        if v == "M":
            s //= 2
        else:
            c = v
    kp = {}
    for idx, (w, b) in enumerate(params["convs"], start=1):
        _, _, cin, cout = w.shape
        kp[f"w{idx}"] = w.reshape(9 * cin, cout)        # im2col weight (9*Cin, Cout)
        kp[f"b{idx}"] = b.reshape(1, cout)
    (wf1, bf1), (wf2, bf2) = params["fcs"]
    dout = wf1.shape[1]
    # Permute fc1 rows from NCHW-flatten order (torch .view) to the NHWC-flatten
    # order the fused kernel emits, so semantics match exactly.
    kp["wf1"] = (wf1.reshape(c, s, s, dout)
                     .transpose(1, 2, 0, 3)
                     .reshape(c * s * s, dout))
    kp["bf1"] = bf1.reshape(1, -1)
    kp["wf2"] = wf2
    kp["bf2"] = bf2.reshape(1, -1)
    return kp


# ----------------------------------------------------------------------------
# Pure-JAX reference of the same scaled-down network (sanity check).
# ----------------------------------------------------------------------------
def _reference_forward(params, x_nchw):
    x = jnp.transpose(x_nchw, (0, 2, 3, 1))
    ci = 0
    for v in FEAT_CFG:
        if v == "M":
            x = jax.lax.reduce_window(x, -jnp.inf, jax.lax.max,
                                      (1, 2, 2, 1), (1, 2, 2, 1), "VALID")
        else:
            w, b = params["convs"][ci]
            ci += 1
            x = jax.lax.conv_general_dilated(
                x, w, (1, 1), "SAME",
                dimension_numbers=("NHWC", "HWIO", "NHWC"),
                precision=jax.lax.Precision.HIGHEST)
            x = jnp.maximum(x + b, 0.0)
    n = x.shape[0]
    x = jnp.transpose(x, (0, 3, 1, 2)).reshape(n, -1)   # torch NCHW .view order
    (w1, b1), (w2, b2) = params["fcs"]
    x = jnp.maximum(jnp.dot(x, w1, precision=jax.lax.Precision.HIGHEST) + b1, 0.0)
    x = jnp.maximum(jnp.dot(x, w2, precision=jax.lax.Precision.HIGHEST) + b2, 0.0)
    return x


if __name__ == "__main__":
    key = jax.random.PRNGKey(0)
    key, kx = jax.random.split(key)
    x = jax.random.normal(kx, (2, 3, 16, 16), jnp.float32)   # NCHW, like torch
    params = init_params(key, in_ch=3, spatial=16)
    kp = prepare_params(params, spatial=16)   # hoisted: runs once, not per call

    fwd = jax.jit(vgg_base_forward)
    y = jax.block_until_ready(fwd(kp, x))

    assert y.shape == (2, HIDDEN), y.shape
    assert y.dtype == jnp.float32
    assert bool(jnp.all(jnp.isfinite(y)))

    # Sanity check against a pure-JAX/XLA reference of the same network.
    # Tolerance tightened vs. the previous 1e-2 (layout/permutation bugs would
    # show up as O(0.1-1) errors); kept at 5e-3 to leave margin for MXU f32
    # multi-pass precision differences across TPU generations.
    y_ref = _reference_forward(params, x)
    err = float(jnp.max(jnp.abs(y - y_ref)))
    assert err < 5e-3, f"mismatch vs reference: max abs err = {err}"

    print("KERNEL_OK")
</pallas_src>

<mosaic_0001>
module attributes {stable_mosaic.version = 11 : i64} {
  func.func @_vgg_fused_kernel(%arg0: i32, %arg1: memref<1x16x16x3xf32, #tpu.memory_space<vmem>>, %arg2: memref<27x16xf32, #tpu.memory_space<vmem>>, %arg3: memref<1x16xf32, #tpu.memory_space<vmem>>, %arg4: memref<144x32xf32, #tpu.memory_space<vmem>>, %arg5: memref<1x32xf32, #tpu.memory_space<vmem>>, %arg6: memref<288x32xf32, #tpu.memory_space<vmem>>, %arg7: memref<1x32xf32, #tpu.memory_space<vmem>>, %arg8: memref<512x128xf32, #tpu.memory_space<vmem>>, %arg9: memref<1x128xf32, #tpu.memory_space<vmem>>, %arg10: memref<128x128xf32, #tpu.memory_space<vmem>>, %arg11: memref<1x128xf32, #tpu.memory_space<vmem>>, %arg12: memref<1x1x128xf32, #tpu.memory_space<vmem>>, %arg13: memref<18x18x3xf32, #tpu.memory_space<vmem>>, %arg14: memref<256x16xf32, #tpu.memory_space<vmem>>, %arg15: memref<8x2x8x16xf32, #tpu.memory_space<vmem>>, %arg16: memref<10x10x16xf32, #tpu.memory_space<vmem>>, %arg17: memref<10x10x32xf32, #tpu.memory_space<vmem>>, %arg18: memref<64x32xf32, #tpu.memory_space<vmem>>) attributes {dimension_semantics = [#tpu.dimension_semantics<parallel>], iteration_bounds = array<i64: 2>, scalar_prefetch = 0 : i64, scratch_operands = 6 : i64, tpu.core_type = #tpu.core_type<tc>, window_params = [{transform_indices = @transform_0, window_bounds = array<i64: 1, 16, 16, 3>}, {pipeline_mode = #tpu.pipeline_mode<synchronous>, transform_indices = @transform_1, window_bounds = array<i64: 27, 16>}, {pipeline_mode = #tpu.pipeline_mode<synchronous>, transform_indices = @transform_2, window_bounds = array<i64: 1, 16>}, {pipeline_mode = #tpu.pipeline_mode<synchronous>, transform_indices = @transform_3, window_bounds = array<i64: 144, 32>}, {pipeline_mode = #tpu.pipeline_mode<synchronous>, transform_indices = @transform_4, window_bounds = array<i64: 1, 32>}, {pipeline_mode = #tpu.pipeline_mode<synchronous>, transform_indices = @transform_5, window_bounds = array<i64: 288, 32>}, {pipeline_mode = #tpu.pipeline_mode<synchronous>, transform_indices = @transform_6, window_bounds = array<i64: 1, 32>}, {pipeline_mode = #tpu.pipeline_mode<synchronous>, transform_indices = @transform_7, window_bounds = array<i64: 512, 128>}, {pipeline_mode = #tpu.pipeline_mode<synchronous>, transform_indices = @transform_8, window_bounds = array<i64: 1, 128>}, {pipeline_mode = #tpu.pipeline_mode<synchronous>, transform_indices = @transform_9, window_bounds = array<i64: 128, 128>}, {pipeline_mode = #tpu.pipeline_mode<synchronous>, transform_indices = @transform_10, window_bounds = array<i64: 1, 128>}, {transform_indices = @transform_11, window_bounds = array<i64: 1, 1, 128>}]} {
    %cst = arith.constant 0.000000e+00 : f32
    %0 = vector.broadcast %cst : f32 to vector<18x18x3xf32>
    %c0 = arith.constant 0 : index
    %c0_0 = arith.constant 0 : index
    %c0_1 = arith.constant 0 : index
    %1 = vector.load %arg13[%c0, %c0_0, %c0_1] : memref<18x18x3xf32, #tpu.memory_space<vmem>>, vector<18x18x3xf32>
    tpu.vector_store %arg13[%c0, %c0_0, %c0_1], %0 {strides = array<i32>} : memref<18x18x3xf32, #tpu.memory_space<vmem>>, vector<18x18x3xf32>,
    %c0_2 = arith.constant 0 : index
    %c0_3 = arith.constant 0 : index
    %c0_4 = arith.constant 0 : index
    %c0_5 = arith.constant 0 : index
    %2 = vector.load %arg1[%c0_2, %c0_3, %c0_4, %c0_5] : memref<1x16x16x3xf32, #tpu.memory_space<vmem>>, vector<1x16x16x3xf32>
    %3 = vector.shape_cast %2 : vector<1x16x16x3xf32> to vector<16x16x3xf32>
    %c1 = arith.constant 1 : index
    %c1_6 = arith.constant 1 : index
    %c0_7 = arith.constant 0 : index
    %4 = vector.load %arg13[%c1, %c1_6, %c0_7] : memref<18x18x3xf32, #tpu.memory_space<vmem>>, vector<16x16x3xf32>
    tpu.vector_store %arg13[%c1, %c1_6, %c0_7], %3 {strides = array<i32>} : memref<18x18x3xf32, #tpu.memory_space<vmem>>, vector<16x16x3xf32>,
    %c0_8 = arith.constant 0 : index
    %c0_9 = arith.constant 0 : index
    %c0_10 = arith.constant 0 : index
    %5 = vector.load %arg13[%c0_8, %c0_9, %c0_10] : memref<18x18x3xf32, #tpu.memory_space<vmem>>, vector<18x18x3xf32>
    %6 = vector.extract_strided_slice %5 {offsets = [0, 0, 0], sizes = [16, 16, 3], strides = [1, 1, 1]} : vector<18x18x3xf32> to vector<16x16x3xf32>
    %7 = vector.extract_strided_slice %5 {offsets = [0, 1, 0], sizes = [16, 16, 3], strides = [1, 1, 1]} : vector<18x18x3xf32> to vector<16x16x3xf32>
    %8 = vector.extract_strided_slice %5 {offsets = [0, 2, 0], sizes = [16, 16, 3], strides = [1, 1, 1]} : vector<18x18x3xf32> to vector<16x16x3xf32>
    %9 = vector.extract_strided_slice %5 {offsets = [1, 0, 0], sizes = [16, 16, 3], strides = [1, 1, 1]} : vector<18x18x3xf32> to vector<16x16x3xf32>
    %10 = vector.extract_strided_slice %5 {offsets = [1, 1, 0], sizes = [16, 16, 3], strides = [1, 1, 1]} : vector<18x18x3xf32> to vector<16x16x3xf32>
    %11 = vector.extract_strided_slice %5 {offsets = [1, 2, 0], sizes = [16, 16, 3], strides = [1, 1, 1]} : vector<18x18x3xf32> to vector<16x16x3xf32>
    %12 = vector.extract_strided_slice %5 {offsets = [2, 0, 0], sizes = [16, 16, 3], strides = [1, 1, 1]} : vector<18x18x3xf32> to vector<16x16x3xf32>
    %13 = vector.extract_strided_slice %5 {offsets = [2, 1, 0], sizes = [16, 16, 3], strides = [1, 1, 1]} : vector<18x18x3xf32> to vector<16x16x3xf32>
    %14 = vector.extract_strided_slice %5 {offsets = [2, 2, 0], sizes = [16, 16, 3], strides = [1, 1, 1]} : vector<18x18x3xf32> to vector<16x16x3xf32>
    %15 = tpu.concatenate %6, %7, %8, %9, %10, %11, %12, %13, %14 in 2 : vector<16x16x3xf32>, vector<16x16x3xf32>, vector<16x16x3xf32>, vector<16x16x3xf32>, vector<16x16x3xf32>, vector<16x16x3xf32>, vector<16x16x3xf32>, vector<16x16x3xf32>, vector<16x16x3xf32> -> vector<16x16x27xf32>
    %16 = vector.shape_cast %15 : vector<16x16x27xf32> to vector<256x27xf32>
    %c0_11 = arith.constant 0 : index
    %c0_12 = arith.constant 0 : index
    %17 = vector.load %arg2[%c0_11, %c0_12] : memref<27x16xf32, #tpu.memory_space<vmem>>, vector<27x16xf32>
    %cst_13 = arith.constant dense<0.000000e+00> : vector<256x16xf32>
    %18 = tpu.matmul %16, %17, %cst_13 {dimension_numbers = #tpu.dot_dimension_numbers<[1], [0], [0], [1], [0, 0, 1, 1], [], []>} : vector<256x27xf32>, vector<27x16xf32>, vector<256x16xf32> -> vector<256x16xf32>
    %c0_14 = arith.constant 0 : index
    %c0_15 = arith.constant 0 : index
    %19 = vector.load %arg3[%c0_14, %c0_15] : memref<1x16xf32, #tpu.memory_space<vmem>>, vector<1x16xf32>
    %20 = vector.broadcast %19 : vector<1x16xf32> to vector<256x16xf32>
    %21 = arith.addf %18, %20 : vector<256x16xf32>
    %cst_16 = arith.constant 0.000000e+00 : f32
    %22 = vector.broadcast %cst_16 : f32 to vector<256x16xf32>
    %23 = arith.maximumf %21, %22 : vector<256x16xf32>
    %c0_17 = arith.constant 0 : index
    %c0_18 = arith.constant 0 : index
    %24 = vector.load %arg14[%c0_17, %c0_18] : memref<256x16xf32, #tpu.memory_space<vmem>>, vector<256x16xf32>
    tpu.vector_store %arg14[%c0_17, %c0_18], %23 {strides = array<i32>} : memref<256x16xf32, #tpu.memory_space<vmem>>, vector<256x16xf32>,
    %c0_19 = arith.constant 0 : index
    %c0_20 = arith.constant 0 : index
    %25 = tpu.strided_load %arg14[%c0_19, %c0_20] {strides = array<i32: 2, 1>} : memref<256x16xf32, #tpu.memory_space<vmem>>, vector<128x16xf32>
    %c1_21 = arith.constant 1 : index
    %c0_22 = arith.constant 0 : index
    %26 = tpu.strided_load %arg14[%c1_21, %c0_22] {strides = array<i32: 2, 1>} : memref<256x16xf32, #tpu.memory_space<vmem>>, vector<128x16xf32>
    %27 = arith.maximumf %25, %26 : vector<128x16xf32>
    %28 = vector.shape_cast %27 : vector<128x16xf32> to vector<8x2x8x16xf32>
    %c0_23 = arith.constant 0 : index
    %c0_24 = arith.constant 0 : index
    %c0_25 = arith.constant 0 : index
    %c0_26 = arith.constant 0 : index
    %29 = vector.load %arg15[%c0_23, %c0_24, %c0_25, %c0_26] : memref<8x2x8x16xf32, #tpu.memory_space<vmem>>, vector<8x2x8x16xf32>
    tpu.vector_store %arg15[%c0_23, %c0_24, %c0_25, %c0_26], %28 {strides = array<i32>} : memref<8x2x8x16xf32, #tpu.memory_space<vmem>>, vector<8x2x8x16xf32>,
    %c0_27 = arith.constant 0 : index
    %c0_28 = arith.constant 0 : index
    %c0_29 = arith.constant 0 : index
    %c0_30 = arith.constant 0 : index
    %30 = vector.load %arg15[%c0_27, %c0_28, %c0_29, %c0_30] : memref<8x2x8x16xf32, #tpu.memory_space<vmem>>, vector<8x1x8x16xf32>
    %31 = vector.shape_cast %30 : vector<8x1x8x16xf32> to vector<8x8x16xf32>
    %c0_31 = arith.constant 0 : index
    %c1_32 = arith.constant 1 : index
    %c0_33 = arith.constant 0 : index
    %c0_34 = arith.constant 0 : index
    %32 = vector.load %arg15[%c0_31, %c1_32, %c0_33, %c0_34] : memref<8x2x8x16xf32, #tpu.memory_space<vmem>>, vector<8x1x8x16xf32>
    %33 = vector.shape_cast %32 : vector<8x1x8x16xf32> to vector<8x8x16xf32>
    %34 = arith.maximumf %31, %33 : vector<8x8x16xf32>
    %cst_35 = arith.constant 0.000000e+00 : f32
    %35 = vector.broadcast %cst_35 : f32 to vector<10x10x16xf32>
    %c0_36 = arith.constant 0 : index
    %c0_37 = arith.constant 0 : index
    %c0_38 = arith.constant 0 : index
    %36 = vector.load %arg16[%c0_36, %c0_37, %c0_38] : memref<10x10x16xf32, #tpu.memory_space<vmem>>, vector<10x10x16xf32>
    tpu.vector_store %arg16[%c0_36, %c0_37, %c0_38], %35 {strides = array<i32>} : memref<10x10x16xf32, #tpu.memory_space<vmem>>, vector<10x10x16xf32>,
    %c1_39 = arith.constant 1 : index
    %c1_40 = arith.constant 1 : index
    %c0_41 = arith.constant 0 : index
    %37 = vector.load %arg16[%c1_39, %c1_40, %c0_41] : memref<10x10x16xf32, #tpu.memory_space<vmem>>, vector<8x8x16xf32>
    tpu.vector_store %arg16[%c1_39, %c1_40, %c0_41], %34 {strides = array<i32>} : memref<10x10x16xf32, #tpu.memory_space<vmem>>, vector<8x8x16xf32>,
    %c0_42 = arith.constant 0 : index
    %c0_43 = arith.constant 0 : index
    %c0_44 = arith.constant 0 : index
    %38 = vector.load %arg16[%c0_42, %c0_43, %c0_44] : memref<10x10x16xf32, #tpu.memory_space<vmem>>, vector<10x10x16xf32>
    %39 = vector.extract_strided_slice %38 {offsets = [0, 0, 0], sizes = [8, 8, 16], strides = [1, 1, 1]} : vector<10x10x16xf32> to vector<8x8x16xf32>
    %40 = vector.extract_strided_slice %38 {offsets = [0, 1, 0], sizes = [8, 8, 16], strides = [1, 1, 1]} : vector<10x10x16xf32> to vector<8x8x16xf32>
    %41 = vector.extract_strided_slice %38 {offsets = [0, 2, 0], sizes = [8, 8, 16], strides = [1, 1, 1]} : vector<10x10x16xf32> to vector<8x8x16xf32>
    %42 = vector.extract_strided_slice %38 {offsets = [1, 0, 0], sizes = [8, 8, 16], strides = [1, 1, 1]} : vector<10x10x16xf32> to vector<8x8x16xf32>
    %43 = vector.extract_strided_slice %38 {offsets = [1, 1, 0], sizes = [8, 8, 16], strides = [1, 1, 1]} : vector<10x10x16xf32> to vector<8x8x16xf32>
    %44 = vector.extract_strided_slice %38 {offsets = [1, 2, 0], sizes = [8, 8, 16], strides = [1, 1, 1]} : vector<10x10x16xf32> to vector<8x8x16xf32>
    %45 = vector.extract_strided_slice %38 {offsets = [2, 0, 0], sizes = [8, 8, 16], strides = [1, 1, 1]} : vector<10x10x16xf32> to vector<8x8x16xf32>
    %46 = vector.extract_strided_slice %38 {offsets = [2, 1, 0], sizes = [8, 8, 16], strides = [1, 1, 1]} : vector<10x10x16xf32> to vector<8x8x16xf32>
    %47 = vector.extract_strided_slice %38 {offsets = [2, 2, 0], sizes = [8, 8, 16], strides = [1, 1, 1]} : vector<10x10x16xf32> to vector<8x8x16xf32>
    %48 = tpu.concatenate %39, %40, %41, %42, %43, %44, %45, %46, %47 in 2 : vector<8x8x16xf32>, vector<8x8x16xf32>, vector<8x8x16xf32>, vector<8x8x16xf32>, vector<8x8x16xf32>, vector<8x8x16xf32>, vector<8x8x16xf32>, vector<8x8x16xf32>, vector<8x8x16xf32> -> vector<8x8x144xf32>
    %49 = vector.shape_cast %48 : vector<8x8x144xf32> to vector<64x144xf32>
    %c0_45 = arith.constant 0 : index
    %c0_46 = arith.constant 0 : index
    %50 = vector.load %arg4[%c0_45, %c0_46] : memref<144x32xf32, #tpu.memory_space<vmem>>, vector<144x32xf32>
    %cst_47 = arith.constant dense<0.000000e+00> : vector<64x32xf32>
    %51 = tpu.matmul %49, %50, %cst_47 {dimension_numbers = #tpu.dot_dimension_numbers<[1], [0], [0], [1], [0, 0, 1, 1], [], []>} : vector<64x144xf32>, vector<144x32xf32>, vector<64x32xf32> -> vector<64x32xf32>
    %c0_48 = arith.constant 0 : index
    %c0_49 = arith.constant 0 : index
    %52 = vector.load %arg5[%c0_48, %c0_49] : memref<1x32xf32, #tpu.memory_space<vmem>>, vector<1x32xf32>
    %53 = vector.broadcast %52 : vector<1x32xf32> to vector<64x32xf32>
    %54 = arith.addf %51, %53 : vector<64x32xf32>
    %cst_50 = arith.constant 0.000000e+00 : f32
    %55 = vector.broadcast %cst_50 : f32 to vector<64x32xf32>
    %56 = arith.maximumf %54, %55 : vector<64x32xf32>
    %cst_51 = arith.constant 0.000000e+00 : f32
    %57 = vector.broadcast %cst_51 : f32 to vector<10x10x32xf32>
    %c0_52 = arith.constant 0 : index
    %c0_53 = arith.constant 0 : index
    %c0_54 = arith.constant 0 : index
    %58 = vector.load %arg17[%c0_52, %c0_53, %c0_54] : memref<10x10x32xf32, #tpu.memory_space<vmem>>, vector<10x10x32xf32>
    tpu.vector_store %arg17[%c0_52, %c0_53, %c0_54], %57 {strides = array<i32>} : memref<10x10x32xf32, #tpu.memory_space<vmem>>, vector<10x10x32xf32>,
    %59 = vector.shape_cast %56 : vector<64x32xf32> to vector<8x8x32xf32>
    %c1_55 = arith.constant 1 : index
    %c1_56 = arith.constant 1 : index
    %c0_57 = arith.constant 0 : index
    %60 = vector.load %arg17[%c1_55, %c1_56, %c0_57] : memref<10x10x32xf32, #tpu.memory_space<vmem>>, vector<8x8x32xf32>
    tpu.vector_store %arg17[%c1_55, %c1_56, %c0_57], %59 {strides = array<i32>} : memref<10x10x32xf32, #tpu.memory_space<vmem>>, vector<8x8x32xf32>,
    %c0_58 = arith.constant 0 : index
    %c0_59 = arith.constant 0 : index
    %c0_60 = arith.constant 0 : index
    %61 = vector.load %arg17[%c0_58, %c0_59, %c0_60] : memref<10x10x32xf32, #tpu.memory_space<vmem>>, vector<10x10x32xf32>
    %62 = vector.extract_strided_slice %61 {offsets = [0, 0, 0], sizes = [8, 8, 32], strides = [1, 1, 1]} : vector<10x10x32xf32> to vector<8x8x32xf32>
    %63 = vector.extract_strided_slice %61 {offsets = [0, 1, 0], sizes = [8, 8, 32], strides = [1, 1, 1]} : vector<10x10x32xf32> to vector<8x8x32xf32>
    %64 = vector.extract_strided_slice %61 {offsets = [0, 2, 0], sizes = [8, 8, 32], strides = [1, 1, 1]} : vector<10x10x32xf32> to vector<8x8x32xf32>
    %65 = vector.extract_strided_slice %61 {offsets = [1, 0, 0], sizes = [8, 8, 32], strides = [1, 1, 1]} : vector<10x10x32xf32> to vector<8x8x32xf32>
    %66 = vector.extract_strided_slice %61 {offsets = [1, 1, 0], sizes = [8, 8, 32], strides = [1, 1, 1]} : vector<10x10x32xf32> to vector<8x8x32xf32>
    %67 = vector.extract_strided_slice %61 {offsets = [1, 2, 0], sizes = [8, 8, 32], strides = [1, 1, 1]} : vector<10x10x32xf32> to vector<8x8x32xf32>
    %68 = vector.extract_strided_slice %61 {offsets = [2, 0, 0], sizes = [8, 8, 32], strides = [1, 1, 1]} : vector<10x10x32xf32> to vector<8x8x32xf32>
    %69 = vector.extract_strided_slice %61 {offsets = [2, 1, 0], sizes = [8, 8, 32], strides = [1, 1, 1]} : vector<10x10x32xf32> to vector<8x8x32xf32>
    %70 = vector.extract_strided_slice %61 {offsets = [2, 2, 0], sizes = [8, 8, 32], strides = [1, 1, 1]} : vector<10x10x32xf32> to vector<8x8x32xf32>
    %71 = tpu.concatenate %62, %63, %64, %65, %66, %67, %68, %69, %70 in 2 : vector<8x8x32xf32>, vector<8x8x32xf32>, vector<8x8x32xf32>, vector<8x8x32xf32>, vector<8x8x32xf32>, vector<8x8x32xf32>, vector<8x8x32xf32>, vector<8x8x32xf32>, vector<8x8x32xf32> -> vector<8x8x288xf32>
    %72 = vector.shape_cast %71 : vector<8x8x288xf32> to vector<64x288xf32>
    %c0_61 = arith.constant 0 : index
    %c0_62 = arith.constant 0 : index
    %73 = vector.load %arg6[%c0_61, %c0_62] : memref<288x32xf32, #tpu.memory_space<vmem>>, vector<288x32xf32>
    %cst_63 = arith.constant dense<0.000000e+00> : vector<64x32xf32>
    %74 = tpu.matmul %72, %73, %cst_63 {dimension_numbers = #tpu.dot_dimension_numbers<[1], [0], [0], [1], [0, 0, 1, 1], [], []>} : vector<64x288xf32>, vector<288x32xf32>, vector<64x32xf32> -> vector<64x32xf32>
    %c0_64 = arith.constant 0 : index
    %c0_65 = arith.constant 0 : index
    %75 = vector.load %arg7[%c0_64, %c0_65] : memref<1x32xf32, #tpu.memory_space<vmem>>, vector<1x32xf32>
    %76 = vector.broadcast %75 : vector<1x32xf32> to vector<64x32xf32>
    %77 = arith.addf %74, %76 : vector<64x32xf32>
    %cst_66 = arith.constant 0.000000e+00 : f32
    %78 = vector.broadcast %cst_66 : f32 to vector<64x32xf32>
    %79 = arith.maximumf %77, %78 : vector<64x32xf32>
    %c0_67 = arith.constant 0 : index
    %c0_68 = arith.constant 0 : index
    %80 = vector.load %arg18[%c0_67, %c0_68] : memref<64x32xf32, #tpu.memory_space<vmem>>, vector<64x32xf32>
    tpu.vector_store %arg18[%c0_67, %c0_68], %79 {strides = array<i32>} : memref<64x32xf32, #tpu.memory_space<vmem>>, vector<64x32xf32>,
    %c0_69 = arith.constant 0 : index
    %c0_70 = arith.constant 0 : index
    %81 = tpu.strided_load %arg18[%c0_69, %c0_70] {strides = array<i32: 2, 1>} : memref<64x32xf32, #tpu.memory_space<vmem>>, vector<32x32xf32>
    %c1_71 = arith.constant 1 : index
    %c0_72 = arith.constant 0 : index
    %82 = tpu.strided_load %arg18[%c1_71, %c0_72] {strides = array<i32: 2, 1>} : memref<64x32xf32, #tpu.memory_space<vmem>>, vector<32x32xf32>
    %83 = arith.maximumf %81, %82 : vector<32x32xf32>
    %84 = vector.extract_strided_slice %83 {offsets = [0, 0], sizes = [4, 32], strides = [1, 1]} : vector<32x32xf32> to vector<4x32xf32>
    %85 = vector.extract_strided_slice %83 {offsets = [4, 0], sizes = [4, 32], strides = [1, 1]} : vector<32x32xf32> to vector<4x32xf32>
    %86 = arith.maximumf %84, %85 : vector<4x32xf32>
    %87 = vector.extract_strided_slice %86 {offsets = [0, 0], sizes = [1, 32], strides = [1, 1]} : vector<4x32xf32> to vector<1x32xf32>
    %88 = vector.extract_strided_slice %86 {offsets = [1, 0], sizes = [1, 32], strides = [1, 1]} : vector<4x32xf32> to vector<1x32xf32>
    %89 = vector.extract_strided_slice %86 {offsets = [2, 0], sizes = [1, 32], strides = [1, 1]} : vector<4x32xf32> to vector<1x32xf32>
    %90 = vector.extract_strided_slice %86 {offsets = [3, 0], sizes = [1, 32], strides = [1, 1]} : vector<4x32xf32> to vector<1x32xf32>
    %91 = vector.extract_strided_slice %83 {offsets = [8, 0], sizes = [4, 32], strides = [1, 1]} : vector<32x32xf32> to vector<4x32xf32>
    %92 = vector.extract_strided_slice %83 {offsets = [12, 0], sizes = [4, 32], strides = [1, 1]} : vector<32x32xf32> to vector<4x32xf32>
    %93 = arith.maximumf %91, %92 : vector<4x32xf32>
    %94 = vector.extract_strided_slice %93 {offsets = [0, 0], sizes = [1, 32], strides = [1, 1]} : vector<4x32xf32> to vector<1x32xf32>
    %95 = vector.extract_strided_slice %93 {offsets = [1, 0], sizes = [1, 32], strides = [1, 1]} : vector<4x32xf32> to vector<1x32xf32>
    %96 = vector.extract_strided_slice %93 {offsets = [2, 0], sizes = [1, 32], strides = [1, 1]} : vector<4x32xf32> to vector<1x32xf32>
    %97 = vector.extract_strided_slice %93 {offsets = [3, 0], sizes = [1, 32], strides = [1, 1]} : vector<4x32xf32> to vector<1x32xf32>
    %98 = vector.extract_strided_slice %83 {offsets = [16, 0], sizes = [4, 32], strides = [1, 1]} : vector<32x32xf32> to vector<4x32xf32>
    %99 = vector.extract_strided_slice %83 {offsets = [20, 0], sizes = [4, 32], strides = [1, 1]} : vector<32x32xf32> to vector<4x32xf32>
    %100 = arith.maximumf %98, %99 : vector<4x32xf32>
    %101 = vector.extract_strided_slice %100 {offsets = [0, 0], sizes = [1, 32], strides = [1, 1]} : vector<4x32xf32> to vector<1x32xf32>
    %102 = vector.extract_strided_slice %100 {offsets = [1, 0], sizes = [1, 32], strides = [1, 1]} : vector<4x32xf32> to vector<1x32xf32>
    %103 = vector.extract_strided_slice %100 {offsets = [2, 0], sizes = [1, 32], strides = [1, 1]} : vector<4x32xf32> to vector<1x32xf32>
    %104 = vector.extract_strided_slice %100 {offsets = [3, 0], sizes = [1, 32], strides = [1, 1]} : vector<4x32xf32> to vector<1x32xf32>
    %105 = vector.extract_strided_slice %83 {offsets = [24, 0], sizes = [4, 32], strides = [1, 1]} : vector<32x32xf32> to vector<4x32xf32>
    %106 = vector.extract_strided_slice %83 {offsets = [28, 0], sizes = [4, 32], strides = [1, 1]} : vector<32x32xf32> to vector<4x32xf32>
    %107 = arith.maximumf %105, %106 : vector<4x32xf32>
    %108 = vector.extract_strided_slice %107 {offsets = [0, 0], sizes = [1, 32], strides = [1, 1]} : vector<4x32xf32> to vector<1x32xf32>
    %109 = vector.extract_strided_slice %107 {offsets = [1, 0], sizes = [1, 32], strides = [1, 1]} : vector<4x32xf32> to vector<1x32xf32>
    %110 = vector.extract_strided_slice %107 {offsets = [2, 0], sizes = [1, 32], strides = [1, 1]} : vector<4x32xf32> to vector<1x32xf32>
    %111 = vector.extract_strided_slice %107 {offsets = [3, 0], sizes = [1, 32], strides = [1, 1]} : vector<4x32xf32> to vector<1x32xf32>
    %112 = tpu.concatenate %87, %88, %89, %90, %94, %95, %96, %97, %101, %102, %103, %104, %108, %109, %110, %111 in 1 : vector<1x32xf32>, vector<1x32xf32>, vector<1x32xf32>, vector<1x32xf32>, vector<1x32xf32>, vector<1x32xf32>, vector<1x32xf32>, vector<1x32xf32>, vector<1x32xf32>, vector<1x32xf32>, vector<1x32xf32>, vector<1x32xf32>, vector<1x32xf32>, vector<1x32xf32>, vector<1x32xf32>, vector<1x32xf32> -> vector<1x512xf32>
    %c0_73 = arith.constant 0 : index
    %c0_74 = arith.constant 0 : index
    %113 = vector.load %arg8[%c0_73, %c0_74] : memref<512x128xf32, #tpu.memory_space<vmem>>, vector<512x128xf32>
    %cst_75 = arith.constant dense<0.000000e+00> : vector<1x128xf32>
    %114 = tpu.matmul %112, %113, %cst_75 {dimension_numbers = #tpu.dot_dimension_numbers<[1], [0], [0], [1], [0, 0, 1, 1], [], []>} : vector<1x512xf32>, vector<512x128xf32>, vector<1x128xf32> -> vector<1x128xf32>
    %c0_76 = arith.constant 0 : index
    %c0_77 = arith.constant 0 : index
    %115 = vector.load %arg9[%c0_76, %c0_77] : memref<1x128xf32, #tpu.memory_space<vmem>>, vector<1x128xf32>
    %116 = arith.addf %114, %115 : vector<1x128xf32>
    %cst_78 = arith.constant 0.000000e+00 : f32
    %117 = vector.broadcast %cst_78 : f32 to vector<1x128xf32>
    %118 = arith.maximumf %116, %117 : vector<1x128xf32>
    %c0_79 = arith.constant 0 : index
    %c0_80 = arith.constant 0 : index
    %119 = vector.load %arg10[%c0_79, %c0_80] : memref<128x128xf32, #tpu.memory_space<vmem>>, vector<128x128xf32>
    %cst_81 = arith.constant dense<0.000000e+00> : vector<1x128xf32>
    %120 = tpu.matmul %118, %119, %cst_81 {dimension_numbers = #tpu.dot_dimension_numbers<[1], [0], [0], [1], [0, 0, 1, 1], [], []>} : vector<1x128xf32>, vector<128x128xf32>, vector<1x128xf32> -> vector<1x128xf32>
    %c0_82 = arith.constant 0 : index
    %c0_83 = arith.constant 0 : index
    %121 = vector.load %arg11[%c0_82, %c0_83] : memref<1x128xf32, #tpu.memory_space<vmem>>, vector<1x128xf32>
    %122 = arith.addf %120, %121 : vector<1x128xf32>
    %cst_84 = arith.constant 0.000000e+00 : f32
    %123 = vector.broadcast %cst_84 : f32 to vector<1x128xf32>
    %124 = arith.maximumf %122, %123 : vector<1x128xf32>
    %c0_85 = arith.constant 0 : index
    %c0_86 = arith.constant 0 : index
    %c0_87 = arith.constant 0 : index
    %125 = vector.load %arg12[%c0_85, %c0_86, %c0_87] : memref<1x1x128xf32, #tpu.memory_space<vmem>>, vector<1x1x128xf32>
    %126 = vector.shape_cast %125 : vector<1x1x128xf32> to vector<1x128xf32>
    %127 = vector.shape_cast %124 : vector<1x128xf32> to vector<1x1x128xf32>
    tpu.vector_store %arg12[%c0_85, %c0_86, %c0_87], %127 {strides = array<i32>} : memref<1x1x128xf32, #tpu.memory_space<vmem>>, vector<1x1x128xf32>,
    return
  }
  func.func @transform_0(%arg0: i32) -> (i32, i32, i32, i32) {
    %c0_i32 = arith.constant 0 : i32
    %c0_i32_0 = arith.constant 0 : i32
    %c0_i32_1 = arith.constant 0 : i32
    %c0_i32_2 = arith.constant 0 : i32
    return %arg0, %c0_i32, %c0_i32_0, %c0_i32_1 : i32, i32, i32, i32
  }
  func.func @transform_1(%arg0: i32) -> (i32, i32) {
    %c0_i32 = arith.constant 0 : i32
    %c0_i32_0 = arith.constant 0 : i32
    %c0_i32_1 = arith.constant 0 : i32
    return %c0_i32, %c0_i32_0 : i32, i32
  }
  func.func @transform_2(%arg0: i32) -> (i32, i32) {
    %c0_i32 = arith.constant 0 : i32
    %c0_i32_0 = arith.constant 0 : i32
    %c0_i32_1 = arith.constant 0 : i32
    return %c0_i32, %c0_i32_0 : i32, i32
  }
  func.func @transform_3(%arg0: i32) -> (i32, i32) {
    %c0_i32 = arith.constant 0 : i32
    %c0_i32_0 = arith.constant 0 : i32
    %c0_i32_1 = arith.constant 0 : i32
    return %c0_i32, %c0_i32_0 : i32, i32
  }
  func.func @transform_4(%arg0: i32) -> (i32, i32) {
    %c0_i32 = arith.constant 0 : i32
    %c0_i32_0 = arith.constant 0 : i32
    %c0_i32_1 = arith.constant 0 : i32
    return %c0_i32, %c0_i32_0 : i32, i32
  }
  func.func @transform_5(%arg0: i32) -> (i32, i32) {
    %c0_i32 = arith.constant 0 : i32
    %c0_i32_0 = arith.constant 0 : i32
    %c0_i32_1 = arith.constant 0 : i32
    return %c0_i32, %c0_i32_0 : i32, i32
  }
  func.func @transform_6(%arg0: i32) -> (i32, i32) {
    %c0_i32 = arith.constant 0 : i32
    %c0_i32_0 = arith.constant 0 : i32
    %c0_i32_1 = arith.constant 0 : i32
    return %c0_i32, %c0_i32_0 : i32, i32
  }
  func.func @transform_7(%arg0: i32) -> (i32, i32) {
    %c0_i32 = arith.constant 0 : i32
    %c0_i32_0 = arith.constant 0 : i32
    %c0_i32_1 = arith.constant 0 : i32
    return %c0_i32, %c0_i32_0 : i32, i32
  }
  func.func @transform_8(%arg0: i32) -> (i32, i32) {
    %c0_i32 = arith.constant 0 : i32
    %c0_i32_0 = arith.constant 0 : i32
    %c0_i32_1 = arith.constant 0 : i32
    return %c0_i32, %c0_i32_0 : i32, i32
  }
  func.func @transform_9(%arg0: i32) -> (i32, i32) {
    %c0_i32 = arith.constant 0 : i32
    %c0_i32_0 = arith.constant 0 : i32
    %c0_i32_1 = arith.constant 0 : i32
    return %c0_i32, %c0_i32_0 : i32, i32
  }
  func.func @transform_10(%arg0: i32) -> (i32, i32) {
    %c0_i32 = arith.constant 0 : i32
    %c0_i32_0 = arith.constant 0 : i32
    %c0_i32_1 = arith.constant 0 : i32
    return %c0_i32, %c0_i32_0 : i32, i32
  }
  func.func @transform_11(%arg0: i32) -> (i32, i32, i32) {
    %c0_i32 = arith.constant 0 : i32
    %c0_i32_0 = arith.constant 0 : i32
    %c0_i32_1 = arith.constant 0 : i32
    return %arg0, %c0_i32, %c0_i32_0 : i32, i32, i32
  }
}

</mosaic_0001>

<llo_original>
// kernel: vgg_base_forward.1
$region0: #{vgg_base_forward.1}
  #allocation0 [shape = 'u32[]', space=smem, size = 0x4, offset = 0x4, fixed_abs, tag = 'smem constant byte address 0x4 - core index']
  #allocation1 [shape = 'u32[72,128]{1,0:T(1,128)}', space=vmem, size = 0x9000, scoped, tag = 'internal scratch']
  #allocation2 [shape = 'f32[18,18,3]{2,1,0:T(8,128)}', space=vmem, size = 0x36000, scoped, tag = 'scratch operand']
  #allocation3 [shape = 'f32[256,16]{1,0:T(8,128)}', space=vmem, size = 0x20000, scoped, tag = 'scratch operand']
  #allocation4 [shape = 'f32[8,2,8,16]{3,2,1,0:T(8,128)}', space=vmem, size = 0x10000, scoped, tag = 'scratch operand']
  #allocation5 [shape = 'f32[10,10,16]{2,1,0:T(8,128)}', space=vmem, size = 0x14000, scoped, tag = 'scratch operand']
  #allocation6 [shape = 'f32[10,10,32]{2,1,0:T(8,128)}', space=vmem, size = 0x14000, scoped, tag = 'scratch operand']
  #allocation7 [shape = 'f32[64,32]{1,0:T(8,128)}', space=vmem, size = 0x8000, scoped, tag = 'scratch operand']
  %s0 = inlined_call_operand.vmem [shape: f32[2,16,16,3], index: 0, kind: input, shape index: {}]
  %s1 = inlined_call_operand.vmem [shape: f32[27,16], index: 1, kind: input, shape index: {}]
  %s2 = inlined_call_operand.vmem [shape: f32[1,16], index: 2, kind: input, shape index: {}]
  %s3 = inlined_call_operand.vmem [shape: f32[144,32], index: 3, kind: input, shape index: {}]
  %s4 = inlined_call_operand.vmem [shape: f32[1,32], index: 4, kind: input, shape index: {}]
  %s5 = inlined_call_operand.vmem [shape: f32[288,32], index: 5, kind: input, shape index: {}]
  %s6 = inlined_call_operand.vmem [shape: f32[1,32], index: 6, kind: input, shape index: {}]
  %s7 = inlined_call_operand.vmem [shape: f32[512,128], index: 7, kind: input, shape index: {}]
  %s8 = inlined_call_operand.vmem [shape: f32[1,128], index: 8, kind: input, shape index: {}]
  %s9 = inlined_call_operand.vmem [shape: f32[128,128], index: 9, kind: input, shape index: {}]
  %s10 = inlined_call_operand.vmem [shape: f32[1,128], index: 10, kind: input, shape index: {}]
  %s11 = inlined_call_operand.hbm [shape: f32[2,1,128], index: 11, kind: output, shape index: {}]
  %s12 = sld [smem:[#allocation0]]
  $region77: #{vgg_base_forward.1} parent=0
    _
  %s14 = ssub.s32 1, %s12
  %s15 = scalar_select 0, %s14, %s12
  $region1: #{vgg_base_forward.1} parent=0
    #allocation8 [shape = 'u8[1024]{0}', space=vmem, size = 0x400, scoped, tag = 'output window, operand 0']
    #allocation9 [shape = 's32[2]{0}', space=sflag, size = 0x8, scoped, tag = 'scoped memory for vgg_base_forward.1']
    %16 = vsyncpa [#allocation9], 0
    %s17 = scalar_lea.sflag [#allocation9], 1
    %18 = vsyncpa %s17, 0
    loop: start=0, step=1, limit=4
    $region2: #{vgg_base_forward.1} parent=1 // loop_pre_header
      _
    $region3: #{vgg_base_forward.1} parent=1 // loop_header
      %s20 = sphi 0, %s24
      %p21 = scmp.ge.s32.totalorder %s20, 4
      %s30 = sphi 0, %s32
      %s33 = sphi 0, %s30
      %s34 = sphi 0, %s33
      %s50 = sphi 0, %s34
      %s54 = sphi 0, %s54
      %s56 = sphi 0, %s54
      %s57 = sphi 0, %s56
      %s71 = sphi 0, %s57
      %s75 = sphi 0, %s75
      %s77 = sphi 0, %s75
      %s78 = sphi 0, %s77
      %s92 = sphi 0, %s78
      %s96 = sphi 0, %s96
      %s98 = sphi 0, %s96
      %s99 = sphi 0, %s98
      %s113 = sphi 0, %s99
      %s117 = sphi 0, %s117
      %s119 = sphi 0, %s117
      %s120 = sphi 0, %s119
      %s134 = sphi 0, %s120
      %s138 = sphi 0, %s138
      %s140 = sphi 0, %s138
      %s141 = sphi 0, %s140
      %s155 = sphi 0, %s141
      %s159 = sphi 0, %s159
      %s161 = sphi 0, %s159
      %s162 = sphi 0, %s161
      %s176 = sphi 0, %s162
      %s180 = sphi 0, %s180
      %s182 = sphi 0, %s180
      %s183 = sphi 0, %s182
      %s197 = sphi 0, %s183
      %s201 = sphi 0, %s201
      %s203 = sphi 0, %s201
      %s204 = sphi 0, %s203
      %s218 = sphi 0, %s204
      %s222 = sphi 0, %s222
      %s224 = sphi 0, %s222
      %s225 = sphi 0, %s224
      %s239 = sphi 0, %s225
      %s243 = sphi 0, %s243
      %s245 = sphi 0, %s243
      %s246 = sphi 0, %s245
      %s260 = sphi 0, %s246
      %s266 = sphi 0, %s268
      %s269 = sphi 0, %s266
      %s270 = sphi 0, %s269
      %s286 = sphi 0, %s270
    $region4: #{vgg_base_forward.1} parent=1 // loop_header_branch
      %23 = sbr.rel (%p21) target = $region8
    $region5: #{vgg_base_forward.1} parent=1 // loop_body
      %s25 = ssub.s32 %s20, 1
      %s26 = ssub.s32 %s20, 2
      %s27 = sadd.s32 %s20, 1
      %s28 = ssub.s32 %s20, %s27
      %p29 = scmp.eq.s32.totalorder %s28, 0
      %s31 = sadd.s32 %s30, 1
      %s32 = scalar_select %p29, %s30, %s31
      %p35 = pneg %p29
      %p36 = scmp.eq.s32.totalorder %s20, 1
      %p37 = por %p35, %p36
      %p38 = scmp.ne.s32.totalorder %s30, %s33
      %p39 = scmp.eq.s32.totalorder %s20, 0
      %p40 = por %p38, %p39
      %p41 = scmp.ne.s32.totalorder %s30, %s33
      %p42 = scmp.eq.s32.totalorder %s25, 1
      %p43 = por %p41, %p42
      %p44 = scmp.ne.s32.totalorder %s33, %s34
      %p45 = scmp.eq.s32.totalorder %s25, 0
      %p46 = por %p44, %p45
      %p47 = scmp.ne.s32.totalorder %s33, %s34
      %p48 = scmp.eq.s32.totalorder %s26, 1
      %p49 = por %p47, %p48
      %p51 = scmp.ne.s32.totalorder %s34, %s50
      %p52 = scmp.eq.s32.totalorder %s26, 0
      %p53 = por %p51, %p52
      %s55 = sadd.s32 %s54, 1
      %p58 = scmp.eq.s32.totalorder %s20, 1
      %p59 = scmp.ne.s32.totalorder %s54, %s56
      %p60 = scmp.eq.s32.totalorder %s20, 0
      %p61 = por %p59, %p60
      %p62 = scmp.ne.s32.totalorder %s54, %s56
      %p63 = scmp.eq.s32.totalorder %s25, 1
      %p64 = por %p62, %p63
      %p65 = scmp.ne.s32.totalorder %s56, %s57
      %p66 = scmp.eq.s32.totalorder %s25, 0
      %p67 = por %p65, %p66
      %p68 = scmp.ne.s32.totalorder %s56, %s57
      %p69 = scmp.eq.s32.totalorder %s26, 1
      %p70 = por %p68, %p69
      %p72 = scmp.ne.s32.totalorder %s57, %s71
      %p73 = scmp.eq.s32.totalorder %s26, 0
      %p74 = por %p72, %p73
      %s76 = sadd.s32 %s75, 1
      %p79 = scmp.eq.s32.totalorder %s20, 1
      %p80 = scmp.ne.s32.totalorder %s75, %s77
      %p81 = scmp.eq.s32.totalorder %s20, 0
      %p82 = por %p80, %p81
      %p83 = scmp.ne.s32.totalorder %s75, %s77
      %p84 = scmp.eq.s32.totalorder %s25, 1
      %p85 = por %p83, %p84
      %p86 = scmp.ne.s32.totalorder %s77, %s78
      %p87 = scmp.eq.s32.totalorder %s25, 0
      %p88 = por %p86, %p87
      %p89 = scmp.ne.s32.totalorder %s77, %s78
      %p90 = scmp.eq.s32.totalorder %s26, 1
      %p91 = por %p89, %p90
      %p93 = scmp.ne.s32.totalorder %s78, %s92
      %p94 = scmp.eq.s32.totalorder %s26, 0
      %p95 = por %p93, %p94
      %s97 = sadd.s32 %s96, 1
      %p100 = scmp.eq.s32.totalorder %s20, 1
      %p101 = scmp.ne.s32.totalorder %s96, %s98
      %p102 = scmp.eq.s32.totalorder %s20, 0
      %p103 = por %p101, %p102
      %p104 = scmp.ne.s32.totalorder %s96, %s98
      %p105 = scmp.eq.s32.totalorder %s25, 1
      %p106 = por %p104, %p105
      %p107 = scmp.ne.s32.totalorder %s98, %s99
      %p108 = scmp.eq.s32.totalorder %s25, 0
      %p109 = por %p107, %p108
      %p110 = scmp.ne.s32.totalorder %s98, %s99
      %p111 = scmp.eq.s32.totalorder %s26, 1
      %p112 = por %p110, %p111
      %p114 = scmp.ne.s32.totalorder %s99, %s113
      %p115 = scmp.eq.s32.totalorder %s26, 0
      %p116 = por %p114, %p115
      %s118 = sadd.s32 %s117, 1
      %p121 = scmp.eq.s32.totalorder %s20, 1
      %p122 = scmp.ne.s32.totalorder %s117, %s119
      %p123 = scmp.eq.s32.totalorder %s20, 0
      %p124 = por %p122, %p123
      %p125 = scmp.ne.s32.totalorder %s117, %s119
      %p126 = scmp.eq.s32.totalorder %s25, 1
      %p127 = por %p125, %p126
      %p128 = scmp.ne.s32.totalorder %s119, %s120
      %p129 = scmp.eq.s32.totalorder %s25, 0
      %p130 = por %p128, %p129
      %p131 = scmp.ne.s32.totalorder %s119, %s120
      %p132 = scmp.eq.s32.totalorder %s26, 1
      %p133 = por %p131, %p132
      %p135 = scmp.ne.s32.totalorder %s120, %s134
      %p136 = scmp.eq.s32.totalorder %s26, 0
      %p137 = por %p135, %p136
      %s139 = sadd.s32 %s138, 1
      %p142 = scmp.eq.s32.totalorder %s20, 1
      %p143 = scmp.ne.s32.totalorder %s138, %s140
      %p144 = scmp.eq.s32.totalorder %s20, 0
      %p145 = por %p143, %p144
      %p146 = scmp.ne.s32.totalorder %s138, %s140
      %p147 = scmp.eq.s32.totalorder %s25, 1
      %p148 = por %p146, %p147
      %p149 = scmp.ne.s32.totalorder %s140, %s141
      %p150 = scmp.eq.s32.totalorder %s25, 0
      %p151 = por %p149, %p150
      %p152 = scmp.ne.s32.totalorder %s140, %s141
      %p153 = scmp.eq.s32.totalorder %s26, 1
      %p154 = por %p152, %p153
      %p156 = scmp.ne.s32.totalorder %s141, %s155
      %p157 = scmp.eq.s32.totalorder %s26, 0
      %p158 = por %p156, %p157
      %s160 = sadd.s32 %s159, 1
      %p163 = scmp.eq.s32.totalorder %s20, 1
      %p164 = scmp.ne.s32.totalorder %s159, %s161
      %p165 = scmp.eq.s32.totalorder %s20, 0
      %p166 = por %p164, %p165
      %p167 = scmp.ne.s32.totalorder %s159, %s161
      %p168 = scmp.eq.s32.totalorder %s25, 1
      %p169 = por %p167, %p168
      %p170 = scmp.ne.s32.totalorder %s161, %s162
      %p171 = scmp.eq.s32.totalorder %s25, 0
      %p172 = por %p170, %p171
      %p173 = scmp.ne.s32.totalorder %s161, %s162
      %p174 = scmp.eq.s32.totalorder %s26, 1
      %p175 = por %p173, %p174
      %p177 = scmp.ne.s32.totalorder %s162, %s176
      %p178 = scmp.eq.s32.totalorder %s26, 0
      %p179 = por %p177, %p178
      %s181 = sadd.s32 %s180, 1
      %p184 = scmp.eq.s32.totalorder %s20, 1
      %p185 = scmp.ne.s32.totalorder %s180, %s182
      %p186 = scmp.eq.s32.totalorder %s20, 0
      %p187 = por %p185, %p186
      %p188 = scmp.ne.s32.totalorder %s180, %s182
      %p189 = scmp.eq.s32.totalorder %s25, 1
      %p190 = por %p188, %p189
      %p191 = scmp.ne.s32.totalorder %s182, %s183
      %p192 = scmp.eq.s32.totalorder %s25, 0
      %p193 = por %p191, %p192
      %p194 = scmp.ne.s32.totalorder %s182, %s183
      %p195 = scmp.eq.s32.totalorder %s26, 1
      %p196 = por %p194, %p195
      %p198 = scmp.ne.s32.totalorder %s183, %s197
      %p199 = scmp.eq.s32.totalorder %s26, 0
      %p200 = por %p198, %p199
      %s202 = sadd.s32 %s201, 1
      %p205 = scmp.eq.s32.totalorder %s20, 1
      %p206 = scmp.ne.s32.totalorder %s201, %s203
      %p207 = scmp.eq.s32.totalorder %s20, 0
      %p208 = por %p206, %p207
      %p209 = scmp.ne.s32.totalorder %s201, %s203
      %p210 = scmp.eq.s32.totalorder %s25, 1
      %p211 = por %p209, %p210
      %p212 = scmp.ne.s32.totalorder %s203, %s204
      %p213 = scmp.eq.s32.totalorder %s25, 0
      %p214 = por %p212, %p213
      %p215 = scmp.ne.s32.totalorder %s203, %s204
      %p216 = scmp.eq.s32.totalorder %s26, 1
      %p217 = por %p215, %p216
      %p219 = scmp.ne.s32.totalorder %s204, %s218
      %p220 = scmp.eq.s32.totalorder %s26, 0
      %p221 = por %p219, %p220
      %s223 = sadd.s32 %s222, 1
      %p226 = scmp.eq.s32.totalorder %s20, 1
      %p227 = scmp.ne.s32.totalorder %s222, %s224
      %p228 = scmp.eq.s32.totalorder %s20, 0
      %p229 = por %p227, %p228
      %p230 = scmp.ne.s32.totalorder %s222, %s224
      %p231 = scmp.eq.s32.totalorder %s25, 1
      %p232 = por %p230, %p231
      %p233 = scmp.ne.s32.totalorder %s224, %s225
      %p234 = scmp.eq.s32.totalorder %s25, 0
      %p235 = por %p233, %p234
      %p236 = scmp.ne.s32.totalorder %s224, %s225
      %p237 = scmp.eq.s32.totalorder %s26, 1
      %p238 = por %p236, %p237
      %p240 = scmp.ne.s32.totalorder %s225, %s239
      %p241 = scmp.eq.s32.totalorder %s26, 0
      %p242 = por %p240, %p241
      %s244 = sadd.s32 %s243, 1
      %p247 = scmp.eq.s32.totalorder %s20, 1
      %p248 = scmp.ne.s32.totalorder %s243, %s245
      %p249 = scmp.eq.s32.totalorder %s20, 0
      %p250 = por %p248, %p249
      %p251 = scmp.ne.s32.totalorder %s243, %s245
      %p252 = scmp.eq.s32.totalorder %s25, 1
      %p253 = por %p251, %p252
      %p254 = scmp.ne.s32.totalorder %s245, %s246
      %p255 = scmp.eq.s32.totalorder %s25, 0
      %p256 = por %p254, %p255
      %p257 = scmp.ne.s32.totalorder %s245, %s246
      %p258 = scmp.eq.s32.totalorder %s26, 1
      %p259 = por %p257, %p258
      %p261 = scmp.ne.s32.totalorder %s246, %s260
      %p262 = scmp.eq.s32.totalorder %s26, 0
      %p263 = por %p261, %p262
      %s264 = ssub.s32 %s20, %s27
      %p265 = scmp.eq.s32.totalorder %s264, 0
      %s267 = sadd.s32 %s266, 1
      %s268 = scalar_select %p265, %s266, %s267
      %p271 = pneg %p265
      %p272 = scmp.eq.s32.totalorder %s20, 1
      %p273 = por %p271, %p272
      %p274 = scmp.ne.s32.totalorder %s266, %s269
      %p275 = scmp.eq.s32.totalorder %s20, 0
      %p276 = por %p274, %p275
      %p277 = scmp.ne.s32.totalorder %s266, %s269
      %p278 = scmp.eq.s32.totalorder %s25, 1
      %p279 = por %p277, %p278
      %p280 = scmp.ne.s32.totalorder %s269, %s270
      %p281 = scmp.eq.s32.totalorder %s25, 0
      %p282 = por %p280, %p281
      %p283 = scmp.ne.s32.totalorder %s269, %s270
      %p284 = scmp.eq.s32.totalorder %s26, 1
      %p285 = por %p283, %p284
      %p287 = scmp.ne.s32.totalorder %s270, %s286
      %p288 = scmp.eq.s32.totalorder %s26, 0
      %p289 = por %p287, %p288
      %p290 = scmp.le.s32.totalorder 1, %s20
      %p291 = scmp.lt.s32.totalorder %s20, 3
      %p292 = pnand %p290, %p291
      %p293 = pneg %p292
      // Predicated region
      $region9: #{vgg_base_forward.1} parent=5 // pred_check
        _
      $region10: #{vgg_base_forward.1} parent=5 // pred_check_branch
        %295 = sbr.rel (%p292) target = $region12
      $region11: #{vgg_base_forward.1} parent=5 // pred_region
        %s296 = ssub.s32 %s20, 1
        // Predicated region
        $region13: #{vgg_base_forward.1} parent=11 // pred_check
          %p297 = pneg %p67
        $region14: #{vgg_base_forward.1} parent=11 // pred_check_branch
          %299 = sbr.rel (%p297) target = $region16
        $region15: #{vgg_base_forward.1} parent=11 // pred_region
          _
        $region16: #{vgg_base_forward.1} parent=11 // pred_fallthru
          _
        // Predicated region
        $region17: #{vgg_base_forward.1} parent=11 // pred_check
          %p300 = pneg %p88
        $region18: #{vgg_base_forward.1} parent=11 // pred_check_branch
          %302 = sbr.rel (%p300) target = $region20
        $region19: #{vgg_base_forward.1} parent=11 // pred_region
          _
        $region20: #{vgg_base_forward.1} parent=11 // pred_fallthru
          _
        // Predicated region
        $region21: #{vgg_base_forward.1} parent=11 // pred_check
          %p303 = pneg %p109
        $region22: #{vgg_base_forward.1} parent=11 // pred_check_branch
          %305 = sbr.rel (%p303) target = $region24
        $region23: #{vgg_base_forward.1} parent=11 // pred_region
          _
        $region24: #{vgg_base_forward.1} parent=11 // pred_fallthru
          _
        // Predicated region
        $region25: #{vgg_base_forward.1} parent=11 // pred_check
          %p306 = pneg %p130
        $region26: #{vgg_base_forward.1} parent=11 // pred_check_branch
          %308 = sbr.rel (%p306) target = $region28
        $region27: #{vgg_base_forward.1} parent=11 // pred_region
          _
        $region28: #{vgg_base_forward.1} parent=11 // pred_fallthru
          _
        // Predicated region
        $region29: #{vgg_base_forward.1} parent=11 // pred_check
          %p309 = pneg %p151
        $region30: #{vgg_base_forward.1} parent=11 // pred_check_branch
          %311 = sbr.rel (%p309) target = $region32
        $region31: #{vgg_base_forward.1} parent=11 // pred_region
          _
        $region32: #{vgg_base_forward.1} parent=11 // pred_fallthru
          _
        // Predicated region
        $region33: #{vgg_base_forward.1} parent=11 // pred_check
          %p312 = pneg %p172
        $region34: #{vgg_base_forward.1} parent=11 // pred_check_branch
          %314 = sbr.rel (%p312) target = $region36
        $region35: #{vgg_base_forward.1} parent=11 // pred_region
          _
        $region36: #{vgg_base_forward.1} parent=11 // pred_fallthru
          _
        // Predicated region
        $region37: #{vgg_base_forward.1} parent=11 // pred_check
          %p315 = pneg %p193
        $region38: #{vgg_base_forward.1} parent=11 // pred_check_branch
          %317 = sbr.rel (%p315) target = $region40
        $region39: #{vgg_base_forward.1} parent=11 // pred_region
          _
        $region40: #{vgg_base_forward.1} parent=11 // pred_fallthru
          _
        // Predicated region
        $region41: #{vgg_base_forward.1} parent=11 // pred_check
          %p318 = pneg %p214
        $region42: #{vgg_base_forward.1} parent=11 // pred_check_branch
          %320 = sbr.rel (%p318) target = $region44
        $region43: #{vgg_base_forward.1} parent=11 // pred_region
          _
        $region44: #{vgg_base_forward.1} parent=11 // pred_fallthru
          _
        // Predicated region
        $region45: #{vgg_base_forward.1} parent=11 // pred_check
          %p321 = pneg %p235
        $region46: #{vgg_base_forward.1} parent=11 // pred_check_branch
          %323 = sbr.rel (%p321) target = $region48
        $region47: #{vgg_base_forward.1} parent=11 // pred_region
          _
        $region48: #{vgg_base_forward.1} parent=11 // pred_fallthru
          _
        // Predicated region
        $region49: #{vgg_base_forward.1} parent=11 // pred_check
          %p324 = pneg %p256
        $region50: #{vgg_base_forward.1} parent=11 // pred_check_branch
          %326 = sbr.rel (%p324) target = $region52
        $region51: #{vgg_base_forward.1} parent=11 // pred_region
          _
        $region52: #{vgg_base_forward.1} parent=11 // pred_fallthru
          _
      $region12: #{vgg_base_forward.1} parent=5 // pred_fallthru
        _
      %p327 = scmp.lt.s32.totalorder %s20, 2
      // Predicated region
      $region53: #{vgg_base_forward.1} parent=5 // pred_check
        %p328 = pneg %p327
      $region54: #{vgg_base_forward.1} parent=5 // pred_check_branch
        %330 = sbr.rel (%p328) target = $region56
      $region55: #{vgg_base_forward.1} parent=5 // pred_region
        // Predicated region
        $region57: #{vgg_base_forward.1} parent=55 // pred_check
          %p331 = pneg %p40
        $region58: #{vgg_base_forward.1} parent=55 // pred_check_branch
          %333 = sbr.rel (%p331) target = $region60
        $region59: #{vgg_base_forward.1} parent=55 // pred_region
          %p334 = scmp.lt.s32.totalorder %s20, 1
          %s335 = scalar_select %p334, %s20, 1
          %s336 = smul.addr %s335, 32
          %s337 = smul.addr %s336, 8
          %s338 = scalar_lea.vmem %s0, %s337
        $region60: #{vgg_base_forward.1} parent=55 // pred_fallthru
          _
      $region56: #{vgg_base_forward.1} parent=5 // pred_fallthru
        _
      %p339 = scmp.le.s32.totalorder 1, %s20
      %p340 = scmp.lt.s32.totalorder %s20, 3
      %p341 = pnand %p339, %p340
      %p342 = pneg %p341
      // Predicated region
      $region61: #{vgg_base_forward.1} parent=5 // pred_check
        _
      $region62: #{vgg_base_forward.1} parent=5 // pred_check_branch
        %344 = sbr.rel (%p341) target = $region64
      $region63: #{vgg_base_forward.1} parent=5 // pred_region
        %s345 = ssub.s32 %s20, 1
        %p346 = scmp.lt.s32.totalorder %s25, 1
        %s347 = scalar_select %p346, %s25, 1
        %s348 = smul.addr %s347, 32
        %s349 = smul.addr %s348, 8
        %s350 = scalar_lea.vmem %s0, %s349
        %p351 = pneg %p46
        %p352 = pneg %p43
        %p353 = pneg %p67
        %p354 = pneg %p64
        %p355 = pneg %p88
        %p356 = pneg %p85
        %p357 = pneg %p109
        %p358 = pneg %p106
        %p359 = pneg %p130
        %p360 = pneg %p127
        %p361 = pneg %p151
        %p362 = pneg %p148
        %p363 = pneg %p172
        %p364 = pneg %p169
        %p365 = pneg %p193
        %p366 = pneg %p190
        %p367 = pneg %p214
        %p368 = pneg %p211
        %p369 = pneg %p235
        %p370 = pneg %p232
        %p371 = pneg %p256
        %p372 = pneg %p253
        %p373 = pneg %p282
        %p374 = pneg %p279
        %s375 = sand.u32 %s269, 1
        %s376 = scalar_lea.sflag [#allocation9], %s375
        %s377 = sand.u32 %s269, 1
        %s378 = scalar_lea.vmem [#allocation8], %s377
        %p379 = scmp.lt.s32.totalorder %s25, 1
        %s380 = scalar_select %p379, %s25, 1
        %s381 = smul.addr %s380, 32
        %s382 = smul.addr %s381, 8
        %s383 = scalar_lea.vmem %s0, %s382
        %vm384 = vcmask 23552
        %385 = vst.msk [vmem:[#allocation2] sm:$0xff] %vm384, 0.0
        %386 = vst.msk [vmem:[#allocation2 + $0x8] sm:$0xff] %vm384, 0.0
        %vm387 = vcmask 17408
        %388 = vst.msk [vmem:[#allocation2 + $0x10] sm:$0x3] %vm387, 0.0
        %389 = vst.msk [vmem:[#allocation2 + $0x18] sm:$0xff] %vm384, 0.0
        %390 = vst.msk [vmem:[#allocation2 + $0x20] sm:$0xff] %vm384, 0.0
        %391 = vst.msk [vmem:[#allocation2 + $0x28] sm:$0x3] %vm387, 0.0
        %392 = vst.msk [vmem:[#allocation2 + $0x30] sm:$0xff] %vm384, 0.0
        %393 = vst.msk [vmem:[#allocation2 + $0x38] sm:$0xff] %vm384, 0.0
        %394 = vst.msk [vmem:[#allocation2 + $0x40] sm:$0x3] %vm387, 0.0
        %395 = vst.msk [vmem:[#allocation2 + $0x48] sm:$0xff] %vm384, 0.0
        %396 = vst.msk [vmem:[#allocation2 + $0x50] sm:$0xff] %vm384, 0.0
        %397 = vst.msk [vmem:[#allocation2 + $0x58] sm:$0x3] %vm387, 0.0
        %398 = vst.msk [vmem:[#allocation2 + $0x60] sm:$0xff] %vm384, 0.0
        %399 = vst.msk [vmem:[#allocation2 + $0x68] sm:$0xff] %vm384, 0.0
        %400 = vst.msk [vmem:[#allocation2 + $0x70] sm:$0x3] %vm387, 0.0
        %401 = vst.msk [vmem:[#allocation2 + $0x78] sm:$0xff] %vm384, 0.0
        %402 = vst.msk [vmem:[#allocation2 + $0x80] sm:$0xff] %vm384, 0.0
        %403 = vst.msk [vmem:[#allocation2 + $0x88] sm:$0x3] %vm387, 0.0
        %404 = vst.msk [vmem:[#allocation2 + $0x90] sm:$0xff] %vm384, 0.0
        %405 = vst.msk [vmem:[#allocation2 + $0x98] sm:$0xff] %vm384, 0.0
        %406 = vst.msk [vmem:[#allocation2 + $0xa0] sm:$0x3] %vm387, 0.0
        %407 = vst.msk [vmem:[#allocation2 + $0xa8] sm:$0xff] %vm384, 0.0
        %408 = vst.msk [vmem:[#allocation2 + $0xb0] sm:$0xff] %vm384, 0.0
        %409 = vst.msk [vmem:[#allocation2 + $0xb8] sm:$0x3] %vm387, 0.0
        %410 = vst.msk [vmem:[#allocation2 + $0xc0] sm:$0xff] %vm384, 0.0
        %411 = vst.msk [vmem:[#allocation2 + $0xc8] sm:$0xff] %vm384, 0.0
        %412 = vst.msk [vmem:[#allocation2 + $0xd0] sm:$0x3] %vm387, 0.0
        %413 = vst.msk [vmem:[#allocation2 + $0xd8] sm:$0xff] %vm384, 0.0
        %414 = vst.msk [vmem:[#allocation2 + $0xe0] sm:$0xff] %vm384, 0.0
        %415 = vst.msk [vmem:[#allocation2 + $0xe8] sm:$0x3] %vm387, 0.0
        %416 = vst.msk [vmem:[#allocation2 + $0xf0] sm:$0xff] %vm384, 0.0
        %417 = vst.msk [vmem:[#allocation2 + $0xf8] sm:$0xff] %vm384, 0.0
        %418 = vst.msk [vmem:[#allocation2 + $0x100] sm:$0x3] %vm387, 0.0
        %419 = vst.msk [vmem:[#allocation2 + $0x108] sm:$0xff] %vm384, 0.0
        %420 = vst.msk [vmem:[#allocation2 + $0x110] sm:$0xff] %vm384, 0.0
        %421 = vst.msk [vmem:[#allocation2 + $0x118] sm:$0x3] %vm387, 0.0
        %422 = vst.msk [vmem:[#allocation2 + $0x120] sm:$0xff] %vm384, 0.0
        %423 = vst.msk [vmem:[#allocation2 + $0x128] sm:$0xff] %vm384, 0.0
        %424 = vst.msk [vmem:[#allocation2 + $0x130] sm:$0x3] %vm387, 0.0
        %425 = vst.msk [vmem:[#allocation2 + $0x138] sm:$0xff] %vm384, 0.0
        %426 = vst.msk [vmem:[#allocation2 + $0x140] sm:$0xff] %vm384, 0.0
        %427 = vst.msk [vmem:[#allocation2 + $0x148] sm:$0x3] %vm387, 0.0
        %428 = vst.msk [vmem:[#allocation2 + $0x150] sm:$0xff] %vm384, 0.0
        %429 = vst.msk [vmem:[#allocation2 + $0x158] sm:$0xff] %vm384, 0.0
        %430 = vst.msk [vmem:[#allocation2 + $0x160] sm:$0x3] %vm387, 0.0
        %431 = vst.msk [vmem:[#allocation2 + $0x168] sm:$0xff] %vm384, 0.0
        %432 = vst.msk [vmem:[#allocation2 + $0x170] sm:$0xff] %vm384, 0.0
        %433 = vst.msk [vmem:[#allocation2 + $0x178] sm:$0x3] %vm387, 0.0
        %434 = vst.msk [vmem:[#allocation2 + $0x180] sm:$0xff] %vm384, 0.0
        %435 = vst.msk [vmem:[#allocation2 + $0x188] sm:$0xff] %vm384, 0.0
        %436 = vst.msk [vmem:[#allocation2 + $0x190] sm:$0x3] %vm387, 0.0
        %437 = vst.msk [vmem:[#allocation2 + $0x198] sm:$0xff] %vm384, 0.0
        %438 = vst.msk [vmem:[#allocation2 + $0x1a0] sm:$0xff] %vm384, 0.0
        %439 = vst.msk [vmem:[#allocation2 + $0x1a8] sm:$0x3] %vm387, 0.0
        %v440 = vld [vmem:[%s383] sm:$0xff]
        %v441 = vld [vmem:[%s383 + $0x8] sm:$0xff]
        %v442 = vld [vmem:[%s383 + $0x10] sm:$0xff]
        %v443 = vld [vmem:[%s383 + $0x18] sm:$0xff]
        %v444 = vld [vmem:[%s383 + $0x20] sm:$0xff]
        %v445 = vld [vmem:[%s383 + $0x28] sm:$0xff]
        %v446 = vld [vmem:[%s383 + $0x30] sm:$0xff]
        %v447 = vld [vmem:[%s383 + $0x38] sm:$0xff]
        %v448 = vld [vmem:[%s383 + $0x40] sm:$0xff]
        %v449 = vld [vmem:[%s383 + $0x48] sm:$0xff]
        %v450 = vld [vmem:[%s383 + $0x50] sm:$0xff]
        %v451 = vld [vmem:[%s383 + $0x58] sm:$0xff]
        %v452 = vld [vmem:[%s383 + $0x60] sm:$0xff]
        %v453 = vld [vmem:[%s383 + $0x68] sm:$0xff]
        %v454 = vld [vmem:[%s383 + $0x70] sm:$0xff]
        %v455 = vld [vmem:[%s383 + $0x78] sm:$0xff]
        %v456 = vld [vmem:[%s383 + $0x80] sm:$0xff]
        %v457 = vld [vmem:[%s383 + $0x88] sm:$0xff]
        %v458 = vld [vmem:[%s383 + $0x90] sm:$0xff]
        %v459 = vld [vmem:[%s383 + $0x98] sm:$0xff]
        %v460 = vld [vmem:[%s383 + $0xa0] sm:$0xff]
        %v461 = vld [vmem:[%s383 + $0xa8] sm:$0xff]
        %v462 = vld [vmem:[%s383 + $0xb0] sm:$0xff]
        %v463 = vld [vmem:[%s383 + $0xb8] sm:$0xff]
        %v464 = vld [vmem:[%s383 + $0xc0] sm:$0xff]
        %v465 = vld [vmem:[%s383 + $0xc8] sm:$0xff]
        %v466 = vld [vmem:[%s383 + $0xd0] sm:$0xff]
        %v467 = vld [vmem:[%s383 + $0xd8] sm:$0xff]
        %v468 = vld [vmem:[%s383 + $0xe0] sm:$0xff]
        %v469 = vld [vmem:[%s383 + $0xe8] sm:$0xff]
        %v470 = vld [vmem:[%s383 + $0xf0] sm:$0xff]
        %v471 = vld [vmem:[%s383 + $0xf8] sm:$0xff]
        %s472 = scalar_lea.vmem [#allocation2], 24
        %473 = vst.msk [vmem:[%s472 + $0x1] sm:$0xff] %vm384, %v440
        %474 = vst.msk [vmem:[%s472 + $0x9] sm:$0xff] %vm384, %v441
        %475 = vst.msk [vmem:[%s472 + $0x19] sm:$0xff] %vm384, %v442
        %476 = vst.msk [vmem:[%s472 + $0x21] sm:$0xff] %vm384, %v443
        %477 = vst.msk [vmem:[%s472 + $0x31] sm:$0xff] %vm384, %v444
        %478 = vst.msk [vmem:[%s472 + $0x39] sm:$0xff] %vm384, %v445
        %479 = vst.msk [vmem:[%s472 + $0x49] sm:$0xff] %vm384, %v446
        %480 = vst.msk [vmem:[%s472 + $0x51] sm:$0xff] %vm384, %v447
        %481 = vst.msk [vmem:[%s472 + $0x61] sm:$0xff] %vm384, %v448
        %482 = vst.msk [vmem:[%s472 + $0x69] sm:$0xff] %vm384, %v449
        %483 = vst.msk [vmem:[%s472 + $0x79] sm:$0xff] %vm384, %v450
        %484 = vst.msk [vmem:[%s472 + $0x81] sm:$0xff] %vm384, %v451
        %485 = vst.msk [vmem:[%s472 + $0x91] sm:$0xff] %vm384, %v452
        %486 = vst.msk [vmem:[%s472 + $0x99] sm:$0xff] %vm384, %v453
        %487 = vst.msk [vmem:[%s472 + $0xa9] sm:$0xff] %vm384, %v454
        %488 = vst.msk [vmem:[%s472 + $0xb1] sm:$0xff] %vm384, %v455
        %489 = vst.msk [vmem:[%s472 + $0xc1] sm:$0xff] %vm384, %v456
        %490 = vst.msk [vmem:[%s472 + $0xc9] sm:$0xff] %vm384, %v457
        %491 = vst.msk [vmem:[%s472 + $0xd9] sm:$0xff] %vm384, %v458
        %492 = vst.msk [vmem:[%s472 + $0xe1] sm:$0xff] %vm384, %v459
        %493 = vst.msk [vmem:[%s472 + $0xf1] sm:$0xff] %vm384, %v460
        %494 = vst.msk [vmem:[%s472 + $0xf9] sm:$0xff] %vm384, %v461
        %495 = vst.msk [vmem:[%s472 + $0x109] sm:$0xff] %vm384, %v462
        %496 = vst.msk [vmem:[%s472 + $0x111] sm:$0xff] %vm384, %v463
        %497 = vst.msk [vmem:[%s472 + $0x121] sm:$0xff] %vm384, %v464
        %498 = vst.msk [vmem:[%s472 + $0x129] sm:$0xff] %vm384, %v465
        %499 = vst.msk [vmem:[%s472 + $0x139] sm:$0xff] %vm384, %v466
        %500 = vst.msk [vmem:[%s472 + $0x141] sm:$0xff] %vm384, %v467
        %501 = vst.msk [vmem:[%s472 + $0x151] sm:$0xff] %vm384, %v468
        %502 = vst.msk [vmem:[%s472 + $0x159] sm:$0xff] %vm384, %v469
        %503 = vst.msk [vmem:[%s472 + $0x169] sm:$0xff] %vm384, %v470
        %504 = vst.msk [vmem:[%s472 + $0x171] sm:$0xff] %vm384, %v471
        %v505 = vld [vmem:[#allocation2] sm:$0xff]
        %v506 = vld [vmem:[#allocation2 + $0x8] sm:$0xff]
        %v507 = vld [vmem:[#allocation2 + $0x10] sm:$0x3]
        %v508 = vld [vmem:[#allocation2 + $0x18] sm:$0xff]
        %v509 = vld [vmem:[#allocation2 + $0x20] sm:$0xff]
        %v510 = vld [vmem:[#allocation2 + $0x28] sm:$0x3]
        %v511 = vld [vmem:[#allocation2 + $0x30] sm:$0xff]
        %v512 = vld [vmem:[#allocation2 + $0x38] sm:$0xff]
        %v513 = vld [vmem:[#allocation2 + $0x40] sm:$0x3]
        %v514 = vld [vmem:[#allocation2 + $0x48] sm:$0xff]
        %v515 = vld [vmem:[#allocation2 + $0x50] sm:$0xff]
        %v516 = vld [vmem:[#allocation2 + $0x58] sm:$0x3]
        %v517 = vld [vmem:[#allocation2 + $0x60] sm:$0xff]
        %v518 = vld [vmem:[#allocation2 + $0x68] sm:$0xff]
        %v519 = vld [vmem:[#allocation2 + $0x70] sm:$0x3]
        %v520 = vld [vmem:[#allocation2 + $0x78] sm:$0xff]
        %v521 = vld [vmem:[#allocation2 + $0x80] sm:$0xff]
        %v522 = vld [vmem:[#allocation2 + $0x88] sm:$0x3]
        %v523 = vld [vmem:[#allocation2 + $0x90] sm:$0xff]
        %v524 = vld [vmem:[#allocation2 + $0x98] sm:$0xff]
        %v525 = vld [vmem:[#allocation2 + $0xa0] sm:$0x3]
        %v526 = vld [vmem:[#allocation2 + $0xa8] sm:$0xff]
        %v527 = vld [vmem:[#allocation2 + $0xb0] sm:$0xff]
        %v528 = vld [vmem:[#allocation2 + $0xb8] sm:$0x3]
        %v529 = vld [vmem:[#allocation2 + $0xc0] sm:$0xff]
        %v530 = vld [vmem:[#allocation2 + $0xc8] sm:$0xff]
        %v531 = vld [vmem:[#allocation2 + $0xd0] sm:$0x3]
        %v532 = vld [vmem:[#allocation2 + $0xd8] sm:$0xff]
        %v533 = vld [vmem:[#allocation2 + $0xe0] sm:$0xff]
        %v534 = vld [vmem:[#allocation2 + $0xe8] sm:$0x3]
        %v535 = vld [vmem:[#allocation2 + $0xf0] sm:$0xff]
        %v536 = vld [vmem:[#allocation2 + $0xf8] sm:$0xff]
        %v537 = vld [vmem:[#allocation2 + $0x100] sm:$0x3]
        %v538 = vld [vmem:[#allocation2 + $0x108] sm:$0xff]
        %v539 = vld [vmem:[#allocation2 + $0x110] sm:$0xff]
        %v540 = vld [vmem:[#allocation2 + $0x118] sm:$0x3]
        %v541 = vld [vmem:[#allocation2 + $0x120] sm:$0xff]
        %v542 = vld [vmem:[#allocation2 + $0x128] sm:$0xff]
        %v543 = vld [vmem:[#allocation2 + $0x130] sm:$0x3]
        %v544 = vld [vmem:[#allocation2 + $0x138] sm:$0xff]
        %v545 = vld [vmem:[#allocation2 + $0x140] sm:$0xff]
        %v546 = vld [vmem:[#allocation2 + $0x148] sm:$0x3]
        %v547 = vld [vmem:[#allocation2 + $0x150] sm:$0xff]
        %v548 = vld [vmem:[#allocation2 + $0x158] sm:$0xff]
        %v549 = vld [vmem:[#allocation2 + $0x160] sm:$0x3]
        %v550 = vld [vmem:[#allocation2 + $0x168] sm:$0xff]
        %v551 = vld [vmem:[#allocation2 + $0x170] sm:$0xff]
        %v552 = vld [vmem:[#allocation2 + $0x178] sm:$0x3]
        %v553 = vld [vmem:[#allocation2 + $0x180] sm:$0xff]
        %v554 = vld [vmem:[#allocation2 + $0x188] sm:$0xff]
        %v555 = vld [vmem:[#allocation2 + $0x190] sm:$0x3]
        %v556 = vld [vmem:[#allocation2 + $0x198] sm:$0xff]
        %v557 = vld [vmem:[#allocation2 + $0x1a0] sm:$0xff]
        %v558 = vld [vmem:[#allocation2 + $0x1a8] sm:$0x3]
        %vm607 = vcmask 1046528
        %v608 = vrot.slane %v505, 1
        %v609 = vrot.slane %v506, 1
        %v610 = vsel %vm607, %v608, %v609
        %v611 = vrot.slane %v507, 1
        %v612 = vsel %vm607, %v609, %v611
        %v613 = vrot.slane %v508, 1
        %v614 = vrot.slane %v509, 1
        %v615 = vsel %vm607, %v613, %v614
        %v616 = vrot.slane %v510, 1
        %v617 = vsel %vm607, %v614, %v616
        %v618 = vrot.slane %v511, 1
        %v619 = vrot.slane %v512, 1
        %v620 = vsel %vm607, %v618, %v619
        %v621 = vrot.slane %v513, 1
        %v622 = vsel %vm607, %v619, %v621
        %v623 = vrot.slane %v514, 1
        %v624 = vrot.slane %v515, 1
        %v625 = vsel %vm607, %v623, %v624
        %v626 = vrot.slane %v516, 1
        %v627 = vsel %vm607, %v624, %v626
        %v628 = vrot.slane %v517, 1
        %v629 = vrot.slane %v518, 1
        %v630 = vsel %vm607, %v628, %v629
        %v631 = vrot.slane %v519, 1
        %v632 = vsel %vm607, %v629, %v631
        %v633 = vrot.slane %v520, 1
        %v634 = vrot.slane %v521, 1
        %v635 = vsel %vm607, %v633, %v634
        %v636 = vrot.slane %v522, 1
        %v637 = vsel %vm607, %v634, %v636
        %v638 = vrot.slane %v523, 1
        %v639 = vrot.slane %v524, 1
        %v640 = vsel %vm607, %v638, %v639
        %v641 = vrot.slane %v525, 1
        %v642 = vsel %vm607, %v639, %v641
        %v643 = vrot.slane %v526, 1
        %v644 = vrot.slane %v527, 1
        %v645 = vsel %vm607, %v643, %v644
        %v646 = vrot.slane %v528, 1
        %v647 = vsel %vm607, %v644, %v646
        %v648 = vrot.slane %v529, 1
        %v649 = vrot.slane %v530, 1
        %v650 = vsel %vm607, %v648, %v649
        %v651 = vrot.slane %v531, 1
        %v652 = vsel %vm607, %v649, %v651
        %v653 = vrot.slane %v532, 1
        %v654 = vrot.slane %v533, 1
        %v655 = vsel %vm607, %v653, %v654
        %v656 = vrot.slane %v534, 1
        %v657 = vsel %vm607, %v654, %v656
        %v658 = vrot.slane %v535, 1
        %v659 = vrot.slane %v536, 1
        %v660 = vsel %vm607, %v658, %v659
        %v661 = vrot.slane %v537, 1
        %v662 = vsel %vm607, %v659, %v661
        %v663 = vrot.slane %v538, 1
        %v664 = vrot.slane %v539, 1
        %v665 = vsel %vm607, %v663, %v664
        %v666 = vrot.slane %v540, 1
        %v667 = vsel %vm607, %v664, %v666
        %v668 = vrot.slane %v541, 1
        %v669 = vrot.slane %v542, 1
        %v670 = vsel %vm607, %v668, %v669
        %v671 = vrot.slane %v543, 1
        %v672 = vsel %vm607, %v669, %v671
        %v673 = vrot.slane %v544, 1
        %v674 = vrot.slane %v545, 1
        %v675 = vsel %vm607, %v673, %v674
        %v676 = vrot.slane %v546, 1
        %v677 = vsel %vm607, %v674, %v676
        %v678 = vrot.slane %v547, 1
        %v679 = vrot.slane %v548, 1
        %v680 = vsel %vm607, %v678, %v679
        %v681 = vrot.slane %v549, 1
        %v682 = vsel %vm607, %v679, %v681
        %v683 = vrot.slane %v550, 1
        %v684 = vrot.slane %v551, 1
        %v685 = vsel %vm607, %v683, %v684
        %v686 = vrot.slane %v552, 1
        %v687 = vsel %vm607, %v684, %v686
        %688 = vrot.lane.b32.xlu0 %v610, 3
        %v689 = vpop.permute.xlu0 %688
        %690 = vrot.lane.b32.xlu0 %v612, 3
        %v691 = vpop.permute.xlu0 %690
        %692 = vrot.lane.b32.xlu0 %v615, 3
        %v693 = vpop.permute.xlu0 %692
        %694 = vrot.lane.b32.xlu0 %v617, 3
        %v695 = vpop.permute.xlu0 %694
        %696 = vrot.lane.b32.xlu0 %v620, 3
        %v697 = vpop.permute.xlu0 %696
        %698 = vrot.lane.b32.xlu0 %v622, 3
        %v699 = vpop.permute.xlu0 %698
        %700 = vrot.lane.b32.xlu0 %v625, 3
        %v701 = vpop.permute.xlu0 %700
        %702 = vrot.lane.b32.xlu0 %v627, 3
        %v703 = vpop.permute.xlu0 %702
        %704 = vrot.lane.b32.xlu0 %v630, 3
        %v705 = vpop.permute.xlu0 %704
        %706 = vrot.lane.b32.xlu0 %v632, 3
        %v707 = vpop.permute.xlu0 %706
        %708 = vrot.lane.b32.xlu0 %v635, 3
        %v709 = vpop.permute.xlu0 %708
        %710 = vrot.lane.b32.xlu0 %v637, 3
        %v711 = vpop.permute.xlu0 %710
        %712 = vrot.lane.b32.xlu0 %v640, 3
        %v713 = vpop.permute.xlu0 %712
        %714 = vrot.lane.b32.xlu0 %v642, 3
        %v715 = vpop.permute.xlu0 %714
        %716 = vrot.lane.b32.xlu0 %v645, 3
        %v717 = vpop.permute.xlu0 %716
        %718 = vrot.lane.b32.xlu0 %v647, 3
        %v719 = vpop.permute.xlu0 %718
        %720 = vrot.lane.b32.xlu0 %v650, 3
        %v721 = vpop.permute.xlu0 %720
        %722 = vrot.lane.b32.xlu0 %v652, 3
        %v723 = vpop.permute.xlu0 %722
        %724 = vrot.lane.b32.xlu0 %v655, 3
        %v725 = vpop.permute.xlu0 %724
        %726 = vrot.lane.b32.xlu0 %v657, 3
        %v727 = vpop.permute.xlu0 %726
        %728 = vrot.lane.b32.xlu0 %v660, 3
        %v729 = vpop.permute.xlu0 %728
        %730 = vrot.lane.b32.xlu0 %v662, 3
        %v731 = vpop.permute.xlu0 %730
        %732 = vrot.lane.b32.xlu0 %v665, 3
        %v733 = vpop.permute.xlu0 %732
        %734 = vrot.lane.b32.xlu0 %v667, 3
        %v735 = vpop.permute.xlu0 %734
        %736 = vrot.lane.b32.xlu0 %v670, 3
        %v737 = vpop.permute.xlu0 %736
        %738 = vrot.lane.b32.xlu0 %v672, 3
        %v739 = vpop.permute.xlu0 %738
        %740 = vrot.lane.b32.xlu0 %v675, 3
        %v741 = vpop.permute.xlu0 %740
        %742 = vrot.lane.b32.xlu0 %v677, 3
        %v743 = vpop.permute.xlu0 %742
        %744 = vrot.lane.b32.xlu0 %v680, 3
        %v745 = vpop.permute.xlu0 %744
        %746 = vrot.lane.b32.xlu0 %v682, 3
        %v747 = vpop.permute.xlu0 %746
        %748 = vrot.lane.b32.xlu0 %v685, 3
        %v749 = vpop.permute.xlu0 %748
        %750 = vrot.lane.b32.xlu0 %v687, 3
        %v751 = vpop.permute.xlu0 %750
        %vm784 = vcmask 1045504
        %v785 = vrot.slane %v505, 2
        %v786 = vrot.slane %v506, 2
        %v787 = vsel %vm784, %v785, %v786
        %v788 = vrot.slane %v507, 2
        %v789 = vsel %vm784, %v786, %v788
        %v790 = vrot.slane %v508, 2
        %v791 = vrot.slane %v509, 2
        %v792 = vsel %vm784, %v790, %v791
        %v793 = vrot.slane %v510, 2
        %v794 = vsel %vm784, %v791, %v793
        %v795 = vrot.slane %v511, 2
        %v796 = vrot.slane %v512, 2
        %v797 = vsel %vm784, %v795, %v796
        %v798 = vrot.slane %v513, 2
        %v799 = vsel %vm784, %v796, %v798
        %v800 = vrot.slane %v514, 2
        %v801 = vrot.slane %v515, 2
        %v802 = vsel %vm784, %v800, %v801
        %v803 = vrot.slane %v516, 2
        %v804 = vsel %vm784, %v801, %v803
        %v805 = vrot.slane %v517, 2
        %v806 = vrot.slane %v518, 2
        %v807 = vsel %vm784, %v805, %v806
        %v808 = vrot.slane %v519, 2
        %v809 = vsel %vm784, %v806, %v808
        %v810 = vrot.slane %v520, 2
        %v811 = vrot.slane %v521, 2
        %v812 = vsel %vm784, %v810, %v811
        %v813 = vrot.slane %v522, 2
        %v814 = vsel %vm784, %v811, %v813
        %v815 = vrot.slane %v523, 2
        %v816 = vrot.slane %v524, 2
        %v817 = vsel %vm784, %v815, %v816
        %v818 = vrot.slane %v525, 2
        %v819 = vsel %vm784, %v816, %v818
        %v820 = vrot.slane %v526, 2
        %v821 = vrot.slane %v527, 2
        %v822 = vsel %vm784, %v820, %v821
        %v823 = vrot.slane %v528, 2
        %v824 = vsel %vm784, %v821, %v823
        %v825 = vrot.slane %v529, 2
        %v826 = vrot.slane %v530, 2
        %v827 = vsel %vm784, %v825, %v826
        %v828 = vrot.slane %v531, 2
        %v829 = vsel %vm784, %v826, %v828
        %v830 = vrot.slane %v532, 2
        %v831 = vrot.slane %v533, 2
        %v832 = vsel %vm784, %v830, %v831
        %v833 = vrot.slane %v534, 2
        %v834 = vsel %vm784, %v831, %v833
        %v835 = vrot.slane %v535, 2
        %v836 = vrot.slane %v536, 2
        %v837 = vsel %vm784, %v835, %v836
        %v838 = vrot.slane %v537, 2
        %v839 = vsel %vm784, %v836, %v838
        %v840 = vrot.slane %v538, 2
        %v841 = vrot.slane %v539, 2
        %v842 = vsel %vm784, %v840, %v841
        %v843 = vrot.slane %v540, 2
        %v844 = vsel %vm784, %v841, %v843
        %v845 = vrot.slane %v541, 2
        %v846 = vrot.slane %v542, 2
        %v847 = vsel %vm784, %v845, %v846
        %v848 = vrot.slane %v543, 2
        %v849 = vsel %vm784, %v846, %v848
        %v850 = vrot.slane %v544, 2
        %v851 = vrot.slane %v545, 2
        %v852 = vsel %vm784, %v850, %v851
        %v853 = vrot.slane %v546, 2
        %v854 = vsel %vm784, %v851, %v853
        %v855 = vrot.slane %v547, 2
        %v856 = vrot.slane %v548, 2
        %v857 = vsel %vm784, %v855, %v856
        %v858 = vrot.slane %v549, 2
        %v859 = vsel %vm784, %v856, %v858
        %v860 = vrot.slane %v550, 2
        %v861 = vrot.slane %v551, 2
        %v862 = vsel %vm784, %v860, %v861
        %v863 = vrot.slane %v552, 2
        %v864 = vsel %vm784, %v861, %v863
        %865 = vrot.lane.b32.xlu0 %v787, 6
        %v866 = vpop.permute.xlu0 %865
        %867 = vrot.lane.b32.xlu0 %v789, 6
        %v868 = vpop.permute.xlu0 %867
        %869 = vrot.lane.b32.xlu0 %v792, 6
        %v870 = vpop.permute.xlu0 %869
        %871 = vrot.lane.b32.xlu0 %v794, 6
        %v872 = vpop.permute.xlu0 %871
        %873 = vrot.lane.b32.xlu0 %v797, 6
        %v874 = vpop.permute.xlu0 %873
        %875 = vrot.lane.b32.xlu0 %v799, 6
        %v876 = vpop.permute.xlu0 %875
        %877 = vrot.lane.b32.xlu0 %v802, 6
        %v878 = vpop.permute.xlu0 %877
        %879 = vrot.lane.b32.xlu0 %v804, 6
        %v880 = vpop.permute.xlu0 %879
        %881 = vrot.lane.b32.xlu0 %v807, 6
        %v882 = vpop.permute.xlu0 %881
        %883 = vrot.lane.b32.xlu0 %v809, 6
        %v884 = vpop.permute.xlu0 %883
        %885 = vrot.lane.b32.xlu0 %v812, 6
        %v886 = vpop.permute.xlu0 %885
        %887 = vrot.lane.b32.xlu0 %v814, 6
        %v888 = vpop.permute.xlu0 %887
        %889 = vrot.lane.b32.xlu0 %v817, 6
        %v890 = vpop.permute.xlu0 %889
        %891 = vrot.lane.b32.xlu0 %v819, 6
        %v892 = vpop.permute.xlu0 %891
        %893 = vrot.lane.b32.xlu0 %v822, 6
        %v894 = vpop.permute.xlu0 %893
        %895 = vrot.lane.b32.xlu0 %v824, 6
        %v896 = vpop.permute.xlu0 %895
        %897 = vrot.lane.b32.xlu0 %v827, 6
        %v898 = vpop.permute.xlu0 %897
        %899 = vrot.lane.b32.xlu0 %v829, 6
        %v900 = vpop.permute.xlu0 %899
        %901 = vrot.lane.b32.xlu0 %v832, 6
        %v902 = vpop.permute.xlu0 %901
        %903 = vrot.lane.b32.xlu0 %v834, 6
        %v904 = vpop.permute.xlu0 %903
        %905 = vrot.lane.b32.xlu0 %v837, 6
        %v906 = vpop.permute.xlu0 %905
        %907 = vrot.lane.b32.xlu0 %v839, 6
        %v908 = vpop.permute.xlu0 %907
        %909 = vrot.lane.b32.xlu0 %v842, 6
        %v910 = vpop.permute.xlu0 %909
        %911 = vrot.lane.b32.xlu0 %v844, 6
        %v912 = vpop.permute.xlu0 %911
        %913 = vrot.lane.b32.xlu0 %v847, 6
        %v914 = vpop.permute.xlu0 %913
        %915 = vrot.lane.b32.xlu0 %v849, 6
        %v916 = vpop.permute.xlu0 %915
        %917 = vrot.lane.b32.xlu0 %v852, 6
        %v918 = vpop.permute.xlu0 %917
        %919 = vrot.lane.b32.xlu0 %v854, 6
        %v920 = vpop.permute.xlu0 %919
        %921 = vrot.lane.b32.xlu0 %v857, 6
        %v922 = vpop.permute.xlu0 %921
        %923 = vrot.lane.b32.xlu0 %v859, 6
        %v924 = vpop.permute.xlu0 %923
        %925 = vrot.lane.b32.xlu0 %v862, 6
        %v926 = vpop.permute.xlu0 %925
        %927 = vrot.lane.b32.xlu0 %v864, 6
        %v928 = vpop.permute.xlu0 %927
        %963 = vrot.lane.b32.xlu0 %v508, 9
        %v964 = vpop.permute.xlu0 %963
        %965 = vrot.lane.b32.xlu0 %v509, 9
        %v966 = vpop.permute.xlu0 %965
        %967 = vrot.lane.b32.xlu0 %v511, 9
        %v968 = vpop.permute.xlu0 %967
        %969 = vrot.lane.b32.xlu0 %v512, 9
        %v970 = vpop.permute.xlu0 %969
        %971 = vrot.lane.b32.xlu0 %v514, 9
        %v972 = vpop.permute.xlu0 %971
        %973 = vrot.lane.b32.xlu0 %v515, 9
        %v974 = vpop.permute.xlu0 %973
        %975 = vrot.lane.b32.xlu0 %v517, 9
        %v976 = vpop.permute.xlu0 %975
        %977 = vrot.lane.b32.xlu0 %v518, 9
        %v978 = vpop.permute.xlu0 %977
        %979 = vrot.lane.b32.xlu0 %v520, 9
        %v980 = vpop.permute.xlu0 %979
        %981 = vrot.lane.b32.xlu0 %v521, 9
        %v982 = vpop.permute.xlu0 %981
        %983 = vrot.lane.b32.xlu0 %v523, 9
        %v984 = vpop.permute.xlu0 %983
        %985 = vrot.lane.b32.xlu0 %v524, 9
        %v986 = vpop.permute.xlu0 %985
        %987 = vrot.lane.b32.xlu0 %v526, 9
        %v988 = vpop.permute.xlu0 %987
        %989 = vrot.lane.b32.xlu0 %v527, 9
        %v990 = vpop.permute.xlu0 %989
        %991 = vrot.lane.b32.xlu0 %v529, 9
        %v992 = vpop.permute.xlu0 %991
        %993 = vrot.lane.b32.xlu0 %v530, 9
        %v994 = vpop.permute.xlu0 %993
        %995 = vrot.lane.b32.xlu0 %v532, 9
        %v996 = vpop.permute.xlu0 %995
        %997 = vrot.lane.b32.xlu0 %v533, 9
        %v998 = vpop.permute.xlu0 %997
        %999 = vrot.lane.b32.xlu0 %v535, 9
        %v1000 = vpop.permute.xlu0 %999
        %1001 = vrot.lane.b32.xlu0 %v536, 9
        %v1002 = vpop.permute.xlu0 %1001
        %1003 = vrot.lane.b32.xlu0 %v538, 9
        %v1004 = vpop.permute.xlu0 %1003
        %1005 = vrot.lane.b32.xlu0 %v539, 9
        %v1006 = vpop.permute.xlu0 %1005
        %1007 = vrot.lane.b32.xlu0 %v541, 9
        %v1008 = vpop.permute.xlu0 %1007
        %1009 = vrot.lane.b32.xlu0 %v542, 9
        %v1010 = vpop.permute.xlu0 %1009
        %1011 = vrot.lane.b32.xlu0 %v544, 9
        %v1012 = vpop.permute.xlu0 %1011
        %1013 = vrot.lane.b32.xlu0 %v545, 9
        %v1014 = vpop.permute.xlu0 %1013
        %1015 = vrot.lane.b32.xlu0 %v547, 9
        %v1016 = vpop.permute.xlu0 %1015
        %1017 = vrot.lane.b32.xlu0 %v548, 9
        %v1018 = vpop.permute.xlu0 %1017
        %1019 = vrot.lane.b32.xlu0 %v550, 9
        %v1020 = vpop.permute.xlu0 %1019
        %1021 = vrot.lane.b32.xlu0 %v551, 9
        %v1022 = vpop.permute.xlu0 %1021
        %1023 = vrot.lane.b32.xlu0 %v553, 9
        %v1024 = vpop.permute.xlu0 %1023
        %1025 = vrot.lane.b32.xlu0 %v554, 9
        %v1026 = vpop.permute.xlu0 %1025
        %v1060 = vrot.slane %v553, 1
        %v1061 = vrot.slane %v554, 1
        %v1062 = vsel %vm607, %v1060, %v1061
        %v1063 = vrot.slane %v555, 1
        %v1064 = vsel %vm607, %v1061, %v1063
        %1065 = vrot.lane.b32.xlu0 %v615, 12
        %v1066 = vpop.permute.xlu0 %1065
        %1067 = vrot.lane.b32.xlu0 %v617, 12
        %v1068 = vpop.permute.xlu0 %1067
        %1069 = vrot.lane.b32.xlu0 %v620, 12
        %v1070 = vpop.permute.xlu0 %1069
        %1071 = vrot.lane.b32.xlu0 %v622, 12
        %v1072 = vpop.permute.xlu0 %1071
        %1073 = vrot.lane.b32.xlu0 %v625, 12
        %v1074 = vpop.permute.xlu0 %1073
        %1075 = vrot.lane.b32.xlu0 %v627, 12
        %v1076 = vpop.permute.xlu0 %1075
        %1077 = vrot.lane.b32.xlu0 %v630, 12
        %v1078 = vpop.permute.xlu0 %1077
        %1079 = vrot.lane.b32.xlu0 %v632, 12
        %v1080 = vpop.permute.xlu0 %1079
        %1081 = vrot.lane.b32.xlu0 %v635, 12
        %v1082 = vpop.permute.xlu0 %1081
        %1083 = vrot.lane.b32.xlu0 %v637, 12
        %v1084 = vpop.permute.xlu0 %1083
        %1085 = vrot.lane.b32.xlu0 %v640, 12
        %v1086 = vpop.permute.xlu0 %1085
        %1087 = vrot.lane.b32.xlu0 %v642, 12
        %v1088 = vpop.permute.xlu0 %1087
        %1089 = vrot.lane.b32.xlu0 %v645, 12
        %v1090 = vpop.permute.xlu0 %1089
        %1091 = vrot.lane.b32.xlu0 %v647, 12
        %v1092 = vpop.permute.xlu0 %1091
        %1093 = vrot.lane.b32.xlu0 %v650, 12
        %v1094 = vpop.permute.xlu0 %1093
        %1095 = vrot.lane.b32.xlu0 %v652, 12
        %v1096 = vpop.permute.xlu0 %1095
        %1097 = vrot.lane.b32.xlu0 %v655, 12
        %v1098 = vpop.permute.xlu0 %1097
        %1099 = vrot.lane.b32.xlu0 %v657, 12
        %v1100 = vpop.permute.xlu0 %1099
        %1101 = vrot.lane.b32.xlu0 %v660, 12
        %v1102 = vpop.permute.xlu0 %1101
        %1103 = vrot.lane.b32.xlu0 %v662, 12
        %v1104 = vpop.permute.xlu0 %1103
        %1105 = vrot.lane.b32.xlu0 %v665, 12
        %v1106 = vpop.permute.xlu0 %1105
        %1107 = vrot.lane.b32.xlu0 %v667, 12
        %v1108 = vpop.permute.xlu0 %1107
        %1109 = vrot.lane.b32.xlu0 %v670, 12
        %v1110 = vpop.permute.xlu0 %1109
        %1111 = vrot.lane.b32.xlu0 %v672, 12
        %v1112 = vpop.permute.xlu0 %1111
        %1113 = vrot.lane.b32.xlu0 %v675, 12
        %v1114 = vpop.permute.xlu0 %1113
        %1115 = vrot.lane.b32.xlu0 %v677, 12
        %v1116 = vpop.permute.xlu0 %1115
        %1117 = vrot.lane.b32.xlu0 %v680, 12
        %v1118 = vpop.permute.xlu0 %1117
        %1119 = vrot.lane.b32.xlu0 %v682, 12
        %v1120 = vpop.permute.xlu0 %1119
        %1121 = vrot.lane.b32.xlu0 %v685, 12
        %v1122 = vpop.permute.xlu0 %1121
        %1123 = vrot.lane.b32.xlu0 %v687, 12
        %v1124 = vpop.permute.xlu0 %1123
        %1125 = vrot.lane.b32.xlu0 %v1062, 12
        %v1126 = vpop.permute.xlu0 %1125
        %1127 = vrot.lane.b32.xlu0 %v1064, 12
        %v1128 = vpop.permute.xlu0 %1127
        %v1161 = vrot.slane %v553, 2
        %v1162 = vrot.slane %v554, 2
        %v1163 = vsel %vm784, %v1161, %v1162
        %v1164 = vrot.slane %v555, 2
        %v1165 = vsel %vm784, %v1162, %v1164
        %1166 = vrot.lane.b32.xlu0 %v792, 15
        %v1167 = vpop.permute.xlu0 %1166
        %1168 = vrot.lane.b32.xlu0 %v794, 15
        %v1169 = vpop.permute.xlu0 %1168
        %1170 = vrot.lane.b32.xlu0 %v797, 15
        %v1171 = vpop.permute.xlu0 %1170
        %1172 = vrot.lane.b32.xlu0 %v799, 15
        %v1173 = vpop.permute.xlu0 %1172
        %1174 = vrot.lane.b32.xlu0 %v802, 15
        %v1175 = vpop.permute.xlu0 %1174
        %1176 = vrot.lane.b32.xlu0 %v804, 15
        %v1177 = vpop.permute.xlu0 %1176
        %1178 = vrot.lane.b32.xlu0 %v807, 15
        %v1179 = vpop.permute.xlu0 %1178
        %1180 = vrot.lane.b32.xlu0 %v809, 15
        %v1181 = vpop.permute.xlu0 %1180
        %1182 = vrot.lane.b32.xlu0 %v812, 15
        %v1183 = vpop.permute.xlu0 %1182
        %1184 = vrot.lane.b32.xlu0 %v814, 15
        %v1185 = vpop.permute.xlu0 %1184
        %1186 = vrot.lane.b32.xlu0 %v817, 15
        %v1187 = vpop.permute.xlu0 %1186
        %1188 = vrot.lane.b32.xlu0 %v819, 15
        %v1189 = vpop.permute.xlu0 %1188
        %1190 = vrot.lane.b32.xlu0 %v822, 15
        %v1191 = vpop.permute.xlu0 %1190
        %1192 = vrot.lane.b32.xlu0 %v824, 15
        %v1193 = vpop.permute.xlu0 %1192
        %1194 = vrot.lane.b32.xlu0 %v827, 15
        %v1195 = vpop.permute.xlu0 %1194
        %1196 = vrot.lane.b32.xlu0 %v829, 15
        %v1197 = vpop.permute.xlu0 %1196
        %1198 = vrot.lane.b32.xlu0 %v832, 15
        %v1199 = vpop.permute.xlu0 %1198
        %1200 = vrot.lane.b32.xlu0 %v834, 15
        %v1201 = vpop.permute.xlu0 %1200
        %1202 = vrot.lane.b32.xlu0 %v837, 15
        %v1203 = vpop.permute.xlu0 %1202
        %1204 = vrot.lane.b32.xlu0 %v839, 15
        %v1205 = vpop.permute.xlu0 %1204
        %1206 = vrot.lane.b32.xlu0 %v842, 15
        %v1207 = vpop.permute.xlu0 %1206
        %1208 = vrot.lane.b32.xlu0 %v844, 15
        %v1209 = vpop.permute.xlu0 %1208
        %1210 = vrot.lane.b32.xlu0 %v847, 15
        %v1211 = vpop.permute.xlu0 %1210
        %1212 = vrot.lane.b32.xlu0 %v849, 15
        %v1213 = vpop.permute.xlu0 %1212
        %1214 = vrot.lane.b32.xlu0 %v852, 15
        %v1215 = vpop.permute.xlu0 %1214
        %1216 = vrot.lane.b32.xlu0 %v854, 15
        %v1217 = vpop.permute.xlu0 %1216
        %1218 = vrot.lane.b32.xlu0 %v857, 15
        %v1219 = vpop.permute.xlu0 %1218
        %1220 = vrot.lane.b32.xlu0 %v859, 15
        %v1221 = vpop.permute.xlu0 %1220
        %1222 = vrot.lane.b32.xlu0 %v862, 15
        %v1223 = vpop.permute.xlu0 %1222
        %1224 = vrot.lane.b32.xlu0 %v864, 15
        %v1225 = vpop.permute.xlu0 %1224
        %1226 = vrot.lane.b32.xlu0 %v1163, 15
        %v1227 = vpop.permute.xlu0 %1226
        %1228 = vrot.lane.b32.xlu0 %v1165, 15
        %v1229 = vpop.permute.xlu0 %1228
        %1264 = vrot.lane.b32.xlu0 %v511, 18
        %v1265 = vpop.permute.xlu0 %1264
        %1266 = vrot.lane.b32.xlu0 %v512, 18
        %v1267 = vpop.permute.xlu0 %1266
        %1268 = vrot.lane.b32.xlu0 %v514, 18
        %v1269 = vpop.permute.xlu0 %1268
        %1270 = vrot.lane.b32.xlu0 %v515, 18
        %v1271 = vpop.permute.xlu0 %1270
        %1272 = vrot.lane.b32.xlu0 %v517, 18
        %v1273 = vpop.permute.xlu0 %1272
        %1274 = vrot.lane.b32.xlu0 %v518, 18
        %v1275 = vpop.permute.xlu0 %1274
        %1276 = vrot.lane.b32.xlu0 %v520, 18
        %v1277 = vpop.permute.xlu0 %1276
        %1278 = vrot.lane.b32.xlu0 %v521, 18
        %v1279 = vpop.permute.xlu0 %1278
        %1280 = vrot.lane.b32.xlu0 %v523, 18
        %v1281 = vpop.permute.xlu0 %1280
        %1282 = vrot.lane.b32.xlu0 %v524, 18
        %v1283 = vpop.permute.xlu0 %1282
        %1284 = vrot.lane.b32.xlu0 %v526, 18
        %v1285 = vpop.permute.xlu0 %1284
        %1286 = vrot.lane.b32.xlu0 %v527, 18
        %v1287 = vpop.permute.xlu0 %1286
        %1288 = vrot.lane.b32.xlu0 %v529, 18
        %v1289 = vpop.permute.xlu0 %1288
        %1290 = vrot.lane.b32.xlu0 %v530, 18
        %v1291 = vpop.permute.xlu0 %1290
        %1292 = vrot.lane.b32.xlu0 %v532, 18
        %v1293 = vpop.permute.xlu0 %1292
        %1294 = vrot.lane.b32.xlu0 %v533, 18
        %v1295 = vpop.permute.xlu0 %1294
        %1296 = vrot.lane.b32.xlu0 %v535, 18
        %v1297 = vpop.permute.xlu0 %1296
        %1298 = vrot.lane.b32.xlu0 %v536, 18
        %v1299 = vpop.permute.xlu0 %1298
        %1300 = vrot.lane.b32.xlu0 %v538, 18
        %v1301 = vpop.permute.xlu0 %1300
        %1302 = vrot.lane.b32.xlu0 %v539, 18
        %v1303 = vpop.permute.xlu0 %1302
        %1304 = vrot.lane.b32.xlu0 %v541, 18
        %v1305 = vpop.permute.xlu0 %1304
        %1306 = vrot.lane.b32.xlu0 %v542, 18
        %v1307 = vpop.permute.xlu0 %1306
        %1308 = vrot.lane.b32.xlu0 %v544, 18
        %v1309 = vpop.permute.xlu0 %1308
        %1310 = vrot.lane.b32.xlu0 %v545, 18
        %v1311 = vpop.permute.xlu0 %1310
        %1312 = vrot.lane.b32.xlu0 %v547, 18
        %v1313 = vpop.permute.xlu0 %1312
        %1314 = vrot.lane.b32.xlu0 %v548, 18
        %v1315 = vpop.permute.xlu0 %1314
        %1316 = vrot.lane.b32.xlu0 %v550, 18
        %v1317 = vpop.permute.xlu0 %1316
        %1318 = vrot.lane.b32.xlu0 %v551, 18
        %v1319 = vpop.permute.xlu0 %1318
        %1320 = vrot.lane.b32.xlu0 %v553, 18
        %v1321 = vpop.permute.xlu0 %1320
        %1322 = vrot.lane.b32.xlu0 %v554, 18
        %v1323 = vpop.permute.xlu0 %1322
        %1324 = vrot.lane.b32.xlu0 %v556, 18
        %v1325 = vpop.permute.xlu0 %1324
        %1326 = vrot.lane.b32.xlu0 %v557, 18
        %v1327 = vpop.permute.xlu0 %1326
        %v1361 = vrot.slane %v556, 1
        %v1362 = vrot.slane %v557, 1
        %v1363 = vsel %vm607, %v1361, %v1362
        %v1364 = vrot.slane %v558, 1
        %v1365 = vsel %vm607, %v1362, %v1364
        %1366 = vrot.lane.b32.xlu0 %v620, 21
        %v1367 = vpop.permute.xlu0 %1366
        %1368 = vrot.lane.b32.xlu0 %v622, 21
        %v1369 = vpop.permute.xlu0 %1368
        %1370 = vrot.lane.b32.xlu0 %v625, 21
        %v1371 = vpop.permute.xlu0 %1370
        %1372 = vrot.lane.b32.xlu0 %v627, 21
        %v1373 = vpop.permute.xlu0 %1372
        %1374 = vrot.lane.b32.xlu0 %v630, 21
        %v1375 = vpop.permute.xlu0 %1374
        %1376 = vrot.lane.b32.xlu0 %v632, 21
        %v1377 = vpop.permute.xlu0 %1376
        %1378 = vrot.lane.b32.xlu0 %v635, 21
        %v1379 = vpop.permute.xlu0 %1378
        %1380 = vrot.lane.b32.xlu0 %v637, 21
        %v1381 = vpop.permute.xlu0 %1380
        %1382 = vrot.lane.b32.xlu0 %v640, 21
        %v1383 = vpop.permute.xlu0 %1382
        %1384 = vrot.lane.b32.xlu0 %v642, 21
        %v1385 = vpop.permute.xlu0 %1384
        %1386 = vrot.lane.b32.xlu0 %v645, 21
        %v1387 = vpop.permute.xlu0 %1386
        %1388 = vrot.lane.b32.xlu0 %v647, 21
        %v1389 = vpop.permute.xlu0 %1388
        %1390 = vrot.lane.b32.xlu0 %v650, 21
        %v1391 = vpop.permute.xlu0 %1390
        %1392 = vrot.lane.b32.xlu0 %v652, 21
        %v1393 = vpop.permute.xlu0 %1392
        %1394 = vrot.lane.b32.xlu0 %v655, 21
        %v1395 = vpop.permute.xlu0 %1394
        %1396 = vrot.lane.b32.xlu0 %v657, 21
        %v1397 = vpop.permute.xlu0 %1396
        %1398 = vrot.lane.b32.xlu0 %v660, 21
        %v1399 = vpop.permute.xlu0 %1398
        %1400 = vrot.lane.b32.xlu0 %v662, 21
        %v1401 = vpop.permute.xlu0 %1400
        %1402 = vrot.lane.b32.xlu0 %v665, 21
        %v1403 = vpop.permute.xlu0 %1402
        %1404 = vrot.lane.b32.xlu0 %v667, 21
        %v1405 = vpop.permute.xlu0 %1404
        %1406 = vrot.lane.b32.xlu0 %v670, 21
        %v1407 = vpop.permute.xlu0 %1406
        %1408 = vrot.lane.b32.xlu0 %v672, 21
        %v1409 = vpop.permute.xlu0 %1408
        %1410 = vrot.lane.b32.xlu0 %v675, 21
        %v1411 = vpop.permute.xlu0 %1410
        %1412 = vrot.lane.b32.xlu0 %v677, 21
        %v1413 = vpop.permute.xlu0 %1412
        %1414 = vrot.lane.b32.xlu0 %v680, 21
        %v1415 = vpop.permute.xlu0 %1414
        %1416 = vrot.lane.b32.xlu0 %v682, 21
        %v1417 = vpop.permute.xlu0 %1416
        %1418 = vrot.lane.b32.xlu0 %v685, 21
        %v1419 = vpop.permute.xlu0 %1418
        %1420 = vrot.lane.b32.xlu0 %v687, 21
        %v1421 = vpop.permute.xlu0 %1420
        %1422 = vrot.lane.b32.xlu0 %v1062, 21
        %v1423 = vpop.permute.xlu0 %1422
        %1424 = vrot.lane.b32.xlu0 %v1064, 21
        %v1425 = vpop.permute.xlu0 %1424
        %1426 = vrot.lane.b32.xlu0 %v1363, 21
        %v1427 = vpop.permute.xlu0 %1426
        %1428 = vrot.lane.b32.xlu0 %v1365, 21
        %v1429 = vpop.permute.xlu0 %1428
        %v1462 = vrot.slane %v556, 2
        %v1463 = vrot.slane %v557, 2
        %v1464 = vsel %vm784, %v1462, %v1463
        %v1465 = vrot.slane %v558, 2
        %v1466 = vsel %vm784, %v1463, %v1465
        %1467 = vrot.lane.b32.xlu0 %v797, 24
        %v1468 = vpop.permute.xlu0 %1467
        %1469 = vrot.lane.b32.xlu0 %v799, 24
        %v1470 = vpop.permute.xlu0 %1469
        %1471 = vrot.lane.b32.xlu0 %v802, 24
        %v1472 = vpop.permute.xlu0 %1471
        %1473 = vrot.lane.b32.xlu0 %v804, 24
        %v1474 = vpop.permute.xlu0 %1473
        %1475 = vrot.lane.b32.xlu0 %v807, 24
        %v1476 = vpop.permute.xlu0 %1475
        %1477 = vrot.lane.b32.xlu0 %v809, 24
        %v1478 = vpop.permute.xlu0 %1477
        %1479 = vrot.lane.b32.xlu0 %v812, 24
        %v1480 = vpop.permute.xlu0 %1479
        %1481 = vrot.lane.b32.xlu0 %v814, 24
        %v1482 = vpop.permute.xlu0 %1481
        %1483 = vrot.lane.b32.xlu0 %v817, 24
        %v1484 = vpop.permute.xlu0 %1483
        %1485 = vrot.lane.b32.xlu0 %v819, 24
        %v1486 = vpop.permute.xlu0 %1485
        %1487 = vrot.lane.b32.xlu0 %v822, 24
        %v1488 = vpop.permute.xlu0 %1487
        %1489 = vrot.lane.b32.xlu0 %v824, 24
        %v1490 = vpop.permute.xlu0 %1489
        %1491 = vrot.lane.b32.xlu0 %v827, 24
        %v1492 = vpop.permute.xlu0 %1491
        %1493 = vrot.lane.b32.xlu0 %v829, 24
        %v1494 = vpop.permute.xlu0 %1493
        %1495 = vrot.lane.b32.xlu0 %v832, 24
        %v1496 = vpop.permute.xlu0 %1495
        %1497 = vrot.lane.b32.xlu0 %v834, 24
        %v1498 = vpop.permute.xlu0 %1497
        %1499 = vrot.lane.b32.xlu0 %v837, 24
        %v1500 = vpop.permute.xlu0 %1499
        %1501 = vrot.lane.b32.xlu0 %v839, 24
        %v1502 = vpop.permute.xlu0 %1501
        %1503 = vrot.lane.b32.xlu0 %v842, 24
        %v1504 = vpop.permute.xlu0 %1503
        %1505 = vrot.lane.b32.xlu0 %v844, 24
        %v1506 = vpop.permute.xlu0 %1505
        %1507 = vrot.lane.b32.xlu0 %v847, 24
        %v1508 = vpop.permute.xlu0 %1507
        %1509 = vrot.lane.b32.xlu0 %v849, 24
        %v1510 = vpop.permute.xlu0 %1509
        %1511 = vrot.lane.b32.xlu0 %v852, 24
        %v1512 = vpop.permute.xlu0 %1511
        %1513 = vrot.lane.b32.xlu0 %v854, 24
        %v1514 = vpop.permute.xlu0 %1513
        %1515 = vrot.lane.b32.xlu0 %v857, 24
        %v1516 = vpop.permute.xlu0 %1515
        %1517 = vrot.lane.b32.xlu0 %v859, 24
        %v1518 = vpop.permute.xlu0 %1517
        %1519 = vrot.lane.b32.xlu0 %v862, 24
        %v1520 = vpop.permute.xlu0 %1519
        %1521 = vrot.lane.b32.xlu0 %v864, 24
        %v1522 = vpop.permute.xlu0 %1521
        %1523 = vrot.lane.b32.xlu0 %v1163, 24
        %v1524 = vpop.permute.xlu0 %1523
        %1525 = vrot.lane.b32.xlu0 %v1165, 24
        %v1526 = vpop.permute.xlu0 %1525
        %1527 = vrot.lane.b32.xlu0 %v1464, 24
        %v1528 = vpop.permute.xlu0 %1527
        %1529 = vrot.lane.b32.xlu0 %v1466, 24
        %v1530 = vpop.permute.xlu0 %1529
        %v1563 = vsel %vm384, %v505, %v689
        %v1564 = vsel %vm384, %v506, %v691
        %v1565 = vsel %vm384, %v508, %v693
        %v1566 = vsel %vm384, %v509, %v695
        %v1567 = vsel %vm384, %v511, %v697
        %v1568 = vsel %vm384, %v512, %v699
        %v1569 = vsel %vm384, %v514, %v701
        %v1570 = vsel %vm384, %v515, %v703
        %v1571 = vsel %vm384, %v517, %v705
        %v1572 = vsel %vm384, %v518, %v707
        %v1573 = vsel %vm384, %v520, %v709
        %v1574 = vsel %vm384, %v521, %v711
        %v1575 = vsel %vm384, %v523, %v713
        %v1576 = vsel %vm384, %v524, %v715
        %v1577 = vsel %vm384, %v526, %v717
        %v1578 = vsel %vm384, %v527, %v719
        %v1579 = vsel %vm384, %v529, %v721
        %v1580 = vsel %vm384, %v530, %v723
        %v1581 = vsel %vm384, %v532, %v725
        %v1582 = vsel %vm384, %v533, %v727
        %v1583 = vsel %vm384, %v535, %v729
        %v1584 = vsel %vm384, %v536, %v731
        %v1585 = vsel %vm384, %v538, %v733
        %v1586 = vsel %vm384, %v539, %v735
        %v1587 = vsel %vm384, %v541, %v737
        %v1588 = vsel %vm384, %v542, %v739
        %v1589 = vsel %vm384, %v544, %v741
        %v1590 = vsel %vm384, %v545, %v743
        %v1591 = vsel %vm384, %v547, %v745
        %v1592 = vsel %vm384, %v548, %v747
        %v1593 = vsel %vm384, %v550, %v749
        %v1594 = vsel %vm384, %v551, %v751
        %vm1595 = vcmask 48128
        %v1596 = vsel %vm1595, %v1563, %v866
        %v1597 = vsel %vm1595, %v1564, %v868
        %v1598 = vsel %vm1595, %v1565, %v870
        %v1599 = vsel %vm1595, %v1566, %v872
        %v1600 = vsel %vm1595, %v1567, %v874
        %v1601 = vsel %vm1595, %v1568, %v876
        %v1602 = vsel %vm1595, %v1569, %v878
        %v1603 = vsel %vm1595, %v1570, %v880
        %v1604 = vsel %vm1595, %v1571, %v882
        %v1605 = vsel %vm1595, %v1572, %v884
        %v1606 = vsel %vm1595, %v1573, %v886
        %v1607 = vsel %vm1595, %v1574, %v888
        %v1608 = vsel %vm1595, %v1575, %v890
        %v1609 = vsel %vm1595, %v1576, %v892
        %v1610 = vsel %vm1595, %v1577, %v894
        %v1611 = vsel %vm1595, %v1578, %v896
        %v1612 = vsel %vm1595, %v1579, %v898
        %v1613 = vsel %vm1595, %v1580, %v900
        %v1614 = vsel %vm1595, %v1581, %v902
        %v1615 = vsel %vm1595, %v1582, %v904
        %v1616 = vsel %vm1595, %v1583, %v906
        %v1617 = vsel %vm1595, %v1584, %v908
        %v1618 = vsel %vm1595, %v1585, %v910
        %v1619 = vsel %vm1595, %v1586, %v912
        %v1620 = vsel %vm1595, %v1587, %v914
        %v1621 = vsel %vm1595, %v1588, %v916
        %v1622 = vsel %vm1595, %v1589, %v918
        %v1623 = vsel %vm1595, %v1590, %v920
        %v1624 = vsel %vm1595, %v1591, %v922
        %v1625 = vsel %vm1595, %v1592, %v924
        %v1626 = vsel %vm1595, %v1593, %v926
        %v1627 = vsel %vm1595, %v1594, %v928
        %vm1628 = vcmask 72704
        %v1629 = vsel %vm1628, %v1596, %v964
        %v1630 = vsel %vm1628, %v1597, %v966
        %v1631 = vsel %vm1628, %v1598, %v968
        %v1632 = vsel %vm1628, %v1599, %v970
        %v1633 = vsel %vm1628, %v1600, %v972
        %v1634 = vsel %vm1628, %v1601, %v974
        %v1635 = vsel %vm1628, %v1602, %v976
        %v1636 = vsel %vm1628, %v1603, %v978
        %v1637 = vsel %vm1628, %v1604, %v980
        %v1638 = vsel %vm1628, %v1605, %v982
        %v1639 = vsel %vm1628, %v1606, %v984
        %v1640 = vsel %vm1628, %v1607, %v986
        %v1641 = vsel %vm1628, %v1608, %v988
        %v1642 = vsel %vm1628, %v1609, %v990
        %v1643 = vsel %vm1628, %v1610, %v992
        %v1644 = vsel %vm1628, %v1611, %v994
        %v1645 = vsel %vm1628, %v1612, %v996
        %v1646 = vsel %vm1628, %v1613, %v998
        %v1647 = vsel %vm1628, %v1614, %v1000
        %v1648 = vsel %vm1628, %v1615, %v1002
        %v1649 = vsel %vm1628, %v1616, %v1004
        %v1650 = vsel %vm1628, %v1617, %v1006
        %v1651 = vsel %vm1628, %v1618, %v1008
        %v1652 = vsel %vm1628, %v1619, %v1010
        %v1653 = vsel %vm1628, %v1620, %v1012
        %v1654 = vsel %vm1628, %v1621, %v1014
        %v1655 = vsel %vm1628, %v1622, %v1016
        %v1656 = vsel %vm1628, %v1623, %v1018
        %v1657 = vsel %vm1628, %v1624, %v1020
        %v1658 = vsel %vm1628, %v1625, %v1022
        %v1659 = vsel %vm1628, %v1626, %v1024
        %v1660 = vsel %vm1628, %v1627, %v1026
        %vm1661 = vcmask 97280
        %v1662 = vsel %vm1661, %v1629, %v1066
        %v1663 = vsel %vm1661, %v1630, %v1068
        %v1664 = vsel %vm1661, %v1631, %v1070
        %v1665 = vsel %vm1661, %v1632, %v1072
        %v1666 = vsel %vm1661, %v1633, %v1074
        %v1667 = vsel %vm1661, %v1634, %v1076
        %v1668 = vsel %vm1661, %v1635, %v1078
        %v1669 = vsel %vm1661, %v1636, %v1080
        %v1670 = vsel %vm1661, %v1637, %v1082
        %v1671 = vsel %vm1661, %v1638, %v1084
        %v1672 = vsel %vm1661, %v1639, %v1086
        %v1673 = vsel %vm1661, %v1640, %v1088
        %v1674 = vsel %vm1661, %v1641, %v1090
        %v1675 = vsel %vm1661, %v1642, %v1092
        %v1676 = vsel %vm1661, %v1643, %v1094
        %v1677 = vsel %vm1661, %v1644, %v1096
        %v1678 = vsel %vm1661, %v1645, %v1098
        %v1679 = vsel %vm1661, %v1646, %v1100
        %v1680 = vsel %vm1661, %v1647, %v1102
        %v1681 = vsel %vm1661, %v1648, %v1104
        %v1682 = vsel %vm1661, %v1649, %v1106
        %v1683 = vsel %vm1661, %v1650, %v1108
        %v1684 = vsel %vm1661, %v1651, %v1110
        %v1685 = vsel %vm1661, %v1652, %v1112
        %v1686 = vsel %vm1661, %v1653, %v1114
        %v1687 = vsel %vm1661, %v1654, %v1116
        %v1688 = vsel %vm1661, %v1655, %v1118
        %v1689 = vsel %vm1661, %v1656, %v1120
        %v1690 = vsel %vm1661, %v1657, %v1122
        %v1691 = vsel %vm1661, %v1658, %v1124
        %v1692 = vsel %vm1661, %v1659, %v1126
        %v1693 = vsel %vm1661, %v1660, %v1128
        %vm1694 = vcmask 121856
        %v1695 = vsel %vm1694, %v1662, %v1167
        %v1696 = vsel %vm1694, %v1663, %v1169
        %v1697 = vsel %vm1694, %v1664, %v1171
        %v1698 = vsel %vm1694, %v1665, %v1173
        %v1699 = vsel %vm1694, %v1666, %v1175
        %v1700 = vsel %vm1694, %v1667, %v1177
        %v1701 = vsel %vm1694, %v1668, %v1179
        %v1702 = vsel %vm1694, %v1669, %v1181
        %v1703 = vsel %vm1694, %v1670, %v1183
        %v1704 = vsel %vm1694, %v1671, %v1185
        %v1705 = vsel %vm1694, %v1672, %v1187
        %v1706 = vsel %vm1694, %v1673, %v1189
        %v1707 = vsel %vm1694, %v1674, %v1191
        %v1708 = vsel %vm1694, %v1675, %v1193
        %v1709 = vsel %vm1694, %v1676, %v1195
        %v1710 = vsel %vm1694, %v1677, %v1197
        %v1711 = vsel %vm1694, %v1678, %v1199
        %v1712 = vsel %vm1694, %v1679, %v1201
        %v1713 = vsel %vm1694, %v1680, %v1203
        %v1714 = vsel %vm1694, %v1681, %v1205
        %v1715 = vsel %vm1694, %v1682, %v1207
        %v1716 = vsel %vm1694, %v1683, %v1209
        %v1717 = vsel %vm1694, %v1684, %v1211
        %v1718 = vsel %vm1694, %v1685, %v1213
        %v1719 = vsel %vm1694, %v1686, %v1215
        %v1720 = vsel %vm1694, %v1687, %v1217
        %v1721 = vsel %vm1694, %v1688, %v1219
        %v1722 = vsel %vm1694, %v1689, %v1221
        %v1723 = vsel %vm1694, %v1690, %v1223
        %v1724 = vsel %vm1694, %v1691, %v1225
        %v1725 = vsel %vm1694, %v1692, %v1227
        %v1726 = vsel %vm1694, %v1693, %v1229
        %vm1727 = vcmask 146432
        %v1728 = vsel %vm1727, %v1695, %v1265
        %v1729 = vsel %vm1727, %v1696, %v1267
        %v1730 = vsel %vm1727, %v1697, %v1269
        %v1731 = vsel %vm1727, %v1698, %v1271
        %v1732 = vsel %vm1727, %v1699, %v1273
        %v1733 = vsel %vm1727, %v1700, %v1275
        %v1734 = vsel %vm1727, %v1701, %v1277
        %v1735 = vsel %vm1727, %v1702, %v1279
        %v1736 = vsel %vm1727, %v1703, %v1281
        %v1737 = vsel %vm1727, %v1704, %v1283
        %v1738 = vsel %vm1727, %v1705, %v1285
        %v1739 = vsel %vm1727, %v1706, %v1287
        %v1740 = vsel %vm1727, %v1707, %v1289
        %v1741 = vsel %vm1727, %v1708, %v1291
        %v1742 = vsel %vm1727, %v1709, %v1293
        %v1743 = vsel %vm1727, %v1710, %v1295
        %v1744 = vsel %vm1727, %v1711, %v1297
        %v1745 = vsel %vm1727, %v1712, %v1299
        %v1746 = vsel %vm1727, %v1713, %v1301
        %v1747 = vsel %vm1727, %v1714, %v1303
        %v1748 = vsel %vm1727, %v1715, %v1305
        %v1749 = vsel %vm1727, %v1716, %v1307
        %v1750 = vsel %vm1727, %v1717, %v1309
        %v1751 = vsel %vm1727, %v1718, %v1311
        %v1752 = vsel %vm1727, %v1719, %v1313
        %v1753 = vsel %vm1727, %v1720, %v1315
        %v1754 = vsel %vm1727, %v1721, %v1317
        %v1755 = vsel %vm1727, %v1722, %v1319
        %v1756 = vsel %vm1727, %v1723, %v1321
        %v1757 = vsel %vm1727, %v1724, %v1323
        %v1758 = vsel %vm1727, %v1725, %v1325
        %v1759 = vsel %vm1727, %v1726, %v1327
        %vm1760 = vcmask 171008
        %v1761 = vsel %vm1760, %v1728, %v1367
        %v1762 = vsel %vm1760, %v1729, %v1369
        %v1763 = vsel %vm1760, %v1730, %v1371
        %v1764 = vsel %vm1760, %v1731, %v1373
        %v1765 = vsel %vm1760, %v1732, %v1375
        %v1766 = vsel %vm1760, %v1733, %v1377
        %v1767 = vsel %vm1760, %v1734, %v1379
        %v1768 = vsel %vm1760, %v1735, %v1381
        %v1769 = vsel %vm1760, %v1736, %v1383
        %v1770 = vsel %vm1760, %v1737, %v1385
        %v1771 = vsel %vm1760, %v1738, %v1387
        %v1772 = vsel %vm1760, %v1739, %v1389
        %v1773 = vsel %vm1760, %v1740, %v1391
        %v1774 = vsel %vm1760, %v1741, %v1393
        %v1775 = vsel %vm1760, %v1742, %v1395
        %v1776 = vsel %vm1760, %v1743, %v1397
        %v1777 = vsel %vm1760, %v1744, %v1399
        %v1778 = vsel %vm1760, %v1745, %v1401
        %v1779 = vsel %vm1760, %v1746, %v1403
        %v1780 = vsel %vm1760, %v1747, %v1405
        %v1781 = vsel %vm1760, %v1748, %v1407
        %v1782 = vsel %vm1760, %v1749, %v1409
        %v1783 = vsel %vm1760, %v1750, %v1411
        %v1784 = vsel %vm1760, %v1751, %v1413
        %v1785 = vsel %vm1760, %v1752, %v1415
        %v1786 = vsel %vm1760, %v1753, %v1417
        %v1787 = vsel %vm1760, %v1754, %v1419
        %v1788 = vsel %vm1760, %v1755, %v1421
        %v1789 = vsel %vm1760, %v1756, %v1423
        %v1790 = vsel %vm1760, %v1757, %v1425
        %v1791 = vsel %vm1760, %v1758, %v1427
        %v1792 = vsel %vm1760, %v1759, %v1429
        %vm1793 = vcmask 195584
        %v1794 = vsel %vm1793, %v1761, %v1468
        %v1795 = vsel %vm1793, %v1762, %v1470
        %v1796 = vsel %vm1793, %v1763, %v1472
        %v1797 = vsel %vm1793, %v1764, %v1474
        %v1798 = vsel %vm1793, %v1765, %v1476
        %v1799 = vsel %vm1793, %v1766, %v1478
        %v1800 = vsel %vm1793, %v1767, %v1480
        %v1801 = vsel %vm1793, %v1768, %v1482
        %v1802 = vsel %vm1793, %v1769, %v1484
        %v1803 = vsel %vm1793, %v1770, %v1486
        %v1804 = vsel %vm1793, %v1771, %v1488
        %v1805 = vsel %vm1793, %v1772, %v1490
        %v1806 = vsel %vm1793, %v1773, %v1492
        %v1807 = vsel %vm1793, %v1774, %v1494
        %v1808 = vsel %vm1793, %v1775, %v1496
        %v1809 = vsel %vm1793, %v1776, %v1498
        %v1810 = vsel %vm1793, %v1777, %v1500
        %v1811 = vsel %vm1793, %v1778, %v1502
        %v1812 = vsel %vm1793, %v1779, %v1504
        %v1813 = vsel %vm1793, %v1780, %v1506
        %v1814 = vsel %vm1793, %v1781, %v1508
        %v1815 = vsel %vm1793, %v1782, %v1510
        %v1816 = vsel %vm1793, %v1783, %v1512
        %v1817 = vsel %vm1793, %v1784, %v1514
        %v1818 = vsel %vm1793, %v1785, %v1516
        %v1819 = vsel %vm1793, %v1786, %v1518
        %v1820 = vsel %vm1793, %v1787, %v1520
        %v1821 = vsel %vm1793, %v1788, %v1522
        %v1822 = vsel %vm1793, %v1789, %v1524
        %v1823 = vsel %vm1793, %v1790, %v1526
        %v1824 = vsel %vm1793, %v1791, %v1528
        %v1825 = vsel %vm1793, %v1792, %v1530
        %v1826 = vld [vmem:[%s1] sm:$0xff]
        %v1827 = vld [vmem:[%s1 + $0x8] sm:$0xff]
        %v1828 = vld [vmem:[%s1 + $0x10] sm:$0xff]
        %v1829 = vld [vmem:[%s1 + $0x18] sm:$0x7]
        %v1830 = vld [vmem:[%s2] sm:$0x1]
        %v1832 = vperm.slane %v1830, 0
        %vm1834 = vcmask 220160
        %v1836 = vsel %vm1834, %v1794, 0
        %v1839 = vsel %vm1834, %v1795, 0
        %v1842 = vsel %vm1834, %v1796, 0
        %v1845 = vsel %vm1834, %v1797, 0
        %v1848 = vsel %vm1834, %v1798, 0
        %v1851 = vsel %vm1834, %v1799, 0
        %v1854 = vsel %vm1834, %v1800, 0
        %v1857 = vsel %vm1834, %v1801, 0
        %v1860 = vsel %vm1834, %v1802, 0
        %v1863 = vsel %vm1834, %v1803, 0
        %v1866 = vsel %vm1834, %v1804, 0
        %v1869 = vsel %vm1834, %v1805, 0
        %v1872 = vsel %vm1834, %v1806, 0
        %v1875 = vsel %vm1834, %v1807, 0
        %v1878 = vsel %vm1834, %v1808, 0
        %v1881 = vsel %vm1834, %v1809, 0
        %v1884 = vsel %vm1834, %v1810, 0
        %v1887 = vsel %vm1834, %v1811, 0
        %v1890 = vsel %vm1834, %v1812, 0
        %v1893 = vsel %vm1834, %v1813, 0
        %v1896 = vsel %vm1834, %v1814, 0
        %v1899 = vsel %vm1834, %v1815, 0
        %v1902 = vsel %vm1834, %v1816, 0
        %v1905 = vsel %vm1834, %v1817, 0
        %v1908 = vsel %vm1834, %v1818, 0
        %v1911 = vsel %vm1834, %v1819, 0
        %v1914 = vsel %vm1834, %v1820, 0
        %v1917 = vsel %vm1834, %v1821, 0
        %v1920 = vsel %vm1834, %v1822, 0
        %v1923 = vsel %vm1834, %v1823, 0
        %v1926 = vsel %vm1834, %v1824, 0
        %v1929 = vsel %vm1834, %v1825, 0
        %vm1931 = vcmask 1042432
        %v1933 = vsel %vm1931, %v1829, 0
        %1935 = vmatpush.msra.mxu0 0.0
        %1936 = vmatpush.msra.mxu0 0.0
        %1937 = vmatpush.msra.mxu0 0.0
        %1938 = vmatpush.msra.mxu0 0.0
        %1939 = vmatpush.msra.mxu0 0.0
        %1940 = vmatpush.msra.mxu0 0.0
        %1941 = vmatpush.msra.mxu0 0.0
        %1942 = vmatpush.msra.mxu0 0.0
        %1943 = vmatpush.msra.mxu0 0.0
        %1944 = vmatpush.msra.mxu0 0.0
        %1945 = vmatpush.msra.mxu0 0.0
        %1946 = vmatpush.msra.mxu0 0.0
        %1947 = vmatpush.msra.mxu0 %v1933
        %1948 = vmatpush.msra.mxu0 %v1828
        %1949 = vmatpush.msra.mxu0 %v1827
        %1950 = vmatpush.msra.mxu0 %v1826
        %1951 = vmatmul.f32.gmra.mxu0 %v1836
        %v1952 = vpop.f32.mrf.mxu0
        %v1953 = vadd.f32 %v1832, %v1952
        %1954 = vmatmul.f32.gmra.mxu0 %v1839
        %v1955 = vpop.f32.mrf.mxu0
        %v1956 = vadd.f32 %v1832, %v1955
        %1957 = vmatmul.f32.gmra.mxu0 %v1842
        %v1958 = vpop.f32.mrf.mxu0
        %v1959 = vadd.f32 %v1832, %v1958
        %1960 = vmatmul.f32.gmra.mxu0 %v1845
        %v1961 = vpop.f32.mrf.mxu0
        %v1962 = vadd.f32 %v1832, %v1961
        %1963 = vmatmul.f32.gmra.mxu0 %v1848
        %v1964 = vpop.f32.mrf.mxu0
        %v1965 = vadd.f32 %v1832, %v1964
        %1966 = vmatmul.f32.gmra.mxu0 %v1851
        %v1967 = vpop.f32.mrf.mxu0
        %v1968 = vadd.f32 %v1832, %v1967
        %1969 = vmatmul.f32.gmra.mxu0 %v1854
        %v1970 = vpop.f32.mrf.mxu0
        %v1971 = vadd.f32 %v1832, %v1970
        %1972 = vmatmul.f32.gmra.mxu0 %v1857
        %v1973 = vpop.f32.mrf.mxu0
        %v1974 = vadd.f32 %v1832, %v1973
        %1975 = vmatmul.f32.gmra.mxu0 %v1860
        %v1976 = vpop.f32.mrf.mxu0
        %v1977 = vadd.f32 %v1832, %v1976
        %1978 = vmatmul.f32.gmra.mxu0 %v1863
        %v1979 = vpop.f32.mrf.mxu0
        %v1980 = vadd.f32 %v1832, %v1979
        %1981 = vmatmul.f32.gmra.mxu0 %v1866
        %v1982 = vpop.f32.mrf.mxu0
        %v1983 = vadd.f32 %v1832, %v1982
        %1984 = vmatmul.f32.gmra.mxu0 %v1869
        %v1985 = vpop.f32.mrf.mxu0
        %v1986 = vadd.f32 %v1832, %v1985
        %1987 = vmatmul.f32.gmra.mxu0 %v1872
        %v1988 = vpop.f32.mrf.mxu0
        %v1989 = vadd.f32 %v1832, %v1988
        %1990 = vmatmul.f32.gmra.mxu0 %v1875
        %v1991 = vpop.f32.mrf.mxu0
        %v1992 = vadd.f32 %v1832, %v1991
        %1993 = vmatmul.f32.gmra.mxu0 %v1878
        %v1994 = vpop.f32.mrf.mxu0
        %v1995 = vadd.f32 %v1832, %v1994
        %1996 = vmatmul.f32.gmra.mxu0 %v1881
        %v1997 = vpop.f32.mrf.mxu0
        %v1998 = vadd.f32 %v1832, %v1997
        %1999 = vmatmul.f32.gmra.mxu0 %v1884
        %v2000 = vpop.f32.mrf.mxu0
        %v2001 = vadd.f32 %v1832, %v2000
        %2002 = vmatmul.f32.gmra.mxu0 %v1887
        %v2003 = vpop.f32.mrf.mxu0
        %v2004 = vadd.f32 %v1832, %v2003
        %2005 = vmatmul.f32.gmra.mxu0 %v1890
        %v2006 = vpop.f32.mrf.mxu0
        %v2007 = vadd.f32 %v1832, %v2006
        %2008 = vmatmul.f32.gmra.mxu0 %v1893
        %v2009 = vpop.f32.mrf.mxu0
        %v2010 = vadd.f32 %v1832, %v2009
        %2011 = vmatmul.f32.gmra.mxu0 %v1896
        %v2012 = vpop.f32.mrf.mxu0
        %v2013 = vadd.f32 %v1832, %v2012
        %2014 = vmatmul.f32.gmra.mxu0 %v1899
        %v2015 = vpop.f32.mrf.mxu0
        %v2016 = vadd.f32 %v1832, %v2015
        %2017 = vmatmul.f32.gmra.mxu0 %v1902
        %v2018 = vpop.f32.mrf.mxu0
        %v2019 = vadd.f32 %v1832, %v2018
        %2020 = vmatmul.f32.gmra.mxu0 %v1905
        %v2021 = vpop.f32.mrf.mxu0
        %v2022 = vadd.f32 %v1832, %v2021
        %2023 = vmatmul.f32.gmra.mxu0 %v1908
        %v2024 = vpop.f32.mrf.mxu0
        %v2025 = vadd.f32 %v1832, %v2024
        %2026 = vmatmul.f32.gmra.mxu0 %v1911
        %v2027 = vpop.f32.mrf.mxu0
        %v2028 = vadd.f32 %v1832, %v2027
        %2029 = vmatmul.f32.gmra.mxu0 %v1914
        %v2030 = vpop.f32.mrf.mxu0
        %v2031 = vadd.f32 %v1832, %v2030
        %2032 = vmatmul.f32.gmra.mxu0 %v1917
        %v2033 = vpop.f32.mrf.mxu0
        %v2034 = vadd.f32 %v1832, %v2033
        %2035 = vmatmul.f32.gmra.mxu0 %v1920
        %v2036 = vpop.f32.mrf.mxu0
        %v2037 = vadd.f32 %v1832, %v2036
        %2038 = vmatmul.f32.gmra.mxu0 %v1923
        %v2039 = vpop.f32.mrf.mxu0
        %v2040 = vadd.f32 %v1832, %v2039
        %2041 = vmatmul.f32.gmra.mxu0 %v1926
        %v2042 = vpop.f32.mrf.mxu0
        %v2043 = vadd.f32 %v1832, %v2042
        %2044 = vmatmul.f32.gmra.mxu0 %v1929
        %v2045 = vpop.f32.mrf.mxu0
        %v2046 = vadd.f32 %v1832, %v2045
        %2047 = vdwg.mxu0
        %v2048 = vmax.f32 %v1953, 0.0
        %v2049 = vmax.f32 %v1956, 0.0
        %v2050 = vmax.f32 %v1959, 0.0
        %v2051 = vmax.f32 %v1962, 0.0
        %v2052 = vmax.f32 %v1965, 0.0
        %v2053 = vmax.f32 %v1968, 0.0
        %v2054 = vmax.f32 %v1971, 0.0
        %v2055 = vmax.f32 %v1974, 0.0
        %v2056 = vmax.f32 %v1977, 0.0
        %v2057 = vmax.f32 %v1980, 0.0
        %v2058 = vmax.f32 %v1983, 0.0
        %v2059 = vmax.f32 %v1986, 0.0
        %v2060 = vmax.f32 %v1989, 0.0
        %v2061 = vmax.f32 %v1992, 0.0
        %v2062 = vmax.f32 %v1995, 0.0
        %v2063 = vmax.f32 %v1998, 0.0
        %v2064 = vmax.f32 %v2001, 0.0
        %v2065 = vmax.f32 %v2004, 0.0
        %v2066 = vmax.f32 %v2007, 0.0
        %v2067 = vmax.f32 %v2010, 0.0
        %v2068 = vmax.f32 %v2013, 0.0
        %v2069 = vmax.f32 %v2016, 0.0
        %v2070 = vmax.f32 %v2019, 0.0
        %v2071 = vmax.f32 %v2022, 0.0
        %v2072 = vmax.f32 %v2025, 0.0
        %v2073 = vmax.f32 %v2028, 0.0
        %v2074 = vmax.f32 %v2031, 0.0
        %v2075 = vmax.f32 %v2034, 0.0
        %v2076 = vmax.f32 %v2037, 0.0
        %v2077 = vmax.f32 %v2040, 0.0
        %v2078 = vmax.f32 %v2043, 0.0
        %v2079 = vmax.f32 %v2046, 0.0
        %vm2080 = vcmask 130048
        %2081 = vst.msk [vmem:[#allocation3] sm:$0xff] %vm2080, %v2048
        %2082 = vst.msk [vmem:[#allocation3 + $0x8] sm:$0xff] %vm2080, %v2049
        %2083 = vst.msk [vmem:[#allocation3 + $0x10] sm:$0xff] %vm2080, %v2050
        %2084 = vst.msk [vmem:[#allocation3 + $0x18] sm:$0xff] %vm2080, %v2051
        %2085 = vst.msk [vmem:[#allocation3 + $0x20] sm:$0xff] %vm2080, %v2052
        %2086 = vst.msk [vmem:[#allocation3 + $0x28] sm:$0xff] %vm2080, %v2053
        %2087 = vst.msk [vmem:[#allocation3 + $0x30] sm:$0xff] %vm2080, %v2054
        %2088 = vst.msk [vmem:[#allocation3 + $0x38] sm:$0xff] %vm2080, %v2055
        %2089 = vst.msk [vmem:[#allocation3 + $0x40] sm:$0xff] %vm2080, %v2056
        %2090 = vst.msk [vmem:[#allocation3 + $0x48] sm:$0xff] %vm2080, %v2057
        %2091 = vst.msk [vmem:[#allocation3 + $0x50] sm:$0xff] %vm2080, %v2058
        %2092 = vst.msk [vmem:[#allocation3 + $0x58] sm:$0xff] %vm2080, %v2059
        %2093 = vst.msk [vmem:[#allocation3 + $0x60] sm:$0xff] %vm2080, %v2060
        %2094 = vst.msk [vmem:[#allocation3 + $0x68] sm:$0xff] %vm2080, %v2061
        %2095 = vst.msk [vmem:[#allocation3 + $0x70] sm:$0xff] %vm2080, %v2062
        %2096 = vst.msk [vmem:[#allocation3 + $0x78] sm:$0xff] %vm2080, %v2063
        %2097 = vst.msk [vmem:[#allocation3 + $0x80] sm:$0xff] %vm2080, %v2064
        %2098 = vst.msk [vmem:[#allocation3 + $0x88] sm:$0xff] %vm2080, %v2065
        %2099 = vst.msk [vmem:[#allocation3 + $0x90] sm:$0xff] %vm2080, %v2066
        %2100 = vst.msk [vmem:[#allocation3 + $0x98] sm:$0xff] %vm2080, %v2067
        %2101 = vst.msk [vmem:[#allocation3 + $0xa0] sm:$0xff] %vm2080, %v2068
        %2102 = vst.msk [vmem:[#allocation3 + $0xa8] sm:$0xff] %vm2080, %v2069
        %2103 = vst.msk [vmem:[#allocation3 + $0xb0] sm:$0xff] %vm2080, %v2070
        %2104 = vst.msk [vmem:[#allocation3 + $0xb8] sm:$0xff] %vm2080, %v2071
        %2105 = vst.msk [vmem:[#allocation3 + $0xc0] sm:$0xff] %vm2080, %v2072
        %2106 = vst.msk [vmem:[#allocation3 + $0xc8] sm:$0xff] %vm2080, %v2073
        %2107 = vst.msk [vmem:[#allocation3 + $0xd0] sm:$0xff] %vm2080, %v2074
        %2108 = vst.msk [vmem:[#allocation3 + $0xd8] sm:$0xff] %vm2080, %v2075
        %2109 = vst.msk [vmem:[#allocation3 + $0xe0] sm:$0xff] %vm2080, %v2076
        %2110 = vst.msk [vmem:[#allocation3 + $0xe8] sm:$0xff] %vm2080, %v2077
        %2111 = vst.msk [vmem:[#allocation3 + $0xf0] sm:$0xff] %vm2080, %v2078
        %2112 = vst.msk [vmem:[#allocation3 + $0xf8] sm:$0xff] %vm2080, %v2079
        %v2113 = vld [vmem:[#allocation3] ss:$2 sm:$0xff]
        %s2114 = scalar_lea.vmem [#allocation3], 16
        %v2115 = vld [vmem:[%s2114] ss:$2 sm:$0xff]
        %s2116 = scalar_lea.vmem [#allocation3], 32
        %v2117 = vld [vmem:[%s2116] ss:$2 sm:$0xff]
        %s2118 = scalar_lea.vmem [#allocation3], 48
        %v2119 = vld [vmem:[%s2118] ss:$2 sm:$0xff]
        %s2120 = scalar_lea.vmem [#allocation3], 64
        %v2121 = vld [vmem:[%s2120] ss:$2 sm:$0xff]
        %s2122 = scalar_lea.vmem [#allocation3], 80
        %v2123 = vld [vmem:[%s2122] ss:$2 sm:$0xff]
        %s2124 = scalar_lea.vmem [#allocation3], 96
        %v2125 = vld [vmem:[%s2124] ss:$2 sm:$0xff]
        %s2126 = scalar_lea.vmem [#allocation3], 112
        %v2127 = vld [vmem:[%s2126] ss:$2 sm:$0xff]
        %s2128 = scalar_lea.vmem [#allocation3], 128
        %v2129 = vld [vmem:[%s2128] ss:$2 sm:$0xff]
        %s2130 = scalar_lea.vmem [#allocation3], 144
        %v2131 = vld [vmem:[%s2130] ss:$2 sm:$0xff]
        %s2132 = scalar_lea.vmem [#allocation3], 160
        %v2133 = vld [vmem:[%s2132] ss:$2 sm:$0xff]
        %s2134 = scalar_lea.vmem [#allocation3], 176
        %v2135 = vld [vmem:[%s2134] ss:$2 sm:$0xff]
        %s2136 = scalar_lea.vmem [#allocation3], 192
        %v2137 = vld [vmem:[%s2136] ss:$2 sm:$0xff]
        %s2138 = scalar_lea.vmem [#allocation3], 208
        %v2139 = vld [vmem:[%s2138] ss:$2 sm:$0xff]
        %s2140 = scalar_lea.vmem [#allocation3], 224
        %v2141 = vld [vmem:[%s2140] ss:$2 sm:$0xff]
        %s2142 = scalar_lea.vmem [#allocation3], 240
        %v2143 = vld [vmem:[%s2142] ss:$2 sm:$0xff]
        %s2144 = scalar_lea.vmem [#allocation3], 1
        %v2145 = vld [vmem:[%s2144] ss:$2 sm:$0xff]
        %s2146 = scalar_lea.vmem [#allocation3], 17
        %v2147 = vld [vmem:[%s2146] ss:$2 sm:$0xff]
        %s2148 = scalar_lea.vmem [#allocation3], 33
        %v2149 = vld [vmem:[%s2148] ss:$2 sm:$0xff]
        %s2150 = scalar_lea.vmem [#allocation3], 49
        %v2151 = vld [vmem:[%s2150] ss:$2 sm:$0xff]
        %s2152 = scalar_lea.vmem [#allocation3], 65
        %v2153 = vld [vmem:[%s2152] ss:$2 sm:$0xff]
        %s2154 = scalar_lea.vmem [#allocation3], 81
        %v2155 = vld [vmem:[%s2154] ss:$2 sm:$0xff]
        %s2156 = scalar_lea.vmem [#allocation3], 97
        %v2157 = vld [vmem:[%s2156] ss:$2 sm:$0xff]
        %s2158 = scalar_lea.vmem [#allocation3], 113
        %v2159 = vld [vmem:[%s2158] ss:$2 sm:$0xff]
        %s2160 = scalar_lea.vmem [#allocation3], 129
        %v2161 = vld [vmem:[%s2160] ss:$2 sm:$0xff]
        %s2162 = scalar_lea.vmem [#allocation3], 145
        %v2163 = vld [vmem:[%s2162] ss:$2 sm:$0xff]
        %s2164 = scalar_lea.vmem [#allocation3], 161
        %v2165 = vld [vmem:[%s2164] ss:$2 sm:$0xff]
        %s2166 = scalar_lea.vmem [#allocation3], 177
        %v2167 = vld [vmem:[%s2166] ss:$2 sm:$0xff]
        %s2168 = scalar_lea.vmem [#allocation3], 193
        %v2169 = vld [vmem:[%s2168] ss:$2 sm:$0xff]
        %s2170 = scalar_lea.vmem [#allocation3], 209
        %v2171 = vld [vmem:[%s2170] ss:$2 sm:$0xff]
        %s2172 = scalar_lea.vmem [#allocation3], 225
        %v2173 = vld [vmem:[%s2172] ss:$2 sm:$0xff]
        %s2174 = scalar_lea.vmem [#allocation3], 241
        %v2175 = vld [vmem:[%s2174] ss:$2 sm:$0xff]
        %v2176 = vmax.f32 %v2113, %v2145
        %v2177 = vmax.f32 %v2115, %v2147
        %v2178 = vmax.f32 %v2117, %v2149
        %v2179 = vmax.f32 %v2119, %v2151
        %v2180 = vmax.f32 %v2121, %v2153
        %v2181 = vmax.f32 %v2123, %v2155
        %v2182 = vmax.f32 %v2125, %v2157
        %v2183 = vmax.f32 %v2127, %v2159
        %v2184 = vmax.f32 %v2129, %v2161
        %v2185 = vmax.f32 %v2131, %v2163
        %v2186 = vmax.f32 %v2133, %v2165
        %v2187 = vmax.f32 %v2135, %v2167
        %v2188 = vmax.f32 %v2137, %v2169
        %v2189 = vmax.f32 %v2139, %v2171
        %v2190 = vmax.f32 %v2141, %v2173
        %v2191 = vmax.f32 %v2143, %v2175
        %2192 = vst.msk [vmem:[#allocation4] sm:$0xff] %vm2080, %v2176
        %2193 = vst.msk [vmem:[#allocation4 + $0x8] sm:$0xff] %vm2080, %v2177
        %2194 = vst.msk [vmem:[#allocation4 + $0x10] sm:$0xff] %vm2080, %v2178
        %2195 = vst.msk [vmem:[#allocation4 + $0x18] sm:$0xff] %vm2080, %v2179
        %2196 = vst.msk [vmem:[#allocation4 + $0x20] sm:$0xff] %vm2080, %v2180
        %2197 = vst.msk [vmem:[#allocation4 + $0x28] sm:$0xff] %vm2080, %v2181
        %2198 = vst.msk [vmem:[#allocation4 + $0x30] sm:$0xff] %vm2080, %v2182
        %2199 = vst.msk [vmem:[#allocation4 + $0x38] sm:$0xff] %vm2080, %v2183
        %2200 = vst.msk [vmem:[#allocation4 + $0x40] sm:$0xff] %vm2080, %v2184
        %2201 = vst.msk [vmem:[#allocation4 + $0x48] sm:$0xff] %vm2080, %v2185
        %2202 = vst.msk [vmem:[#allocation4 + $0x50] sm:$0xff] %vm2080, %v2186
        %2203 = vst.msk [vmem:[#allocation4 + $0x58] sm:$0xff] %vm2080, %v2187
        %2204 = vst.msk [vmem:[#allocation4 + $0x60] sm:$0xff] %vm2080, %v2188
        %2205 = vst.msk [vmem:[#allocation4 + $0x68] sm:$0xff] %vm2080, %v2189
        %2206 = vst.msk [vmem:[#allocation4 + $0x70] sm:$0xff] %vm2080, %v2190
        %2207 = vst.msk [vmem:[#allocation4 + $0x78] sm:$0xff] %vm2080, %v2191
        %v2208 = vld [vmem:[#allocation4] sm:$0xff]
        %v2209 = vld [vmem:[#allocation4 + $0x10] sm:$0xff]
        %v2210 = vld [vmem:[#allocation4 + $0x20] sm:$0xff]
        %v2211 = vld [vmem:[#allocation4 + $0x30] sm:$0xff]
        %v2212 = vld [vmem:[#allocation4 + $0x40] sm:$0xff]
        %v2213 = vld [vmem:[#allocation4 + $0x50] sm:$0xff]
        %v2214 = vld [vmem:[#allocation4 + $0x60] sm:$0xff]
        %v2215 = vld [vmem:[#allocation4 + $0x70] sm:$0xff]
        %s2216 = scalar_lea.vmem [#allocation4], 8
        %v2217 = vld [vmem:[%s2216] sm:$0xff]
        %v2218 = vld [vmem:[%s2216 + $0x10] sm:$0xff]
        %v2219 = vld [vmem:[%s2216 + $0x20] sm:$0xff]
        %v2220 = vld [vmem:[%s2216 + $0x30] sm:$0xff]
        %v2221 = vld [vmem:[%s2216 + $0x40] sm:$0xff]
        %v2222 = vld [vmem:[%s2216 + $0x50] sm:$0xff]
        %v2223 = vld [vmem:[%s2216 + $0x60] sm:$0xff]
        %v2224 = vld [vmem:[%s2216 + $0x70] sm:$0xff]
        %v2225 = vmax.f32 %v2208, %v2217
        %v2226 = vmax.f32 %v2209, %v2218
        %v2227 = vmax.f32 %v2210, %v2219
        %v2228 = vmax.f32 %v2211, %v2220
        %v2229 = vmax.f32 %v2212, %v2221
        %v2230 = vmax.f32 %v2213, %v2222
        %v2231 = vmax.f32 %v2214, %v2223
        %v2232 = vmax.f32 %v2215, %v2224
        %2233 = vst.msk [vmem:[#allocation5] sm:$0xff] %vm2080, 0.0
        %vm2234 = vcmask 123904
        %2235 = vst.msk [vmem:[#allocation5 + $0x8] sm:$0x3] %vm2234, 0.0
        %2236 = vst.msk [vmem:[#allocation5 + $0x10] sm:$0xff] %vm2080, 0.0
        %2237 = vst.msk [vmem:[#allocation5 + $0x18] sm:$0x3] %vm2234, 0.0
        %2238 = vst.msk [vmem:[#allocation5 + $0x20] sm:$0xff] %vm2080, 0.0
        %2239 = vst.msk [vmem:[#allocation5 + $0x28] sm:$0x3] %vm2234, 0.0
        %2240 = vst.msk [vmem:[#allocation5 + $0x30] sm:$0xff] %vm2080, 0.0
        %2241 = vst.msk [vmem:[#allocation5 + $0x38] sm:$0x3] %vm2234, 0.0
        %2242 = vst.msk [vmem:[#allocation5 + $0x40] sm:$0xff] %vm2080, 0.0
        %2243 = vst.msk [vmem:[#allocation5 + $0x48] sm:$0x3] %vm2234, 0.0
        %2244 = vst.msk [vmem:[#allocation5 + $0x50] sm:$0xff] %vm2080, 0.0
        %2245 = vst.msk [vmem:[#allocation5 + $0x58] sm:$0x3] %vm2234, 0.0
        %2246 = vst.msk [vmem:[#allocation5 + $0x60] sm:$0xff] %vm2080, 0.0
        %2247 = vst.msk [vmem:[#allocation5 + $0x68] sm:$0x3] %vm2234, 0.0
        %2248 = vst.msk [vmem:[#allocation5 + $0x70] sm:$0xff] %vm2080, 0.0
        %2249 = vst.msk [vmem:[#allocation5 + $0x78] sm:$0x3] %vm2234, 0.0
        %2250 = vst.msk [vmem:[#allocation5 + $0x80] sm:$0xff] %vm2080, 0.0
        %2251 = vst.msk [vmem:[#allocation5 + $0x88] sm:$0x3] %vm2234, 0.0
        %2252 = vst.msk [vmem:[#allocation5 + $0x90] sm:$0xff] %vm2080, 0.0
        %2253 = vst.msk [vmem:[#allocation5 + $0x98] sm:$0x3] %vm2234, 0.0
        %s2254 = scalar_lea.vmem [#allocation5], 16
        %2255 = vst.msk [vmem:[%s2254 + $0x1] sm:$0xff] %vm2080, %v2225
        %2256 = vst.msk [vmem:[%s2254 + $0x11] sm:$0xff] %vm2080, %v2226
        %2257 = vst.msk [vmem:[%s2254 + $0x21] sm:$0xff] %vm2080, %v2227
        %2258 = vst.msk [vmem:[%s2254 + $0x31] sm:$0xff] %vm2080, %v2228
        %2259 = vst.msk [vmem:[%s2254 + $0x41] sm:$0xff] %vm2080, %v2229
        %2260 = vst.msk [vmem:[%s2254 + $0x51] sm:$0xff] %vm2080, %v2230
        %2261 = vst.msk [vmem:[%s2254 + $0x61] sm:$0xff] %vm2080, %v2231
        %2262 = vst.msk [vmem:[%s2254 + $0x71] sm:$0xff] %vm2080, %v2232
        %v2263 = vld [vmem:[#allocation5] sm:$0xff]
        %v2264 = vld [vmem:[#allocation5 + $0x8] sm:$0x3]
        %v2265 = vld [vmem:[#allocation5 + $0x10] sm:$0xff]
        %v2266 = vld [vmem:[#allocation5 + $0x18] sm:$0x3]
        %v2267 = vld [vmem:[#allocation5 + $0x20] sm:$0xff]
        %v2268 = vld [vmem:[#allocation5 + $0x28] sm:$0x3]
        %v2269 = vld [vmem:[#allocation5 + $0x30] sm:$0xff]
        %v2270 = vld [vmem:[#allocation5 + $0x38] sm:$0x3]
        %v2271 = vld [vmem:[#allocation5 + $0x40] sm:$0xff]
        %v2272 = vld [vmem:[#allocation5 + $0x48] sm:$0x3]
        %v2273 = vld [vmem:[#allocation5 + $0x50] sm:$0xff]
        %v2274 = vld [vmem:[#allocation5 + $0x58] sm:$0x3]
        %v2275 = vld [vmem:[#allocation5 + $0x60] sm:$0xff]
        %v2276 = vld [vmem:[#allocation5 + $0x68] sm:$0x3]
        %v2277 = vld [vmem:[#allocation5 + $0x70] sm:$0xff]
        %v2278 = vld [vmem:[#allocation5 + $0x78] sm:$0x3]
        %v2279 = vld [vmem:[#allocation5 + $0x80] sm:$0xff]
        %v2280 = vld [vmem:[#allocation5 + $0x88] sm:$0x3]
        %v2281 = vld [vmem:[#allocation5 + $0x90] sm:$0xff]
        %v2282 = vld [vmem:[#allocation5 + $0x98] sm:$0x3]
        %v2299 = vrot.slane %v2263, 1
        %v2300 = vrot.slane %v2264, 1
        %v2301 = vsel %vm607, %v2299, %v2300
        %v2302 = vrot.slane %v2265, 1
        %v2303 = vrot.slane %v2266, 1
        %v2304 = vsel %vm607, %v2302, %v2303
        %v2305 = vrot.slane %v2267, 1
        %v2306 = vrot.slane %v2268, 1
        %v2307 = vsel %vm607, %v2305, %v2306
        %v2308 = vrot.slane %v2269, 1
        %v2309 = vrot.slane %v2270, 1
        %v2310 = vsel %vm607, %v2308, %v2309
        %v2311 = vrot.slane %v2271, 1
        %v2312 = vrot.slane %v2272, 1
        %v2313 = vsel %vm607, %v2311, %v2312
        %v2314 = vrot.slane %v2273, 1
        %v2315 = vrot.slane %v2274, 1
        %v2316 = vsel %vm607, %v2314, %v2315
        %v2317 = vrot.slane %v2275, 1
        %v2318 = vrot.slane %v2276, 1
        %v2319 = vsel %vm607, %v2317, %v2318
        %v2320 = vrot.slane %v2277, 1
        %v2321 = vrot.slane %v2278, 1
        %v2322 = vsel %vm607, %v2320, %v2321
        %2323 = vrot.lane.b32.xlu0 %v2301, 16
        %v2324 = vpop.permute.xlu0 %2323
        %2325 = vrot.lane.b32.xlu0 %v2304, 16
        %v2326 = vpop.permute.xlu0 %2325
        %2327 = vrot.lane.b32.xlu0 %v2307, 16
        %v2328 = vpop.permute.xlu0 %2327
        %2329 = vrot.lane.b32.xlu0 %v2310, 16
        %v2330 = vpop.permute.xlu0 %2329
        %2331 = vrot.lane.b32.xlu0 %v2313, 16
        %v2332 = vpop.permute.xlu0 %2331
        %2333 = vrot.lane.b32.xlu0 %v2316, 16
        %v2334 = vpop.permute.xlu0 %2333
        %2335 = vrot.lane.b32.xlu0 %v2319, 16
        %v2336 = vpop.permute.xlu0 %2335
        %2337 = vrot.lane.b32.xlu0 %v2322, 16
        %v2338 = vpop.permute.xlu0 %2337
        %v2347 = vrot.slane %v2263, 2
        %v2348 = vrot.slane %v2264, 2
        %v2349 = vsel %vm784, %v2347, %v2348
        %v2350 = vrot.slane %v2265, 2
        %v2351 = vrot.slane %v2266, 2
        %v2352 = vsel %vm784, %v2350, %v2351
        %v2353 = vrot.slane %v2267, 2
        %v2354 = vrot.slane %v2268, 2
        %v2355 = vsel %vm784, %v2353, %v2354
        %v2356 = vrot.slane %v2269, 2
        %v2357 = vrot.slane %v2270, 2
        %v2358 = vsel %vm784, %v2356, %v2357
        %v2359 = vrot.slane %v2271, 2
        %v2360 = vrot.slane %v2272, 2
        %v2361 = vsel %vm784, %v2359, %v2360
        %v2362 = vrot.slane %v2273, 2
        %v2363 = vrot.slane %v2274, 2
        %v2364 = vsel %vm784, %v2362, %v2363
        %v2365 = vrot.slane %v2275, 2
        %v2366 = vrot.slane %v2276, 2
        %v2367 = vsel %vm784, %v2365, %v2366
        %v2368 = vrot.slane %v2277, 2
        %v2369 = vrot.slane %v2278, 2
        %v2370 = vsel %vm784, %v2368, %v2369
        %2371 = vrot.lane.b32.xlu0 %v2349, 32
        %v2372 = vpop.permute.xlu0 %2371
        %2373 = vrot.lane.b32.xlu0 %v2352, 32
        %v2374 = vpop.permute.xlu0 %2373
        %2375 = vrot.lane.b32.xlu0 %v2355, 32
        %v2376 = vpop.permute.xlu0 %2375
        %2377 = vrot.lane.b32.xlu0 %v2358, 32
        %v2378 = vpop.permute.xlu0 %2377
        %2379 = vrot.lane.b32.xlu0 %v2361, 32
        %v2380 = vpop.permute.xlu0 %2379
        %2381 = vrot.lane.b32.xlu0 %v2364, 32
        %v2382 = vpop.permute.xlu0 %2381
        %2383 = vrot.lane.b32.xlu0 %v2367, 32
        %v2384 = vpop.permute.xlu0 %2383
        %2385 = vrot.lane.b32.xlu0 %v2370, 32
        %v2386 = vpop.permute.xlu0 %2385
        %2396 = vrot.lane.b32.xlu0 %v2265, 48
        %v2397 = vpop.permute.xlu0 %2396
        %2398 = vrot.lane.b32.xlu0 %v2267, 48
        %v2399 = vpop.permute.xlu0 %2398
        %2400 = vrot.lane.b32.xlu0 %v2269, 48
        %v2401 = vpop.permute.xlu0 %2400
        %2402 = vrot.lane.b32.xlu0 %v2271, 48
        %v2403 = vpop.permute.xlu0 %2402
        %2404 = vrot.lane.b32.xlu0 %v2273, 48
        %v2405 = vpop.permute.xlu0 %2404
        %2406 = vrot.lane.b32.xlu0 %v2275, 48
        %v2407 = vpop.permute.xlu0 %2406
        %2408 = vrot.lane.b32.xlu0 %v2277, 48
        %v2409 = vpop.permute.xlu0 %2408
        %2410 = vrot.lane.b32.xlu0 %v2279, 48
        %v2411 = vpop.permute.xlu0 %2410
        %v2421 = vrot.slane %v2279, 1
        %v2422 = vrot.slane %v2280, 1
        %v2423 = vsel %vm607, %v2421, %v2422
        %2424 = vrot.lane.b32.xlu0 %v2304, 64
        %v2425 = vpop.permute.xlu0 %2424
        %2426 = vrot.lane.b32.xlu0 %v2307, 64
        %v2427 = vpop.permute.xlu0 %2426
        %2428 = vrot.lane.b32.xlu0 %v2310, 64
        %v2429 = vpop.permute.xlu0 %2428
        %2430 = vrot.lane.b32.xlu0 %v2313, 64
        %v2431 = vpop.permute.xlu0 %2430
        %2432 = vrot.lane.b32.xlu0 %v2316, 64
        %v2433 = vpop.permute.xlu0 %2432
        %2434 = vrot.lane.b32.xlu0 %v2319, 64
        %v2435 = vpop.permute.xlu0 %2434
        %2436 = vrot.lane.b32.xlu0 %v2322, 64
        %v2437 = vpop.permute.xlu0 %2436
        %2438 = vrot.lane.b32.xlu0 %v2423, 64
        %v2439 = vpop.permute.xlu0 %2438
        %v2448 = vrot.slane %v2279, 2
        %v2449 = vrot.slane %v2280, 2
        %v2450 = vsel %vm784, %v2448, %v2449
        %2451 = vrot.lane.b32.xlu0 %v2352, 80
        %v2452 = vpop.permute.xlu0 %2451
        %2453 = vrot.lane.b32.xlu0 %v2355, 80
        %v2454 = vpop.permute.xlu0 %2453
        %2455 = vrot.lane.b32.xlu0 %v2358, 80
        %v2456 = vpop.permute.xlu0 %2455
        %2457 = vrot.lane.b32.xlu0 %v2361, 80
        %v2458 = vpop.permute.xlu0 %2457
        %2459 = vrot.lane.b32.xlu0 %v2364, 80
        %v2460 = vpop.permute.xlu0 %2459
        %2461 = vrot.lane.b32.xlu0 %v2367, 80
        %v2462 = vpop.permute.xlu0 %2461
        %2463 = vrot.lane.b32.xlu0 %v2370, 80
        %v2464 = vpop.permute.xlu0 %2463
        %2465 = vrot.lane.b32.xlu0 %v2450, 80
        %v2466 = vpop.permute.xlu0 %2465
        %2476 = vrot.lane.b32.xlu0 %v2267, 96
        %v2477 = vpop.permute.xlu0 %2476
        %2478 = vrot.lane.b32.xlu0 %v2269, 96
        %v2479 = vpop.permute.xlu0 %2478
        %2480 = vrot.lane.b32.xlu0 %v2271, 96
        %v2481 = vpop.permute.xlu0 %2480
        %2482 = vrot.lane.b32.xlu0 %v2273, 96
        %v2483 = vpop.permute.xlu0 %2482
        %2484 = vrot.lane.b32.xlu0 %v2275, 96
        %v2485 = vpop.permute.xlu0 %2484
        %2486 = vrot.lane.b32.xlu0 %v2277, 96
        %v2487 = vpop.permute.xlu0 %2486
        %2488 = vrot.lane.b32.xlu0 %v2279, 96
        %v2489 = vpop.permute.xlu0 %2488
        %2490 = vrot.lane.b32.xlu0 %v2281, 96
        %v2491 = vpop.permute.xlu0 %2490
        %v2501 = vrot.slane %v2281, 1
        %v2502 = vrot.slane %v2282, 1
        %v2503 = vsel %vm607, %v2501, %v2502
        %2504 = vrot.lane.b32.xlu0 %v2307, 112
        %v2505 = vpop.permute.xlu0 %2504
        %2506 = vrot.lane.b32.xlu0 %v2310, 112
        %v2507 = vpop.permute.xlu0 %2506
        %2508 = vrot.lane.b32.xlu0 %v2313, 112
        %v2509 = vpop.permute.xlu0 %2508
        %2510 = vrot.lane.b32.xlu0 %v2316, 112
        %v2511 = vpop.permute.xlu0 %2510
        %2512 = vrot.lane.b32.xlu0 %v2319, 112
        %v2513 = vpop.permute.xlu0 %2512
        %2514 = vrot.lane.b32.xlu0 %v2322, 112
        %v2515 = vpop.permute.xlu0 %2514
        %2516 = vrot.lane.b32.xlu0 %v2423, 112
        %v2517 = vpop.permute.xlu0 %2516
        %2518 = vrot.lane.b32.xlu0 %v2503, 112
        %v2519 = vpop.permute.xlu0 %2518
        %v2528 = vrot.slane %v2281, 2
        %v2529 = vrot.slane %v2282, 2
        %v2530 = vsel %vm784, %v2528, %v2529
        %v2531 = vsel %vm2080, %v2263, %v2324
        %v2532 = vsel %vm2080, %v2265, %v2326
        %v2533 = vsel %vm2080, %v2267, %v2328
        %v2534 = vsel %vm2080, %v2269, %v2330
        %v2535 = vsel %vm2080, %v2271, %v2332
        %v2536 = vsel %vm2080, %v2273, %v2334
        %v2537 = vsel %vm2080, %v2275, %v2336
        %v2538 = vsel %vm2080, %v2277, %v2338
        %vm2539 = vcmask 261120
        %v2540 = vsel %vm2539, %v2531, %v2372
        %v2541 = vsel %vm2539, %v2532, %v2374
        %v2542 = vsel %vm2539, %v2533, %v2376
        %v2543 = vsel %vm2539, %v2534, %v2378
        %v2544 = vsel %vm2539, %v2535, %v2380
        %v2545 = vsel %vm2539, %v2536, %v2382
        %v2546 = vsel %vm2539, %v2537, %v2384
        %v2547 = vsel %vm2539, %v2538, %v2386
        %vm2548 = vcmask 392192
        %v2549 = vsel %vm2548, %v2540, %v2397
        %v2550 = vsel %vm2548, %v2541, %v2399
        %v2551 = vsel %vm2548, %v2542, %v2401
        %v2552 = vsel %vm2548, %v2543, %v2403
        %v2553 = vsel %vm2548, %v2544, %v2405
        %v2554 = vsel %vm2548, %v2545, %v2407
        %v2555 = vsel %vm2548, %v2546, %v2409
        %v2556 = vsel %vm2548, %v2547, %v2411
        %vm2557 = vcmask 523264
        %v2558 = vsel %vm2557, %v2549, %v2425
        %v2559 = vsel %vm2557, %v2550, %v2427
        %v2560 = vsel %vm2557, %v2551, %v2429
        %v2561 = vsel %vm2557, %v2552, %v2431
        %v2562 = vsel %vm2557, %v2553, %v2433
        %v2563 = vsel %vm2557, %v2554, %v2435
        %v2564 = vsel %vm2557, %v2555, %v2437
        %v2565 = vsel %vm2557, %v2556, %v2439
        %vm2566 = vcmask 654336
        %v2567 = vsel %vm2566, %v2558, %v2452
        %v2568 = vsel %vm2566, %v2559, %v2454
        %v2569 = vsel %vm2566, %v2560, %v2456
        %v2570 = vsel %vm2566, %v2561, %v2458
        %v2571 = vsel %vm2566, %v2562, %v2460
        %v2572 = vsel %vm2566, %v2563, %v2462
        %v2573 = vsel %vm2566, %v2564, %v2464
        %v2574 = vsel %vm2566, %v2565, %v2466
        %vm2575 = vcmask 785408
        %v2576 = vsel %vm2575, %v2567, %v2477
        %v2577 = vsel %vm2575, %v2568, %v2479
        %v2578 = vsel %vm2575, %v2569, %v2481
        %v2579 = vsel %vm2575, %v2570, %v2483
        %v2580 = vsel %vm2575, %v2571, %v2485
        %v2581 = vsel %vm2575, %v2572, %v2487
        %v2582 = vsel %vm2575, %v2573, %v2489
        %v2583 = vsel %vm2575, %v2574, %v2491
        %vm2584 = vcmask 916480
        %v2585 = vsel %vm2584, %v2576, %v2505
        %v2586 = vsel %vm2584, %v2577, %v2507
        %v2587 = vsel %vm2584, %v2578, %v2509
        %v2588 = vsel %vm2584, %v2579, %v2511
        %v2589 = vsel %vm2584, %v2580, %v2513
        %v2590 = vsel %vm2584, %v2581, %v2515
        %v2591 = vsel %vm2584, %v2582, %v2517
        %v2592 = vsel %vm2584, %v2583, %v2519
        %v2593 = vld [vmem:[%s3] sm:$0xff]
        %v2594 = vld [vmem:[%s3 + $0x8] sm:$0xff]
        %v2595 = vld [vmem:[%s3 + $0x10] sm:$0xff]
        %v2596 = vld [vmem:[%s3 + $0x18] sm:$0xff]
        %v2597 = vld [vmem:[%s3 + $0x20] sm:$0xff]
        %v2598 = vld [vmem:[%s3 + $0x28] sm:$0xff]
        %v2599 = vld [vmem:[%s3 + $0x30] sm:$0xff]
        %v2600 = vld [vmem:[%s3 + $0x38] sm:$0xff]
        %v2601 = vld [vmem:[%s3 + $0x40] sm:$0xff]
        %v2602 = vld [vmem:[%s3 + $0x48] sm:$0xff]
        %v2603 = vld [vmem:[%s3 + $0x50] sm:$0xff]
        %v2604 = vld [vmem:[%s3 + $0x58] sm:$0xff]
        %v2605 = vld [vmem:[%s3 + $0x60] sm:$0xff]
        %v2606 = vld [vmem:[%s3 + $0x68] sm:$0xff]
        %v2607 = vld [vmem:[%s3 + $0x70] sm:$0xff]
        %v2608 = vld [vmem:[%s3 + $0x78] sm:$0xff]
        %v2609 = vld [vmem:[%s3 + $0x80] sm:$0xff]
        %v2610 = vld [vmem:[%s3 + $0x88] sm:$0xff]
        %v2611 = vld [vmem:[%s4] sm:$0x1]
        %v2613 = vperm.slane %v2611, 0
        %v2615 = vsel %vm2080, %v2355, 0
        %v2617 = vsel %vm2080, %v2358, 0
        %v2619 = vsel %vm2080, %v2361, 0
        %v2621 = vsel %vm2080, %v2364, 0
        %v2623 = vsel %vm2080, %v2367, 0
        %v2625 = vsel %vm2080, %v2370, 0
        %v2627 = vsel %vm2080, %v2450, 0
        %v2629 = vsel %vm2080, %v2530, 0
        %2631 = vmatpush.msra.mxu0 %v2608
        %2632 = vmatpush.msra.mxu0 %v2607
        %2633 = vmatpush.msra.mxu0 %v2606
        %2634 = vmatpush.msra.mxu0 %v2605
        %2635 = vmatpush.msra.mxu0 %v2604
        %2636 = vmatpush.msra.mxu0 %v2603
        %2637 = vmatpush.msra.mxu0 %v2602
        %2638 = vmatpush.msra.mxu0 %v2601
        %2639 = vmatpush.msra.mxu0 %v2600
        %2640 = vmatpush.msra.mxu0 %v2599
        %2641 = vmatpush.msra.mxu0 %v2598
        %2642 = vmatpush.msra.mxu0 %v2597
        %2643 = vmatpush.msra.mxu0 %v2596
        %2644 = vmatpush.msra.mxu0 %v2595
        %2645 = vmatpush.msra.mxu0 %v2594
        %2646 = vmatpush.msra.mxu0 %v2593
        %2647 = vmatmul.f32.gmra.mxu0 %v2585
        %v2648 = vpop.f32.mrf.mxu0
        %v2649 = vadd.f32 %v2613, %v2648
        %2650 = vmatmul.f32.gmra.mxu0 %v2586
        %v2651 = vpop.f32.mrf.mxu0
        %v2652 = vadd.f32 %v2613, %v2651
        %2653 = vmatmul.f32.gmra.mxu0 %v2587
        %v2654 = vpop.f32.mrf.mxu0
        %v2655 = vadd.f32 %v2613, %v2654
        %2656 = vmatmul.f32.gmra.mxu0 %v2588
        %v2657 = vpop.f32.mrf.mxu0
        %v2658 = vadd.f32 %v2613, %v2657
        %2659 = vmatmul.f32.gmra.mxu0 %v2589
        %v2660 = vpop.f32.mrf.mxu0
        %v2661 = vadd.f32 %v2613, %v2660
        %2662 = vmatmul.f32.gmra.mxu0 %v2590
        %v2663 = vpop.f32.mrf.mxu0
        %v2664 = vadd.f32 %v2613, %v2663
        %2665 = vmatmul.f32.gmra.mxu0 %v2591
        %v2666 = vpop.f32.mrf.mxu0
        %v2667 = vadd.f32 %v2613, %v2666
        %2668 = vmatmul.f32.gmra.mxu0 %v2592
        %v2669 = vpop.f32.mrf.mxu0
        %v2670 = vadd.f32 %v2613, %v2669
        %2671 = vdwg.mxu0
        %2672 = vmatpush.msra.mxu0 0.0
        %2673 = vmatpush.msra.mxu0 0.0
        %2674 = vmatpush.msra.mxu0 0.0
        %2675 = vmatpush.msra.mxu0 0.0
        %2676 = vmatpush.msra.mxu0 0.0
        %2677 = vmatpush.msra.mxu0 0.0
        %2678 = vmatpush.msra.mxu0 0.0
        %2679 = vmatpush.msra.mxu0 0.0
        %2680 = vmatpush.msra.mxu0 0.0
        %2681 = vmatpush.msra.mxu0 0.0
        %2682 = vmatpush.msra.mxu0 0.0
        %2683 = vmatpush.msra.mxu0 0.0
        %2684 = vmatpush.msra.mxu0 0.0
        %2685 = vmatpush.msra.mxu0 0.0
        %2686 = vmatpush.msra.mxu0 %v2610
        %2687 = vmatpush.msra.mxu0 %v2609
        %2688 = vmatmul.f32.gmra.mxu0 %v2615
        %v2689 = vpop.f32.mrf.mxu0
        %v2690 = vadd.f32 %v2649, %v2689
        %2691 = vmatmul.f32.gmra.mxu0 %v2617
        %v2692 = vpop.f32.mrf.mxu0
        %v2693 = vadd.f32 %v2652, %v2692
        %2694 = vmatmul.f32.gmra.mxu0 %v2619
        %v2695 = vpop.f32.mrf.mxu0
        %v2696 = vadd.f32 %v2655, %v2695
        %2697 = vmatmul.f32.gmra.mxu0 %v2621
        %v2698 = vpop.f32.mrf.mxu0
        %v2699 = vadd.f32 %v2658, %v2698
        %2700 = vmatmul.f32.gmra.mxu0 %v2623
        %v2701 = vpop.f32.mrf.mxu0
        %v2702 = vadd.f32 %v2661, %v2701
        %2703 = vmatmul.f32.gmra.mxu0 %v2625
        %v2704 = vpop.f32.mrf.mxu0
        %v2705 = vadd.f32 %v2664, %v2704
        %2706 = vmatmul.f32.gmra.mxu0 %v2627
        %v2707 = vpop.f32.mrf.mxu0
        %v2708 = vadd.f32 %v2667, %v2707
        %2709 = vmatmul.f32.gmra.mxu0 %v2629
        %v2710 = vpop.f32.mrf.mxu0
        %v2711 = vadd.f32 %v2670, %v2710
        %2712 = vdwg.mxu0
        %v2713 = vmax.f32 %v2690, 0.0
        %v2714 = vmax.f32 %v2693, 0.0
        %v2715 = vmax.f32 %v2696, 0.0
        %v2716 = vmax.f32 %v2699, 0.0
        %v2717 = vmax.f32 %v2702, 0.0
        %v2718 = vmax.f32 %v2705, 0.0
        %v2719 = vmax.f32 %v2708, 0.0
        %v2720 = vmax.f32 %v2711, 0.0
        %2721 = vst.msk [vmem:[#allocation6] sm:$0xff] %vm2539, 0.0
        %vm2722 = vcmask 254976
        %2723 = vst.msk [vmem:[#allocation6 + $0x8] sm:$0x3] %vm2722, 0.0
        %2724 = vst.msk [vmem:[#allocation6 + $0x10] sm:$0xff] %vm2539, 0.0
        %2725 = vst.msk [vmem:[#allocation6 + $0x18] sm:$0x3] %vm2722, 0.0
        %2726 = vst.msk [vmem:[#allocation6 + $0x20] sm:$0xff] %vm2539, 0.0
        %2727 = vst.msk [vmem:[#allocation6 + $0x28] sm:$0x3] %vm2722, 0.0
        %2728 = vst.msk [vmem:[#allocation6 + $0x30] sm:$0xff] %vm2539, 0.0
        %2729 = vst.msk [vmem:[#allocation6 + $0x38] sm:$0x3] %vm2722, 0.0
        %2730 = vst.msk [vmem:[#allocation6 + $0x40] sm:$0xff] %vm2539, 0.0
        %2731 = vst.msk [vmem:[#allocation6 + $0x48] sm:$0x3] %vm2722, 0.0
        %2732 = vst.msk [vmem:[#allocation6 + $0x50] sm:$0xff] %vm2539, 0.0
        %2733 = vst.msk [vmem:[#allocation6 + $0x58] sm:$0x3] %vm2722, 0.0
        %2734 = vst.msk [vmem:[#allocation6 + $0x60] sm:$0xff] %vm2539, 0.0
        %2735 = vst.msk [vmem:[#allocation6 + $0x68] sm:$0x3] %vm2722, 0.0
        %2736 = vst.msk [vmem:[#allocation6 + $0x70] sm:$0xff] %vm2539, 0.0
        %2737 = vst.msk [vmem:[#allocation6 + $0x78] sm:$0x3] %vm2722, 0.0
        %2738 = vst.msk [vmem:[#allocation6 + $0x80] sm:$0xff] %vm2539, 0.0
        %2739 = vst.msk [vmem:[#allocation6 + $0x88] sm:$0x3] %vm2722, 0.0
        %2740 = vst.msk [vmem:[#allocation6 + $0x90] sm:$0xff] %vm2539, 0.0
        %2741 = vst.msk [vmem:[#allocation6 + $0x98] sm:$0x3] %vm2722, 0.0
        %s2742 = scalar_lea.vmem [#allocation6], 16
        %2743 = vst.msk [vmem:[%s2742 + $0x1] sm:$0xff] %vm2539, %v2713
        %2744 = vst.msk [vmem:[%s2742 + $0x11] sm:$0xff] %vm2539, %v2714
        %2745 = vst.msk [vmem:[%s2742 + $0x21] sm:$0xff] %vm2539, %v2715
        %2746 = vst.msk [vmem:[%s2742 + $0x31] sm:$0xff] %vm2539, %v2716
        %2747 = vst.msk [vmem:[%s2742 + $0x41] sm:$0xff] %vm2539, %v2717
        %2748 = vst.msk [vmem:[%s2742 + $0x51] sm:$0xff] %vm2539, %v2718
        %2749 = vst.msk [vmem:[%s2742 + $0x61] sm:$0xff] %vm2539, %v2719
        %2750 = vst.msk [vmem:[%s2742 + $0x71] sm:$0xff] %vm2539, %v2720
        %v2751 = vld [vmem:[#allocation6] sm:$0xff]
        %v2752 = vld [vmem:[#allocation6 + $0x8] sm:$0x3]
        %v2753 = vld [vmem:[#allocation6 + $0x10] sm:$0xff]
        %v2754 = vld [vmem:[#allocation6 + $0x18] sm:$0x3]
        %v2755 = vld [vmem:[#allocation6 + $0x20] sm:$0xff]
        %v2756 = vld [vmem:[#allocation6 + $0x28] sm:$0x3]
        %v2757 = vld [vmem:[#allocation6 + $0x30] sm:$0xff]
        %v2758 = vld [vmem:[#allocation6 + $0x38] sm:$0x3]
        %v2759 = vld [vmem:[#allocation6 + $0x40] sm:$0xff]
        %v2760 = vld [vmem:[#allocation6 + $0x48] sm:$0x3]
        %v2761 = vld [vmem:[#allocation6 + $0x50] sm:$0xff]
        %v2762 = vld [vmem:[#allocation6 + $0x58] sm:$0x3]
        %v2763 = vld [vmem:[#allocation6 + $0x60] sm:$0xff]
        %v2764 = vld [vmem:[#allocation6 + $0x68] sm:$0x3]
        %v2765 = vld [vmem:[#allocation6 + $0x70] sm:$0xff]
        %v2766 = vld [vmem:[#allocation6 + $0x78] sm:$0x3]
        %v2767 = vld [vmem:[#allocation6 + $0x80] sm:$0xff]
        %v2768 = vld [vmem:[#allocation6 + $0x88] sm:$0x3]
        %v2769 = vld [vmem:[#allocation6 + $0x90] sm:$0xff]
        %v2770 = vld [vmem:[#allocation6 + $0x98] sm:$0x3]
        %v2787 = vrot.slane %v2751, 1
        %v2788 = vrot.slane %v2752, 1
        %v2789 = vsel %vm607, %v2787, %v2788
        %v2790 = vrot.slane %v2753, 1
        %v2791 = vrot.slane %v2754, 1
        %v2792 = vsel %vm607, %v2790, %v2791
        %v2793 = vrot.slane %v2755, 1
        %v2794 = vrot.slane %v2756, 1
        %v2795 = vsel %vm607, %v2793, %v2794
        %v2796 = vrot.slane %v2757, 1
        %v2797 = vrot.slane %v2758, 1
        %v2798 = vsel %vm607, %v2796, %v2797
        %v2799 = vrot.slane %v2759, 1
        %v2800 = vrot.slane %v2760, 1
        %v2801 = vsel %vm607, %v2799, %v2800
        %v2802 = vrot.slane %v2761, 1
        %v2803 = vrot.slane %v2762, 1
        %v2804 = vsel %vm607, %v2802, %v2803
        %v2805 = vrot.slane %v2763, 1
        %v2806 = vrot.slane %v2764, 1
        %v2807 = vsel %vm607, %v2805, %v2806
        %v2808 = vrot.slane %v2765, 1
        %v2809 = vrot.slane %v2766, 1
        %v2810 = vsel %vm607, %v2808, %v2809
        %2811 = vrot.lane.b32.xlu0 %v2789, 32
        %v2812 = vpop.permute.xlu0 %2811
        %2813 = vrot.lane.b32.xlu0 %v2792, 32
        %v2814 = vpop.permute.xlu0 %2813
        %2815 = vrot.lane.b32.xlu0 %v2795, 32
        %v2816 = vpop.permute.xlu0 %2815
        %2817 = vrot.lane.b32.xlu0 %v2798, 32
        %v2818 = vpop.permute.xlu0 %2817
        %2819 = vrot.lane.b32.xlu0 %v2801, 32
        %v2820 = vpop.permute.xlu0 %2819
        %2821 = vrot.lane.b32.xlu0 %v2804, 32
        %v2822 = vpop.permute.xlu0 %2821
        %2823 = vrot.lane.b32.xlu0 %v2807, 32
        %v2824 = vpop.permute.xlu0 %2823
        %2825 = vrot.lane.b32.xlu0 %v2810, 32
        %v2826 = vpop.permute.xlu0 %2825
        %v2835 = vrot.slane %v2751, 2
        %v2836 = vrot.slane %v2752, 2
        %v2837 = vsel %vm784, %v2835, %v2836
        %v2838 = vrot.slane %v2753, 2
        %v2839 = vrot.slane %v2754, 2
        %v2840 = vsel %vm784, %v2838, %v2839
        %v2841 = vrot.slane %v2755, 2
        %v2842 = vrot.slane %v2756, 2
        %v2843 = vsel %vm784, %v2841, %v2842
        %v2844 = vrot.slane %v2757, 2
        %v2845 = vrot.slane %v2758, 2
        %v2846 = vsel %vm784, %v2844, %v2845
        %v2847 = vrot.slane %v2759, 2
        %v2848 = vrot.slane %v2760, 2
        %v2849 = vsel %vm784, %v2847, %v2848
        %v2850 = vrot.slane %v2761, 2
        %v2851 = vrot.slane %v2762, 2
        %v2852 = vsel %vm784, %v2850, %v2851
        %v2853 = vrot.slane %v2763, 2
        %v2854 = vrot.slane %v2764, 2
        %v2855 = vsel %vm784, %v2853, %v2854
        %v2856 = vrot.slane %v2765, 2
        %v2857 = vrot.slane %v2766, 2
        %v2858 = vsel %vm784, %v2856, %v2857
        %2859 = vrot.lane.b32.xlu0 %v2837, 64
        %v2860 = vpop.permute.xlu0 %2859
        %2861 = vrot.lane.b32.xlu0 %v2840, 64
        %v2862 = vpop.permute.xlu0 %2861
        %2863 = vrot.lane.b32.xlu0 %v2843, 64
        %v2864 = vpop.permute.xlu0 %2863
        %2865 = vrot.lane.b32.xlu0 %v2846, 64
        %v2866 = vpop.permute.xlu0 %2865
        %2867 = vrot.lane.b32.xlu0 %v2849, 64
        %v2868 = vpop.permute.xlu0 %2867
        %2869 = vrot.lane.b32.xlu0 %v2852, 64
        %v2870 = vpop.permute.xlu0 %2869
        %2871 = vrot.lane.b32.xlu0 %v2855, 64
        %v2872 = vpop.permute.xlu0 %2871
        %2873 = vrot.lane.b32.xlu0 %v2858, 64
        %v2874 = vpop.permute.xlu0 %2873
        %2884 = vrot.lane.b32.xlu0 %v2753, 96
        %v2885 = vpop.permute.xlu0 %2884
        %2886 = vrot.lane.b32.xlu0 %v2755, 96
        %v2887 = vpop.permute.xlu0 %2886
        %2888 = vrot.lane.b32.xlu0 %v2757, 96
        %v2889 = vpop.permute.xlu0 %2888
        %2890 = vrot.lane.b32.xlu0 %v2759, 96
        %v2891 = vpop.permute.xlu0 %2890
        %2892 = vrot.lane.b32.xlu0 %v2761, 96
        %v2893 = vpop.permute.xlu0 %2892
        %2894 = vrot.lane.b32.xlu0 %v2763, 96
        %v2895 = vpop.permute.xlu0 %2894
        %2896 = vrot.lane.b32.xlu0 %v2765, 96
        %v2897 = vpop.permute.xlu0 %2896
        %2898 = vrot.lane.b32.xlu0 %v2767, 96
        %v2899 = vpop.permute.xlu0 %2898
        %v2909 = vrot.slane %v2767, 1
        %v2910 = vrot.slane %v2768, 1
        %v2911 = vsel %vm607, %v2909, %v2910
        %v2920 = vrot.slane %v2767, 2
        %v2921 = vrot.slane %v2768, 2
        %v2922 = vsel %vm784, %v2920, %v2921
        %2923 = vrot.lane.b32.xlu0 %v2840, 32
        %v2924 = vpop.permute.xlu0 %2923
        %2925 = vrot.lane.b32.xlu0 %v2843, 32
        %v2926 = vpop.permute.xlu0 %2925
        %2927 = vrot.lane.b32.xlu0 %v2846, 32
        %v2928 = vpop.permute.xlu0 %2927
        %2929 = vrot.lane.b32.xlu0 %v2849, 32
        %v2930 = vpop.permute.xlu0 %2929
        %2931 = vrot.lane.b32.xlu0 %v2852, 32
        %v2932 = vpop.permute.xlu0 %2931
        %2933 = vrot.lane.b32.xlu0 %v2855, 32
        %v2934 = vpop.permute.xlu0 %2933
        %2935 = vrot.lane.b32.xlu0 %v2858, 32
        %v2936 = vpop.permute.xlu0 %2935
        %2937 = vrot.lane.b32.xlu0 %v2922, 32
        %v2938 = vpop.permute.xlu0 %2937
        %2948 = vrot.lane.b32.xlu0 %v2755, 64
        %v2949 = vpop.permute.xlu0 %2948
        %2950 = vrot.lane.b32.xlu0 %v2757, 64
        %v2951 = vpop.permute.xlu0 %2950
        %2952 = vrot.lane.b32.xlu0 %v2759, 64
        %v2953 = vpop.permute.xlu0 %2952
        %2954 = vrot.lane.b32.xlu0 %v2761, 64
        %v2955 = vpop.permute.xlu0 %2954
        %2956 = vrot.lane.b32.xlu0 %v2763, 64
        %v2957 = vpop.permute.xlu0 %2956
        %2958 = vrot.lane.b32.xlu0 %v2765, 64
        %v2959 = vpop.permute.xlu0 %2958
        %2960 = vrot.lane.b32.xlu0 %v2767, 64
        %v2961 = vpop.permute.xlu0 %2960
        %2962 = vrot.lane.b32.xlu0 %v2769, 64
        %v2963 = vpop.permute.xlu0 %2962
        %v2973 = vrot.slane %v2769, 1
        %v2974 = vrot.slane %v2770, 1
        %v2975 = vsel %vm607, %v2973, %v2974
        %2976 = vrot.lane.b32.xlu0 %v2795, 96
        %v2977 = vpop.permute.xlu0 %2976
        %2978 = vrot.lane.b32.xlu0 %v2798, 96
        %v2979 = vpop.permute.xlu0 %2978
        %2980 = vrot.lane.b32.xlu0 %v2801, 96
        %v2981 = vpop.permute.xlu0 %2980
        %2982 = vrot.lane.b32.xlu0 %v2804, 96
        %v2983 = vpop.permute.xlu0 %2982
        %2984 = vrot.lane.b32.xlu0 %v2807, 96
        %v2985 = vpop.permute.xlu0 %2984
        %2986 = vrot.lane.b32.xlu0 %v2810, 96
        %v2987 = vpop.permute.xlu0 %2986
        %2988 = vrot.lane.b32.xlu0 %v2911, 96
        %v2989 = vpop.permute.xlu0 %2988
        %2990 = vrot.lane.b32.xlu0 %v2975, 96
        %v2991 = vpop.permute.xlu0 %2990
        %v3000 = vrot.slane %v2769, 2
        %v3001 = vrot.slane %v2770, 2
        %v3002 = vsel %vm784, %v3000, %v3001
        %v3003 = vsel %vm2539, %v2751, %v2812
        %v3004 = vsel %vm2539, %v2753, %v2814
        %v3005 = vsel %vm2539, %v2755, %v2816
        %v3006 = vsel %vm2539, %v2757, %v2818
        %v3007 = vsel %vm2539, %v2759, %v2820
        %v3008 = vsel %vm2539, %v2761, %v2822
        %v3009 = vsel %vm2539, %v2763, %v2824
        %v3010 = vsel %vm2539, %v2765, %v2826
        %v3011 = vsel %vm2557, %v3003, %v2860
        %v3012 = vsel %vm2557, %v3004, %v2862
        %v3013 = vsel %vm2557, %v3005, %v2864
        %v3014 = vsel %vm2557, %v3006, %v2866
        %v3015 = vsel %vm2557, %v3007, %v2868
        %v3016 = vsel %vm2557, %v3008, %v2870
        %v3017 = vsel %vm2557, %v3009, %v2872
        %v3018 = vsel %vm2557, %v3010, %v2874
        %v3019 = vsel %vm2575, %v3011, %v2885
        %v3020 = vsel %vm2575, %v3012, %v2887
        %v3021 = vsel %vm2575, %v3013, %v2889
        %v3022 = vsel %vm2575, %v3014, %v2891
        %v3023 = vsel %vm2575, %v3015, %v2893
        %v3024 = vsel %vm2575, %v3016, %v2895
        %v3025 = vsel %vm2575, %v3017, %v2897
        %v3026 = vsel %vm2575, %v3018, %v2899
        %v3027 = vsel %vm2539, %v2792, %v2924
        %v3028 = vsel %vm2539, %v2795, %v2926
        %v3029 = vsel %vm2539, %v2798, %v2928
        %v3030 = vsel %vm2539, %v2801, %v2930
        %v3031 = vsel %vm2539, %v2804, %v2932
        %v3032 = vsel %vm2539, %v2807, %v2934
        %v3033 = vsel %vm2539, %v2810, %v2936
        %v3034 = vsel %vm2539, %v2911, %v2938
        %v3035 = vsel %vm2557, %v3027, %v2949
        %v3036 = vsel %vm2557, %v3028, %v2951
        %v3037 = vsel %vm2557, %v3029, %v2953
        %v3038 = vsel %vm2557, %v3030, %v2955
        %v3039 = vsel %vm2557, %v3031, %v2957
        %v3040 = vsel %vm2557, %v3032, %v2959
        %v3041 = vsel %vm2557, %v3033, %v2961
        %v3042 = vsel %vm2557, %v3034, %v2963
        %v3043 = vsel %vm2575, %v3035, %v2977
        %v3044 = vsel %vm2575, %v3036, %v2979
        %v3045 = vsel %vm2575, %v3037, %v2981
        %v3046 = vsel %vm2575, %v3038, %v2983
        %v3047 = vsel %vm2575, %v3039, %v2985
        %v3048 = vsel %vm2575, %v3040, %v2987
        %v3049 = vsel %vm2575, %v3041, %v2989
        %v3050 = vsel %vm2575, %v3042, %v2991
        %v3051 = vld [vmem:[%s5] sm:$0xff]
        %v3052 = vld [vmem:[%s5 + $0x8] sm:$0xff]
        %v3053 = vld [vmem:[%s5 + $0x10] sm:$0xff]
        %v3054 = vld [vmem:[%s5 + $0x18] sm:$0xff]
        %v3055 = vld [vmem:[%s5 + $0x20] sm:$0xff]
        %v3056 = vld [vmem:[%s5 + $0x28] sm:$0xff]
        %v3057 = vld [vmem:[%s5 + $0x30] sm:$0xff]
        %v3058 = vld [vmem:[%s5 + $0x38] sm:$0xff]
        %v3059 = vld [vmem:[%s5 + $0x40] sm:$0xff]
        %v3060 = vld [vmem:[%s5 + $0x48] sm:$0xff]
        %v3061 = vld [vmem:[%s5 + $0x50] sm:$0xff]
        %v3062 = vld [vmem:[%s5 + $0x58] sm:$0xff]
        %v3063 = vld [vmem:[%s5 + $0x60] sm:$0xff]
        %v3064 = vld [vmem:[%s5 + $0x68] sm:$0xff]
        %v3065 = vld [vmem:[%s5 + $0x70] sm:$0xff]
        %v3066 = vld [vmem:[%s5 + $0x78] sm:$0xff]
        %v3067 = vld [vmem:[%s5 + $0x80] sm:$0xff]
        %v3068 = vld [vmem:[%s5 + $0x88] sm:$0xff]
        %v3069 = vld [vmem:[%s5 + $0x90] sm:$0xff]
        %v3070 = vld [vmem:[%s5 + $0x98] sm:$0xff]
        %v3071 = vld [vmem:[%s5 + $0xa0] sm:$0xff]
        %v3072 = vld [vmem:[%s5 + $0xa8] sm:$0xff]
        %v3073 = vld [vmem:[%s5 + $0xb0] sm:$0xff]
        %v3074 = vld [vmem:[%s5 + $0xb8] sm:$0xff]
        %v3075 = vld [vmem:[%s5 + $0xc0] sm:$0xff]
        %v3076 = vld [vmem:[%s5 + $0xc8] sm:$0xff]
        %v3077 = vld [vmem:[%s5 + $0xd0] sm:$0xff]
        %v3078 = vld [vmem:[%s5 + $0xd8] sm:$0xff]
        %v3079 = vld [vmem:[%s5 + $0xe0] sm:$0xff]
        %v3080 = vld [vmem:[%s5 + $0xe8] sm:$0xff]
        %v3081 = vld [vmem:[%s5 + $0xf0] sm:$0xff]
        %v3082 = vld [vmem:[%s5 + $0xf8] sm:$0xff]
        %v3083 = vld [vmem:[%s5 + $0x100] sm:$0xff]
        %v3084 = vld [vmem:[%s5 + $0x108] sm:$0xff]
        %v3085 = vld [vmem:[%s5 + $0x110] sm:$0xff]
        %v3086 = vld [vmem:[%s5 + $0x118] sm:$0xff]
        %v3087 = vld [vmem:[%s6] sm:$0x1]
        %v3089 = vperm.slane %v3087, 0
        %v3091 = vsel %vm2539, %v2843, 0
        %v3093 = vsel %vm2539, %v2846, 0
        %v3095 = vsel %vm2539, %v2849, 0
        %v3097 = vsel %vm2539, %v2852, 0
        %v3099 = vsel %vm2539, %v2855, 0
        %v3101 = vsel %vm2539, %v2858, 0
        %v3103 = vsel %vm2539, %v2922, 0
        %v3105 = vsel %vm2539, %v3002, 0
        %3107 = vmatpush.msra.mxu0 %v3066
        %3108 = vmatpush.msra.mxu0 %v3065
        %3109 = vmatpush.msra.mxu0 %v3064
        %3110 = vmatpush.msra.mxu0 %v3063
        %3111 = vmatpush.msra.mxu0 %v3062
        %3112 = vmatpush.msra.mxu0 %v3061
        %3113 = vmatpush.msra.mxu0 %v3060
        %3114 = vmatpush.msra.mxu0 %v3059
        %3115 = vmatpush.msra.mxu0 %v3058
        %3116 = vmatpush.msra.mxu0 %v3057
        %3117 = vmatpush.msra.mxu0 %v3056
        %3118 = vmatpush.msra.mxu0 %v3055
        %3119 = vmatpush.msra.mxu0 %v3054
        %3120 = vmatpush.msra.mxu0 %v3053
        %3121 = vmatpush.msra.mxu0 %v3052
        %3122 = vmatpush.msra.mxu0 %v3051
        %3123 = vmatmul.f32.gmra.mxu0 %v3019
        %v3124 = vpop.f32.mrf.mxu0
        %v3125 = vadd.f32 %v3089, %v3124
        %3126 = vmatmul.f32.gmra.mxu0 %v3020
        %v3127 = vpop.f32.mrf.mxu0
        %v3128 = vadd.f32 %v3089, %v3127
        %3129 = vmatmul.f32.gmra.mxu0 %v3021
        %v3130 = vpop.f32.mrf.mxu0
        %v3131 = vadd.f32 %v3089, %v3130
        %3132 = vmatmul.f32.gmra.mxu0 %v3022
        %v3133 = vpop.f32.mrf.mxu0
        %v3134 = vadd.f32 %v3089, %v3133
        %3135 = vmatmul.f32.gmra.mxu0 %v3023
        %v3136 = vpop.f32.mrf.mxu0
        %v3137 = vadd.f32 %v3089, %v3136
        %3138 = vmatmul.f32.gmra.mxu0 %v3024
        %v3139 = vpop.f32.mrf.mxu0
        %v3140 = vadd.f32 %v3089, %v3139
        %3141 = vmatmul.f32.gmra.mxu0 %v3025
        %v3142 = vpop.f32.mrf.mxu0
        %v3143 = vadd.f32 %v3089, %v3142
        %3144 = vmatmul.f32.gmra.mxu0 %v3026
        %v3145 = vpop.f32.mrf.mxu0
        %v3146 = vadd.f32 %v3089, %v3145
        %3147 = vdwg.mxu0
        %3148 = vmatpush.msra.mxu0 %v3082
        %3149 = vmatpush.msra.mxu0 %v3081
        %3150 = vmatpush.msra.mxu0 %v3080
        %3151 = vmatpush.msra.mxu0 %v3079
        %3152 = vmatpush.msra.mxu0 %v3078
        %3153 = vmatpush.msra.mxu0 %v3077
        %3154 = vmatpush.msra.mxu0 %v3076
        %3155 = vmatpush.msra.mxu0 %v3075
        %3156 = vmatpush.msra.mxu0 %v3074
        %3157 = vmatpush.msra.mxu0 %v3073
        %3158 = vmatpush.msra.mxu0 %v3072
        %3159 = vmatpush.msra.mxu0 %v3071
        %3160 = vmatpush.msra.mxu0 %v3070
        %3161 = vmatpush.msra.mxu0 %v3069
        %3162 = vmatpush.msra.mxu0 %v3068
        %3163 = vmatpush.msra.mxu0 %v3067
        %3164 = vmatmul.f32.gmra.mxu0 %v3043
        %v3165 = vpop.f32.mrf.mxu0
        %v3166 = vadd.f32 %v3125, %v3165
        %3167 = vmatmul.f32.gmra.mxu0 %v3044
        %v3168 = vpop.f32.mrf.mxu0
        %v3169 = vadd.f32 %v3128, %v3168
        %3170 = vmatmul.f32.gmra.mxu0 %v3045
        %v3171 = vpop.f32.mrf.mxu0
        %v3172 = vadd.f32 %v3131, %v3171
        %3173 = vmatmul.f32.gmra.mxu0 %v3046
        %v3174 = vpop.f32.mrf.mxu0
        %v3175 = vadd.f32 %v3134, %v3174
        %3176 = vmatmul.f32.gmra.mxu0 %v3047
        %v3177 = vpop.f32.mrf.mxu0
        %v3178 = vadd.f32 %v3137, %v3177
        %3179 = vmatmul.f32.gmra.mxu0 %v3048
        %v3180 = vpop.f32.mrf.mxu0
        %v3181 = vadd.f32 %v3140, %v3180
        %3182 = vmatmul.f32.gmra.mxu0 %v3049
        %v3183 = vpop.f32.mrf.mxu0
        %v3184 = vadd.f32 %v3143, %v3183
        %3185 = vmatmul.f32.gmra.mxu0 %v3050
        %v3186 = vpop.f32.mrf.mxu0
        %v3187 = vadd.f32 %v3146, %v3186
        %3188 = vdwg.mxu0
        %3189 = vmatpush.msra.mxu0 0.0
        %3190 = vmatpush.msra.mxu0 0.0
        %3191 = vmatpush.msra.mxu0 0.0
        %3192 = vmatpush.msra.mxu0 0.0
        %3193 = vmatpush.msra.mxu0 0.0
        %3194 = vmatpush.msra.mxu0 0.0
        %3195 = vmatpush.msra.mxu0 0.0
        %3196 = vmatpush.msra.mxu0 0.0
        %3197 = vmatpush.msra.mxu0 0.0
        %3198 = vmatpush.msra.mxu0 0.0
        %3199 = vmatpush.msra.mxu0 0.0
        %3200 = vmatpush.msra.mxu0 0.0
        %3201 = vmatpush.msra.mxu0 %v3086
        %3202 = vmatpush.msra.mxu0 %v3085
        %3203 = vmatpush.msra.mxu0 %v3084
        %3204 = vmatpush.msra.mxu0 %v3083
        %3205 = vmatmul.f32.gmra.mxu0 %v3091
        %v3206 = vpop.f32.mrf.mxu0
        %v3207 = vadd.f32 %v3166, %v3206
        %3208 = vmatmul.f32.gmra.mxu0 %v3093
        %v3209 = vpop.f32.mrf.mxu0
        %v3210 = vadd.f32 %v3169, %v3209
        %3211 = vmatmul.f32.gmra.mxu0 %v3095
        %v3212 = vpop.f32.mrf.mxu0
        %v3213 = vadd.f32 %v3172, %v3212
        %3214 = vmatmul.f32.gmra.mxu0 %v3097
        %v3215 = vpop.f32.mrf.mxu0
        %v3216 = vadd.f32 %v3175, %v3215
        %3217 = vmatmul.f32.gmra.mxu0 %v3099
        %v3218 = vpop.f32.mrf.mxu0
        %v3219 = vadd.f32 %v3178, %v3218
        %3220 = vmatmul.f32.gmra.mxu0 %v3101
        %v3221 = vpop.f32.mrf.mxu0
        %v3222 = vadd.f32 %v3181, %v3221
        %3223 = vmatmul.f32.gmra.mxu0 %v3103
        %v3224 = vpop.f32.mrf.mxu0
        %v3225 = vadd.f32 %v3184, %v3224
        %3226 = vmatmul.f32.gmra.mxu0 %v3105
        %v3227 = vpop.f32.mrf.mxu0
        %v3228 = vadd.f32 %v3187, %v3227
        %3229 = vdwg.mxu0
        %v3230 = vmax.f32 %v3207, 0.0
        %v3231 = vmax.f32 %v3210, 0.0
        %v3232 = vmax.f32 %v3213, 0.0
        %v3233 = vmax.f32 %v3216, 0.0
        %v3234 = vmax.f32 %v3219, 0.0
        %v3235 = vmax.f32 %v3222, 0.0
        %v3236 = vmax.f32 %v3225, 0.0
        %v3237 = vmax.f32 %v3228, 0.0
        %3238 = vst.msk [vmem:[#allocation7] sm:$0xff] %vm2539, %v3230
        %3239 = vst.msk [vmem:[#allocation7 + $0x8] sm:$0xff] %vm2539, %v3231
        %3240 = vst.msk [vmem:[#allocation7 + $0x10] sm:$0xff] %vm2539, %v3232
        %3241 = vst.msk [vmem:[#allocation7 + $0x18] sm:$0xff] %vm2539, %v3233
        %3242 = vst.msk [vmem:[#allocation7 + $0x20] sm:$0xff] %vm2539, %v3234
        %3243 = vst.msk [vmem:[#allocation7 + $0x28] sm:$0xff] %vm2539, %v3235
        %3244 = vst.msk [vmem:[#allocation7 + $0x30] sm:$0xff] %vm2539, %v3236
        %3245 = vst.msk [vmem:[#allocation7 + $0x38] sm:$0xff] %vm2539, %v3237
        %v3246 = vld [vmem:[#allocation7] ss:$2 sm:$0xff]
        %s3247 = scalar_lea.vmem [#allocation7], 16
        %v3248 = vld [vmem:[%s3247] ss:$2 sm:$0xff]
        %s3249 = scalar_lea.vmem [#allocation7], 32
        %v3250 = vld [vmem:[%s3249] ss:$2 sm:$0xff]
        %s3251 = scalar_lea.vmem [#allocation7], 48
        %v3252 = vld [vmem:[%s3251] ss:$2 sm:$0xff]
        %s3253 = scalar_lea.vmem [#allocation7], 1
        %v3254 = vld [vmem:[%s3253] ss:$2 sm:$0xff]
        %s3255 = scalar_lea.vmem [#allocation7], 17
        %v3256 = vld [vmem:[%s3255] ss:$2 sm:$0xff]
        %s3257 = scalar_lea.vmem [#allocation7], 33
        %v3258 = vld [vmem:[%s3257] ss:$2 sm:$0xff]
        %s3259 = scalar_lea.vmem [#allocation7], 49
        %v3260 = vld [vmem:[%s3259] ss:$2 sm:$0xff]
        %v3261 = vmax.f32 %v3246, %v3254
        %v3262 = vmax.f32 %v3248, %v3256
        %v3263 = vmax.f32 %v3250, %v3258
        %v3264 = vmax.f32 %v3252, %v3260
        %v3266 = vrot.slane %v3261, 4
        %v3268 = vmax.f32 %v3261, %v3266
        %v3270 = vrot.slane %v3262, 4
        %v3272 = vmax.f32 %v3262, %v3270
        %v3274 = vrot.slane %v3263, 4
        %v3276 = vmax.f32 %v3263, %v3274
        %v3278 = vrot.slane %v3264, 4
        %v3280 = vmax.f32 %v3264, %v3278
        %v3282 = vrot.slane %v3268, 1
        %3283 = vrot.lane.b32.xlu0 %v3282, 32
        %v3284 = vpop.permute.xlu0 %3283
        %v3286 = vrot.slane %v3268, 2
        %3287 = vrot.lane.b32.xlu0 %v3286, 64
        %v3288 = vpop.permute.xlu0 %3287
        %v3290 = vrot.slane %v3268, 3
        %3291 = vrot.lane.b32.xlu0 %v3290, 96
        %v3292 = vpop.permute.xlu0 %3291
        %v3295 = vrot.slane %v3272, 1
        %3296 = vrot.lane.b32.xlu0 %v3295, 32
        %v3297 = vpop.permute.xlu0 %3296
        %v3299 = vrot.slane %v3272, 2
        %3300 = vrot.lane.b32.xlu0 %v3299, 64
        %v3301 = vpop.permute.xlu0 %3300
        %v3303 = vrot.slane %v3272, 3
        %3304 = vrot.lane.b32.xlu0 %v3303, 96
        %v3305 = vpop.permute.xlu0 %3304
        %v3308 = vrot.slane %v3276, 1
        %3309 = vrot.lane.b32.xlu0 %v3308, 32
        %v3310 = vpop.permute.xlu0 %3309
        %v3312 = vrot.slane %v3276, 2
        %3313 = vrot.lane.b32.xlu0 %v3312, 64
        %v3314 = vpop.permute.xlu0 %3313
        %v3316 = vrot.slane %v3276, 3
        %3317 = vrot.lane.b32.xlu0 %v3316, 96
        %v3318 = vpop.permute.xlu0 %3317
        %v3321 = vrot.slane %v3280, 1
        %3322 = vrot.lane.b32.xlu0 %v3321, 32
        %v3323 = vpop.permute.xlu0 %3322
        %v3325 = vrot.slane %v3280, 2
        %3326 = vrot.lane.b32.xlu0 %v3325, 64
        %v3327 = vpop.permute.xlu0 %3326
        %v3329 = vrot.slane %v3280, 3
        %3330 = vrot.lane.b32.xlu0 %v3329, 96
        %v3331 = vpop.permute.xlu0 %3330
        %v3333 = vsel %vm2539, %v3268, %v3284
        %v3334 = vsel %vm2557, %v3333, %v3288
        %v3335 = vsel %vm2575, %v3334, %v3292
        %v3336 = vsel %vm2539, %v3272, %v3297
        %v3337 = vsel %vm2557, %v3336, %v3301
        %v3338 = vsel %vm2575, %v3337, %v3305
        %v3339 = vsel %vm2539, %v3276, %v3310
        %v3340 = vsel %vm2557, %v3339, %v3314
        %v3341 = vsel %vm2575, %v3340, %v3318
        %v3342 = vsel %vm2539, %v3280, %v3323
        %v3343 = vsel %vm2557, %v3342, %v3327
        %v3344 = vsel %vm2575, %v3343, %v3331
        %v3345 = vld [vmem:[%s7] sm:$0xff]
        %v3346 = vld [vmem:[%s7 + $0x8] sm:$0xff]
        %v3347 = vld [vmem:[%s7 + $0x10] sm:$0xff]
        %v3348 = vld [vmem:[%s7 + $0x18] sm:$0xff]
        %v3349 = vld [vmem:[%s7 + $0x20] sm:$0xff]
        %v3350 = vld [vmem:[%s7 + $0x28] sm:$0xff]
        %v3351 = vld [vmem:[%s7 + $0x30] sm:$0xff]
        %v3352 = vld [vmem:[%s7 + $0x38] sm:$0xff]
        %v3353 = vld [vmem:[%s7 + $0x40] sm:$0xff]
        %v3354 = vld [vmem:[%s7 + $0x48] sm:$0xff]
        %v3355 = vld [vmem:[%s7 + $0x50] sm:$0xff]
        %v3356 = vld [vmem:[%s7 + $0x58] sm:$0xff]
        %v3357 = vld [vmem:[%s7 + $0x60] sm:$0xff]
        %v3358 = vld [vmem:[%s7 + $0x68] sm:$0xff]
        %v3359 = vld [vmem:[%s7 + $0x70] sm:$0xff]
        %v3360 = vld [vmem:[%s7 + $0x78] sm:$0xff]
        %v3361 = vld [vmem:[%s7 + $0x80] sm:$0xff]
        %v3362 = vld [vmem:[%s7 + $0x88] sm:$0xff]
        %v3363 = vld [vmem:[%s7 + $0x90] sm:$0xff]
        %v3364 = vld [vmem:[%s7 + $0x98] sm:$0xff]
        %v3365 = vld [vmem:[%s7 + $0xa0] sm:$0xff]
        %v3366 = vld [vmem:[%s7 + $0xa8] sm:$0xff]
        %v3367 = vld [vmem:[%s7 + $0xb0] sm:$0xff]
        %v3368 = vld [vmem:[%s7 + $0xb8] sm:$0xff]
        %v3369 = vld [vmem:[%s7 + $0xc0] sm:$0xff]
        %v3370 = vld [vmem:[%s7 + $0xc8] sm:$0xff]
        %v3371 = vld [vmem:[%s7 + $0xd0] sm:$0xff]
        %v3372 = vld [vmem:[%s7 + $0xd8] sm:$0xff]
        %v3373 = vld [vmem:[%s7 + $0xe0] sm:$0xff]
        %v3374 = vld [vmem:[%s7 + $0xe8] sm:$0xff]
        %v3375 = vld [vmem:[%s7 + $0xf0] sm:$0xff]
        %v3376 = vld [vmem:[%s7 + $0xf8] sm:$0xff]
        %v3377 = vld [vmem:[%s7 + $0x100] sm:$0xff]
        %v3378 = vld [vmem:[%s7 + $0x108] sm:$0xff]
        %v3379 = vld [vmem:[%s7 + $0x110] sm:$0xff]
        %v3380 = vld [vmem:[%s7 + $0x118] sm:$0xff]
        %v3381 = vld [vmem:[%s7 + $0x120] sm:$0xff]
        %v3382 = vld [vmem:[%s7 + $0x128] sm:$0xff]
        %v3383 = vld [vmem:[%s7 + $0x130] sm:$0xff]
        %v3384 = vld [vmem:[%s7 + $0x138] sm:$0xff]
        %v3385 = vld [vmem:[%s7 + $0x140] sm:$0xff]
        %v3386 = vld [vmem:[%s7 + $0x148] sm:$0xff]
        %v3387 = vld [vmem:[%s7 + $0x150] sm:$0xff]
        %v3388 = vld [vmem:[%s7 + $0x158] sm:$0xff]
        %v3389 = vld [vmem:[%s7 + $0x160] sm:$0xff]
        %v3390 = vld [vmem:[%s7 + $0x168] sm:$0xff]
        %v3391 = vld [vmem:[%s7 + $0x170] sm:$0xff]
        %v3392 = vld [vmem:[%s7 + $0x178] sm:$0xff]
        %v3393 = vld [vmem:[%s7 + $0x180] sm:$0xff]
        %v3394 = vld [vmem:[%s7 + $0x188] sm:$0xff]
        %v3395 = vld [vmem:[%s7 + $0x190] sm:$0xff]
        %v3396 = vld [vmem:[%s7 + $0x198] sm:$0xff]
        %v3397 = vld [vmem:[%s7 + $0x1a0] sm:$0xff]
        %v3398 = vld [vmem:[%s7 + $0x1a8] sm:$0xff]
        %v3399 = vld [vmem:[%s7 + $0x1b0] sm:$0xff]
        %v3400 = vld [vmem:[%s7 + $0x1b8] sm:$0xff]
        %v3401 = vld [vmem:[%s7 + $0x1c0] sm:$0xff]
        %v3402 = vld [vmem:[%s7 + $0x1c8] sm:$0xff]
        %v3403 = vld [vmem:[%s7 + $0x1d0] sm:$0xff]
        %v3404 = vld [vmem:[%s7 + $0x1d8] sm:$0xff]
        %v3405 = vld [vmem:[%s7 + $0x1e0] sm:$0xff]
        %v3406 = vld [vmem:[%s7 + $0x1e8] sm:$0xff]
        %v3407 = vld [vmem:[%s7 + $0x1f0] sm:$0xff]
        %v3408 = vld [vmem:[%s7 + $0x1f8] sm:$0xff]
        %v3409 = vld [vmem:[%s8] sm:$0x1]
        %3410 = vmatpush.msra.mxu0 %v3360
        %3411 = vmatpush.msra.mxu0 %v3359
        %3412 = vmatpush.msra.mxu0 %v3358
        %3413 = vmatpush.msra.mxu0 %v3357
        %3414 = vmatpush.msra.mxu0 %v3356
        %3415 = vmatpush.msra.mxu0 %v3355
        %3416 = vmatpush.msra.mxu0 %v3354
        %3417 = vmatpush.msra.mxu0 %v3353
        %3418 = vmatpush.msra.mxu0 %v3352
        %3419 = vmatpush.msra.mxu0 %v3351
        %3420 = vmatpush.msra.mxu0 %v3350
        %3421 = vmatpush.msra.mxu0 %v3349
        %3422 = vmatpush.msra.mxu0 %v3348
        %3423 = vmatpush.msra.mxu0 %v3347
        %3424 = vmatpush.msra.mxu0 %v3346
        %3425 = vmatpush.msra.mxu0 %v3345
        %3426 = vmatmul.f32.gmra.mxu0 %v3335
        %v3427 = vpop.f32.mrf.mxu0
        %v3428 = vadd.f32 %v3409, %v3427
        %3429 = vdwg.mxu0
        %3430 = vmatpush.msra.mxu0 %v3376
        %3431 = vmatpush.msra.mxu0 %v3375
        %3432 = vmatpush.msra.mxu0 %v3374
        %3433 = vmatpush.msra.mxu0 %v3373
        %3434 = vmatpush.msra.mxu0 %v3372
        %3435 = vmatpush.msra.mxu0 %v3371
        %3436 = vmatpush.msra.mxu0 %v3370
        %3437 = vmatpush.msra.mxu0 %v3369
        %3438 = vmatpush.msra.mxu0 %v3368
        %3439 = vmatpush.msra.mxu0 %v3367
        %3440 = vmatpush.msra.mxu0 %v3366
        %3441 = vmatpush.msra.mxu0 %v3365
        %3442 = vmatpush.msra.mxu0 %v3364
        %3443 = vmatpush.msra.mxu0 %v3363
        %3444 = vmatpush.msra.mxu0 %v3362
        %3445 = vmatpush.msra.mxu0 %v3361
        %3446 = vmatmul.f32.gmra.mxu0 %v3338
        %v3447 = vpop.f32.mrf.mxu0
        %v3448 = vadd.f32 %v3428, %v3447
        %3449 = vdwg.mxu0
        %3450 = vmatpush.msra.mxu0 %v3392
        %3451 = vmatpush.msra.mxu0 %v3391
        %3452 = vmatpush.msra.mxu0 %v3390
        %3453 = vmatpush.msra.mxu0 %v3389
        %3454 = vmatpush.msra.mxu0 %v3388
        %3455 = vmatpush.msra.mxu0 %v3387
        %3456 = vmatpush.msra.mxu0 %v3386
        %3457 = vmatpush.msra.mxu0 %v3385
        %3458 = vmatpush.msra.mxu0 %v3384
        %3459 = vmatpush.msra.mxu0 %v3383
        %3460 = vmatpush.msra.mxu0 %v3382
        %3461 = vmatpush.msra.mxu0 %v3381
        %3462 = vmatpush.msra.mxu0 %v3380
        %3463 = vmatpush.msra.mxu0 %v3379
        %3464 = vmatpush.msra.mxu0 %v3378
        %3465 = vmatpush.msra.mxu0 %v3377
        %3466 = vmatmul.f32.gmra.mxu0 %v3341
        %v3467 = vpop.f32.mrf.mxu0
        %v3468 = vadd.f32 %v3448, %v3467
        %3469 = vdwg.mxu0
        %3470 = vmatpush.msra.mxu0 %v3408
        %3471 = vmatpush.msra.mxu0 %v3407
        %3472 = vmatpush.msra.mxu0 %v3406
        %3473 = vmatpush.msra.mxu0 %v3405
        %3474 = vmatpush.msra.mxu0 %v3404
        %3475 = vmatpush.msra.mxu0 %v3403
        %3476 = vmatpush.msra.mxu0 %v3402
        %3477 = vmatpush.msra.mxu0 %v3401
        %3478 = vmatpush.msra.mxu0 %v3400
        %3479 = vmatpush.msra.mxu0 %v3399
        %3480 = vmatpush.msra.mxu0 %v3398
        %3481 = vmatpush.msra.mxu0 %v3397
        %3482 = vmatpush.msra.mxu0 %v3396
        %3483 = vmatpush.msra.mxu0 %v3395
        %3484 = vmatpush.msra.mxu0 %v3394
        %3485 = vmatpush.msra.mxu0 %v3393
        %3486 = vmatmul.f32.gmra.mxu0 %v3344
        %v3487 = vpop.f32.mrf.mxu0
        %v3488 = vadd.f32 %v3468, %v3487
        %3489 = vdwg.mxu0
        %v3490 = vmax.f32 %v3488, 0.0
        %v3491 = vld [vmem:[%s9] sm:$0xff]
        %v3492 = vld [vmem:[%s9 + $0x8] sm:$0xff]
        %v3493 = vld [vmem:[%s9 + $0x10] sm:$0xff]
        %v3494 = vld [vmem:[%s9 + $0x18] sm:$0xff]
        %v3495 = vld [vmem:[%s9 + $0x20] sm:$0xff]
        %v3496 = vld [vmem:[%s9 + $0x28] sm:$0xff]
        %v3497 = vld [vmem:[%s9 + $0x30] sm:$0xff]
        %v3498 = vld [vmem:[%s9 + $0x38] sm:$0xff]
        %v3499 = vld [vmem:[%s9 + $0x40] sm:$0xff]
        %v3500 = vld [vmem:[%s9 + $0x48] sm:$0xff]
        %v3501 = vld [vmem:[%s9 + $0x50] sm:$0xff]
        %v3502 = vld [vmem:[%s9 + $0x58] sm:$0xff]
        %v3503 = vld [vmem:[%s9 + $0x60] sm:$0xff]
        %v3504 = vld [vmem:[%s9 + $0x68] sm:$0xff]
        %v3505 = vld [vmem:[%s9 + $0x70] sm:$0xff]
        %v3506 = vld [vmem:[%s9 + $0x78] sm:$0xff]
        %v3507 = vld [vmem:[%s10] sm:$0x1]
        %3508 = vmatpush.msra.mxu0 %v3506
        %3509 = vmatpush.msra.mxu0 %v3505
        %3510 = vmatpush.msra.mxu0 %v3504
        %3511 = vmatpush.msra.mxu0 %v3503
        %3512 = vmatpush.msra.mxu0 %v3502
        %3513 = vmatpush.msra.mxu0 %v3501
        %3514 = vmatpush.msra.mxu0 %v3500
        %3515 = vmatpush.msra.mxu0 %v3499
        %3516 = vmatpush.msra.mxu0 %v3498
        %3517 = vmatpush.msra.mxu0 %v3497
        %3518 = vmatpush.msra.mxu0 %v3496
        %3519 = vmatpush.msra.mxu0 %v3495
        %3520 = vmatpush.msra.mxu0 %v3494
        %3521 = vmatpush.msra.mxu0 %v3493
        %3522 = vmatpush.msra.mxu0 %v3492
        %3523 = vmatpush.msra.mxu0 %v3491
        %3524 = vmatmul.f32.gmra.mxu0 %v3490
        %v3525 = vpop.f32.mrf.mxu0
        %v3526 = vadd.f32 %v3507, %v3525
        %3527 = vdwg.mxu0
        %v3528 = vmax.f32 %v3526, 0.0
        %3529 = vst [vmem:[%s378] sm:$0x1] %v3528
        %s3530 = sand.u32 %s269, 1
        %s3531 = scalar_lea.sflag [#allocation9], %s3530
        %s3532 = sand.u32 %s269, 1
        %s3533 = scalar_lea.vmem [#allocation8], %s3532
        // Predicated region
        $region65: #{vgg_base_forward.1} parent=63 // pred_check
          %p3534 = pneg %p279
        $region66: #{vgg_base_forward.1} parent=63 // pred_check_branch
          %3536 = sbr.rel (%p3534) target = $region68
        $region67: #{vgg_base_forward.1} parent=63 // pred_region
          %3538 = vsyncadd %s3531, 0
          %s3539 = scalar_lea.hbm %s11, %s25
          %s3541 = sshll.u32 %s3533, 4
          %s3542 = int_to_ptr.vmem [resolvable:$true] %s3541
          %s3543 = sshll.u32 %s3539, 4
          %s3544 = int_to_ptr.hbm [resolvable:$true] %s3543
          %3546 = dma.vmem_to_hbm [thread:$0]  %s3542, 16, %s3544, %s3531
        $region68: #{vgg_base_forward.1} parent=63 // pred_fallthru
          _
      $region64: #{vgg_base_forward.1} parent=5 // pred_fallthru
        _
      %p3547 = scmp.le.s32.totalorder 2, %s20
      // Predicated region
      $region69: #{vgg_base_forward.1} parent=5 // pred_check
        %p3548 = pneg %p3547
      $region70: #{vgg_base_forward.1} parent=5 // pred_check_branch
        %3550 = sbr.rel (%p3548) target = $region72
      $region71: #{vgg_base_forward.1} parent=5 // pred_region
        %s3551 = ssub.s32 %s20, 2
        // Predicated region
        $region73: #{vgg_base_forward.1} parent=71 // pred_check
          %p3552 = pneg %p285
        $region74: #{vgg_base_forward.1} parent=71 // pred_check_branch
          %3554 = sbr.rel (%p3552) target = $region76
        $region75: #{vgg_base_forward.1} parent=71 // pred_region
          %s3555 = sand.u32 %s270, 1
          %s3556 = scalar_lea.sflag [#allocation9], %s3555
          %s3557 = sand.u32 %s270, 1
          %s3558 = scalar_lea.vmem [#allocation8], %s3557
          %3560 = dma.done %s3556, 16
        $region76: #{vgg_base_forward.1} parent=71 // pred_fallthru
          _
      $region72: #{vgg_base_forward.1} parent=5 // pred_fallthru
        _
    $region6: #{vgg_base_forward.1} parent=1 // loop_footer
      %s24 = sadd.s32 1, %s20
    $region7: #{vgg_base_forward.1} parent=1 // loop_footer_branch
      %19 = sbr.rel target = $region3
    $region8: #{vgg_base_forward.1} parent=1 // loop_exit
      _
    %3561 = vsyncpa [#allocation9], 1
    %s3562 = scalar_lea.sflag [#allocation9], 1
    %3563 = vsyncpa %s3562, 1

</llo_original>
